<compile_context>
chip_gen: v7x
topology: tpu7x:2x2x1
jax: 0.10.0
libtpu: 0.0.40
codegen_flags: <defaults>
</compile_context>

<pallas_src>
import functools

import jax
import jax.numpy as jnp
from jax.experimental import pallas as pl
from jax.experimental.pallas import tpu as pltpu

ACT_DTYPE = jnp.bfloat16                        # activation / conv-weight wire dtype
_VMEM_LIMIT = 32 * 1024 * 1024                  # real footprint <16 MiB; fits v7x 64 MiB/TC
_COMPILER_PARAMS = pltpu.CompilerParams(
    dimension_semantics=("arbitrary",), vmem_limit_bytes=_VMEM_LIMIT)


def _zero_map(ndim):
    return lambda i: (0,) * ndim


def _full_spec(arr):
    # Whole array as a single block (block dims == full dims, so no (8,128) issue).
    return pl.BlockSpec(arr.shape, _zero_map(arr.ndim))


# ----------------------------------------------------------------------------
# In-kernel helpers
# ----------------------------------------------------------------------------
def _taps3x3(x, stride, hout, wout):
    """The 9 shifted (N, hout, wout, Cin) windows of a padded 3x3 conv input.

    stride == 1: x is the zero-padded input value, shape (N, hout+2, wout+2, Cin).
    stride == 2: x is the phase-split padded input, shape (4, N, Hp//2, Wp//2, Cin),
                 where phase p = (dy%2)*2 + (dx%2) holds x_pad[:, dy%2::2, dx%2::2, :].
    Only static, contiguous value slices are used (no strided / masked loads,
    no mixed int+dslice ref indexing).
    """
    taps = []
    for dy in range(3):
        for dx in range(3):
            if stride == 1:
                taps.append(x[:, dy:dy + hout, dx:dx + wout, :])
            else:
                p = (dy % 2) * 2 + (dx % 2)
                oy, ox = dy // 2, dx // 2
                taps.append(x[p, :, oy:oy + hout, ox:ox + wout, :])
    return taps


def _im2col_dot(taps, w, m):
    """One MXU matmul with K = 9*Cin instead of 9 thin K=Cin matmuls."""
    k = sum(t.shape[-1] for t in taps)
    patches = jnp.concatenate(taps, axis=-1).reshape(m, k)
    return jnp.dot(patches, w, preferred_element_type=jnp.float32)


# ----------------------------------------------------------------------------
# Stem: conv1 (3x3, Cin=3) + BN + ReLU as a single K=27 matmul
# ----------------------------------------------------------------------------
def _stem_kernel(x_ref, w_ref, s_ref, b_ref, o_ref):
    n, h, w, k = x_ref.shape                    # (N, H, W, 27)
    cout = o_ref.shape[3]
    m = n * h * w
    acc = jnp.dot(x_ref[...].reshape(m, k), w_ref[...],
                  preferred_element_type=jnp.float32)
    y = jnp.maximum(acc * s_ref[...] + b_ref[...], 0.0)
    o_ref[...] = y.reshape(n, h, w, cout).astype(o_ref.dtype)


def stem_pallas(x, w, scale, bias):
    n, h, ww_, cin = x.shape
    cout = w.shape[3]
    xp = jnp.pad(x.astype(ACT_DTYPE), ((0, 0), (1, 1), (1, 1), (0, 0)))
    # K=3 per-tap matmuls would leave the MXU ~98% idle; build the tiny
    # (N, H, W, 27) im2col slab in the wrapper and do one dense matmul.
    patches = jnp.concatenate(
        [xp[:, dy:dy + h, dx:dx + ww_, :] for dy in range(3) for dx in range(3)],
        axis=-1)
    w_k = w.reshape(9 * cin, cout).astype(ACT_DTYPE)
    s_k = scale.reshape(1, cout).astype(jnp.float32)
    b_k = bias.reshape(1, cout).astype(jnp.float32)
    return pl.pallas_call(
        _stem_kernel,
        out_shape=jax.ShapeDtypeStruct((n, h, ww_, cout), ACT_DTYPE),
        grid=(1,),
        in_specs=[_full_spec(patches), _full_spec(w_k),
                  _full_spec(s_k), _full_spec(b_k)],
        out_specs=pl.BlockSpec((n, h, ww_, cout), _zero_map(4)),
        compiler_params=_COMPILER_PARAMS,
    )(patches, w_k, s_k, b_k)


# ----------------------------------------------------------------------------
# Fused BasicBlock kernel (optionally with the avg-pool + Linear head)
# ----------------------------------------------------------------------------
def _block_kernel(*refs, stride, has_down, has_head):
    (x_ref, w1_ref, s1_ref, b1_ref, w2_ref, s2_ref, b2_ref), rest = refs[:7], refs[7:]
    if has_down:
        (wsc_ref, ssc_ref, bsc_ref), rest = rest[:3], rest[3:]
    if has_head:
        (fcw_ref, fcb_ref), rest = rest[:2], rest[2:]
    o_ref, hpad_ref = rest

    n, hp2, wp2, planes = hpad_ref.shape
    hout, wout = hp2 - 2, wp2 - 2
    m = n * hout * wout

    x = x_ref[...]
    taps = _taps3x3(x, stride, hout, wout)

    # conv1 -> BN -> ReLU  (single K = 9*Cin matmul, f32 accumulation)
    h = jnp.maximum(_im2col_dot(taps, w1_ref[...], m) * s1_ref[...] + b1_ref[...],
                    0.0)

    # Shortcut branch: its input is exactly the centre tap (dy=dx=1) for both the
    # identity (stride 1) and the 1x1 / stride-2 downsample case.
    xc = taps[4].reshape(m, taps[4].shape[-1])
    if has_down:
        sc = (jnp.dot(xc, wsc_ref[...], preferred_element_type=jnp.float32)
              * ssc_ref[...] + bsc_ref[...])
    else:
        sc = xc.astype(jnp.float32)

    # Zero-pad h inside a VMEM scratch: the intra-block activation never hits HBM.
    hpad_ref[...] = jnp.zeros(hpad_ref.shape, hpad_ref.dtype)
    hpad_ref[:, 1:hout + 1, 1:wout + 1, :] = (
        h.reshape(n, hout, wout, planes).astype(hpad_ref.dtype))

    # conv2 -> BN, add shortcut, ReLU
    taps2 = _taps3x3(hpad_ref[...], 1, hout, wout)
    y = _im2col_dot(taps2, w2_ref[...], m) * s2_ref[...] + b2_ref[...]
    out = jnp.maximum(y + sc, 0.0)                       # (m, planes) f32

    if has_head:
        # Fused avg_pool2d(4) (== full-extent mean on the 4x4 map) + Linear.
        pooled = out.astype(ACT_DTYPE).astype(jnp.float32)
        pooled = pooled.reshape(n, hout * wout, planes).mean(axis=1)
        logits = jnp.dot(pooled, fcw_ref[...],
                         preferred_element_type=jnp.float32) + fcb_ref[...]
        o_ref[...] = logits.astype(o_ref.dtype)
    else:
        o_ref[...] = out.reshape(n, hout, wout, planes).astype(o_ref.dtype)


def _phase_split(xp):
    """(N, Hp, Wp, C) padded input -> (4, N, Hp/2, Wp/2, C) even/odd (H,W) phases,
    so stride-2 taps become dense contiguous slices inside the kernel."""
    n, hp, wp, c = xp.shape
    assert hp % 2 == 0 and wp % 2 == 0
    x4 = xp.reshape(n, hp // 2, 2, wp // 2, 2, c).transpose(2, 4, 0, 1, 3, 5)
    return x4.reshape(4, n, hp // 2, wp // 2, c)


def block_pallas(x, p, *, fc_w=None, fc_b=None):
    """One fused BasicBlock per pallas_call (optionally fusing the FC head)."""
    n, h, w_in, cin = x.shape
    stride = p["stride"]
    planes = p["w1"].shape[3]
    hout, wout = h // stride, w_in // stride
    has_down = "wsc" in p
    has_head = fc_w is not None

    xp = jnp.pad(x.astype(ACT_DTYPE), ((0, 0), (1, 1), (1, 1), (0, 0)))
    if stride == 2:
        xp = _phase_split(xp)

    args = [
        xp,
        p["w1"].reshape(9 * cin, planes).astype(ACT_DTYPE),
        p["s1"].reshape(1, planes).astype(jnp.float32),
        p["b1"].reshape(1, planes).astype(jnp.float32),
        p["w2"].reshape(9 * planes, planes).astype(ACT_DTYPE),
        p["s2"].reshape(1, planes).astype(jnp.float32),
        p["b2"].reshape(1, planes).astype(jnp.float32),
    ]
    if has_down:
        args += [p["wsc"].reshape(cin, planes).astype(ACT_DTYPE),
                 p["ssc"].reshape(1, planes).astype(jnp.float32),
                 p["bsc"].reshape(1, planes).astype(jnp.float32)]
    if has_head:
        args += [fc_w.astype(jnp.float32),
                 fc_b.reshape(1, -1).astype(jnp.float32)]

    if has_head:
        out_shape = jax.ShapeDtypeStruct((n, fc_w.shape[1]), jnp.float32)
    else:
        out_shape = jax.ShapeDtypeStruct((n, hout, wout, planes), ACT_DTYPE)

    kernel = functools.partial(_block_kernel, stride=stride,
                               has_down=has_down, has_head=has_head)
    return pl.pallas_call(
        kernel,
        out_shape=out_shape,
        grid=(1,),
        in_specs=[_full_spec(a) for a in args],
        out_specs=pl.BlockSpec(out_shape.shape, _zero_map(len(out_shape.shape))),
        scratch_shapes=[pltpu.VMEM((n, hout + 2, wout + 2, planes), ACT_DTYPE)],
        compiler_params=_COMPILER_PARAMS,
    )(*args)


# ----------------------------------------------------------------------------
# Full forward (5 pallas_calls: stem + 4 fused blocks, head fused into block 4)
# ----------------------------------------------------------------------------
def resnet_forward_pallas(x_nhwc, params):
    out = stem_pallas(x_nhwc, params["conv1_w"], params["bn1_s"], params["bn1_b"])
    blocks = params["blocks"]
    for p in blocks[:-1]:
        out = block_pallas(out, p)
    return block_pallas(out, blocks[-1],
                        fc_w=params["fc_w"], fc_b=params["fc_b"])


# ----------------------------------------------------------------------------
# Pure-JAX reference with the same bf16 cast points (numerical sanity check)
# ----------------------------------------------------------------------------
def _conv_bn_ref(x, w, scale, bias, *, stride, relu):
    pad = (w.shape[0] - 1) // 2
    y = jax.lax.conv_general_dilated(
        x.astype(ACT_DTYPE), w.astype(ACT_DTYPE), (stride, stride),
        [(pad, pad), (pad, pad)],
        dimension_numbers=("NHWC", "HWIO", "NHWC"),
        preferred_element_type=jnp.float32)
    y = y * scale + bias
    return jnp.maximum(y, 0.0) if relu else y


def resnet_forward_ref(x_nhwc, params):
    out = _conv_bn_ref(x_nhwc, params["conv1_w"], params["bn1_s"], params["bn1_b"],
                       stride=1, relu=True).astype(ACT_DTYPE)
    for p in params["blocks"]:
        h = _conv_bn_ref(out, p["w1"], p["s1"], p["b1"],
                         stride=p["stride"], relu=True).astype(ACT_DTYPE)
        y = _conv_bn_ref(h, p["w2"], p["s2"], p["b2"], stride=1, relu=False)
        if "wsc" in p:
            sc = _conv_bn_ref(out, p["wsc"], p["ssc"], p["bsc"],
                              stride=p["stride"], relu=False)
        else:
            sc = out.astype(jnp.float32)
        out = jnp.maximum(y + sc, 0.0).astype(ACT_DTYPE)
    pooled = out.astype(jnp.float32).mean(axis=(1, 2))     # avg_pool2d(4) on 4x4 map
    return jnp.dot(pooled, params["fc_w"],
                   preferred_element_type=jnp.float32) + params["fc_b"]


# ----------------------------------------------------------------------------
# Deterministic parameter init (eval-mode BN folded into scale/bias)
# ----------------------------------------------------------------------------
def _he_conv(key, kh, kw, cin, cout):
    fan_in = kh * kw * cin
    return jax.random.normal(key, (kh, kw, cin, cout), jnp.float32) * jnp.sqrt(2.0 / fan_in)


def _bn_params(key, c):
    k1, k2, k3, k4 = jax.random.split(key, 4)
    gamma = 1.0 + 0.1 * jax.random.normal(k1, (c,), jnp.float32)
    beta = 0.1 * jax.random.normal(k2, (c,), jnp.float32)
    mean = 0.1 * jax.random.normal(k3, (c,), jnp.float32)
    var = 1.0 + jax.random.uniform(k4, (c,), jnp.float32)
    scale = gamma / jnp.sqrt(var + 1e-5)
    return scale, beta - mean * scale


def _make_block_params(key, cin, planes, stride):
    ks = jax.random.split(key, 6)
    p = {"stride": stride,
         "w1": _he_conv(ks[0], 3, 3, cin, planes),
         "w2": _he_conv(ks[2], 3, 3, planes, planes)}
    p["s1"], p["b1"] = _bn_params(ks[1], planes)
    p["s2"], p["b2"] = _bn_params(ks[3], planes)
    if stride != 1 or cin != planes:               # BasicBlock.expansion == 1
        p["wsc"] = _he_conv(ks[4], 1, 1, cin, planes)
        p["ssc"], p["bsc"] = _bn_params(ks[5], planes)
    return p


def make_resnet_params(key, num_blocks=(1, 1, 1, 1), num_classes=10):
    keys = jax.random.split(key, 4 + sum(num_blocks) + 2)
    params = {"conv1_w": _he_conv(keys[0], 3, 3, 3, 64)}
    params["bn1_s"], params["bn1_b"] = _bn_params(keys[1], 64)
    blocks, in_planes, ki = [], 64, 2
    for planes, nb, stride in zip((64, 128, 256, 512), num_blocks, (1, 2, 2, 2)):
        for s in [stride] + [1] * (nb - 1):
            blocks.append(_make_block_params(keys[ki], in_planes, planes, s))
            in_planes = planes
            ki += 1
    params["blocks"] = blocks
    params["fc_w"] = jax.random.normal(keys[ki], (512, num_classes),
                                       jnp.float32) / jnp.sqrt(512.0)
    params["fc_b"] = jnp.zeros((num_classes,), jnp.float32)
    return params


# ----------------------------------------------------------------------------
if __name__ == "__main__":
    key = jax.random.PRNGKey(0)
    kx, kp = jax.random.split(key)

    # PyTorch-convention input: NCHW, (batch=2, channels=3, 32x32) -> NHWC.
    x_nchw = jax.random.normal(kx, (2, 3, 32, 32), jnp.float32)
    x = jnp.transpose(x_nchw, (0, 2, 3, 1))

    params = make_resnet_params(kp, num_blocks=(1, 1, 1, 1), num_classes=10)

    out = jax.block_until_ready(resnet_forward_pallas(x, params))
    assert out.shape == (2, 10), out.shape

    ref = jax.block_until_ready(resnet_forward_ref(x, params))
    rel_err = float(jnp.max(jnp.abs(out - ref)) / (jnp.max(jnp.abs(ref)) + 1e-6))
    assert rel_err < 2e-2, f"Pallas/ref mismatch, rel_err={rel_err}"

    print("KERNEL_OK")
</pallas_src>

<mosaic_0001>
module attributes {stable_mosaic.version = 11 : i64} {
  func.func @_stem_kernel(%arg0: i32, %arg1: memref<2x32x32x27xbf16, #tpu.memory_space<vmem>>, %arg2: memref<27x64xbf16, #tpu.memory_space<vmem>>, %arg3: memref<1x64xf32, #tpu.memory_space<vmem>>, %arg4: memref<1x64xf32, #tpu.memory_space<vmem>>, %arg5: memref<2x32x32x64xbf16, #tpu.memory_space<vmem>>) attributes {dimension_semantics = [#tpu.dimension_semantics<arbitrary>], iteration_bounds = array<i64: 1>, scalar_prefetch = 0 : i64, scratch_operands = 0 : i64, tpu.core_type = #tpu.core_type<tc>, window_params = [{pipeline_mode = #tpu.pipeline_mode<synchronous>, transform_indices = @transform_0, window_bounds = array<i64: 2, 32, 32, 27>}, {pipeline_mode = #tpu.pipeline_mode<synchronous>, transform_indices = @transform_1, window_bounds = array<i64: 27, 64>}, {pipeline_mode = #tpu.pipeline_mode<synchronous>, transform_indices = @transform_2, window_bounds = array<i64: 1, 64>}, {pipeline_mode = #tpu.pipeline_mode<synchronous>, transform_indices = @transform_3, window_bounds = array<i64: 1, 64>}, {pipeline_mode = #tpu.pipeline_mode<synchronous>, transform_indices = @transform_4, window_bounds = array<i64: 2, 32, 32, 64>}]} {
    %c0 = arith.constant 0 : index
    %c0_0 = arith.constant 0 : index
    %c0_1 = arith.constant 0 : index
    %c0_2 = arith.constant 0 : index
    %0 = vector.load %arg1[%c0, %c0_0, %c0_1, %c0_2] : memref<2x32x32x27xbf16, #tpu.memory_space<vmem>>, vector<2x32x32x27xbf16>
    %1 = vector.shape_cast %0 : vector<2x32x32x27xbf16> to vector<2048x27xbf16>
    %c0_3 = arith.constant 0 : index
    %c0_4 = arith.constant 0 : index
    %2 = vector.load %arg2[%c0_3, %c0_4] : memref<27x64xbf16, #tpu.memory_space<vmem>>, vector<27x64xbf16>
    %cst = arith.constant dense<0.000000e+00> : vector<2048x64xf32>
    %3 = tpu.matmul %1, %2, %cst {dimension_numbers = #tpu.dot_dimension_numbers<[1], [0], [0], [1], [0, 0, 1, 1], [], []>} : vector<2048x27xbf16>, vector<27x64xbf16>, vector<2048x64xf32> -> vector<2048x64xf32>
    %c0_5 = arith.constant 0 : index
    %c0_6 = arith.constant 0 : index
    %4 = vector.load %arg3[%c0_5, %c0_6] : memref<1x64xf32, #tpu.memory_space<vmem>>, vector<1x64xf32>
    %5 = vector.broadcast %4 : vector<1x64xf32> to vector<2048x64xf32>
    %6 = arith.mulf %3, %5 : vector<2048x64xf32>
    %c0_7 = arith.constant 0 : index
    %c0_8 = arith.constant 0 : index
    %7 = vector.load %arg4[%c0_7, %c0_8] : memref<1x64xf32, #tpu.memory_space<vmem>>, vector<1x64xf32>
    %8 = vector.broadcast %7 : vector<1x64xf32> to vector<2048x64xf32>
    %9 = arith.addf %6, %8 : vector<2048x64xf32>
    %cst_9 = arith.constant 0.000000e+00 : f32
    %10 = vector.broadcast %cst_9 : f32 to vector<2048x64xf32>
    %11 = arith.maximumf %9, %10 : vector<2048x64xf32>
    %12 = vector.shape_cast %11 : vector<2048x64xf32> to vector<2x32x32x64xf32>
    %13 = arith.truncf %12 : vector<2x32x32x64xf32> to vector<2x32x32x64xbf16>
    %c0_10 = arith.constant 0 : index
    %c0_11 = arith.constant 0 : index
    %c0_12 = arith.constant 0 : index
    %c0_13 = arith.constant 0 : index
    %14 = vector.load %arg5[%c0_10, %c0_11, %c0_12, %c0_13] : memref<2x32x32x64xbf16, #tpu.memory_space<vmem>>, vector<2x32x32x64xbf16>
    tpu.vector_store %arg5[%c0_10, %c0_11, %c0_12, %c0_13], %13 {strides = array<i32>} : memref<2x32x32x64xbf16, #tpu.memory_space<vmem>>, vector<2x32x32x64xbf16>,
    return
  }
  func.func @transform_0(%arg0: i32) -> (i32, i32, i32, i32) {
    %c0_i32 = arith.constant 0 : i32
    %c0_i32_0 = arith.constant 0 : i32
    %c0_i32_1 = arith.constant 0 : i32
    %c0_i32_2 = arith.constant 0 : i32
    %c0_i32_3 = arith.constant 0 : i32
    return %c0_i32, %c0_i32_0, %c0_i32_1, %c0_i32_2 : i32, i32, i32, i32
  }
  func.func @transform_1(%arg0: i32) -> (i32, i32) {
    %c0_i32 = arith.constant 0 : i32
    %c0_i32_0 = arith.constant 0 : i32
    %c0_i32_1 = arith.constant 0 : i32
    return %c0_i32, %c0_i32_0 : i32, i32
  }
  func.func @transform_2(%arg0: i32) -> (i32, i32) {
    %c0_i32 = arith.constant 0 : i32
    %c0_i32_0 = arith.constant 0 : i32
    %c0_i32_1 = arith.constant 0 : i32
    return %c0_i32, %c0_i32_0 : i32, i32
  }
  func.func @transform_3(%arg0: i32) -> (i32, i32) {
    %c0_i32 = arith.constant 0 : i32
    %c0_i32_0 = arith.constant 0 : i32
    %c0_i32_1 = arith.constant 0 : i32
    return %c0_i32, %c0_i32_0 : i32, i32
  }
  func.func @transform_4(%arg0: i32) -> (i32, i32, i32, i32) {
    %c0_i32 = arith.constant 0 : i32
    %c0_i32_0 = arith.constant 0 : i32
    %c0_i32_1 = arith.constant 0 : i32
    %c0_i32_2 = arith.constant 0 : i32
    %c0_i32_3 = arith.constant 0 : i32
    return %c0_i32, %c0_i32_0, %c0_i32_1, %c0_i32_2 : i32, i32, i32, i32
  }
}

</mosaic_0001>

<llo_original>
// kernel: tpu_custom_call.1
$region0: #{tpu_custom_call.1}
  #allocation0 [shape = 'u32[]', space=smem, size = 0x4, offset = 0x4, fixed_abs, tag = 'smem constant byte address 0x4 - core index']
  #allocation1 [shape = 'u32[144,128]{1,0:T(1,128)}', space=vmem, size = 0x12000, scoped, tag = 'internal scratch']
  %s0 = inlined_call_operand.vmem [shape: bf16[2,32,32,27], index: 0, kind: input, shape index: {}]
  %s1 = inlined_call_operand.vmem [shape: bf16[27,64], index: 1, kind: input, shape index: {}]
  %s2 = inlined_call_operand.vmem [shape: f32[1,64], index: 2, kind: input, shape index: {}]
  %s3 = inlined_call_operand.vmem [shape: f32[1,64], index: 3, kind: input, shape index: {}]
  %s4 = inlined_call_operand.hbm [shape: bf16[2,32,32,64], index: 4, kind: output, shape index: {}]
  %s5 = sld [smem:[#allocation0]]
  $region26: #{tpu_custom_call.1} parent=0
    _
  %s7 = ssub.s32 1, %s5
  %s8 = scalar_select 0, %s7, %s5
  $region1: #{tpu_custom_call.1} parent=0
    #allocation2 [shape = 'u8[524288]{0}', space=vmem, size = 0x80000, scoped, tag = 'output window, operand 0, single buffered']
    #allocation3 [shape = 's32[1]{0}', space=sflag, size = 0x4, scoped, tag = 'scoped memory for tpu_custom_call.1']
    %9 = vsyncpa [#allocation3], 0
    // Predicated region
    $region2: #{tpu_custom_call.1} parent=1 // pred_check
      _
    $region3: #{tpu_custom_call.1} parent=1 // pred_check_branch
      %11 = sbr.rel (0) target = $region5
    $region4: #{tpu_custom_call.1} parent=1 // pred_region
      _
    $region5: #{tpu_custom_call.1} parent=1 // pred_fallthru
      _
    // Predicated region
    $region6: #{tpu_custom_call.1} parent=1 // pred_check
      _
    $region7: #{tpu_custom_call.1} parent=1 // pred_check_branch
      %13 = sbr.rel (0) target = $region9
    $region8: #{tpu_custom_call.1} parent=1 // pred_region
      _
    $region9: #{tpu_custom_call.1} parent=1 // pred_fallthru
      _
    // Predicated region
    $region10: #{tpu_custom_call.1} parent=1 // pred_check
      _
    $region11: #{tpu_custom_call.1} parent=1 // pred_check_branch
      %15 = sbr.rel (0) target = $region13
    $region12: #{tpu_custom_call.1} parent=1 // pred_region
      _
    $region13: #{tpu_custom_call.1} parent=1 // pred_fallthru
      _
    // Predicated region
    $region14: #{tpu_custom_call.1} parent=1 // pred_check
      _
    $region15: #{tpu_custom_call.1} parent=1 // pred_check_branch
      %17 = sbr.rel (0) target = $region17
    $region16: #{tpu_custom_call.1} parent=1 // pred_region
      _
    $region17: #{tpu_custom_call.1} parent=1 // pred_fallthru
      _
    %v19 = vld [vmem:[%s0] sm:$0xf]
    %v20 = vld [vmem:[%s0 + $0x4] sm:$0xf]
    %v21 = vld [vmem:[%s0 + $0x8] sm:$0xf]
    %v22 = vld [vmem:[%s0 + $0xc] sm:$0xf]
    %v23 = vld [vmem:[%s0 + $0x10] sm:$0xf]
    %v24 = vld [vmem:[%s0 + $0x14] sm:$0xf]
    %v25 = vld [vmem:[%s0 + $0x18] sm:$0xf]
    %v26 = vld [vmem:[%s0 + $0x1c] sm:$0xf]
    %v27 = vld [vmem:[%s0 + $0x20] sm:$0xf]
    %v28 = vld [vmem:[%s0 + $0x24] sm:$0xf]
    %v29 = vld [vmem:[%s0 + $0x28] sm:$0xf]
    %v30 = vld [vmem:[%s0 + $0x2c] sm:$0xf]
    %v31 = vld [vmem:[%s0 + $0x30] sm:$0xf]
    %v32 = vld [vmem:[%s0 + $0x34] sm:$0xf]
    %v33 = vld [vmem:[%s0 + $0x38] sm:$0xf]
    %v34 = vld [vmem:[%s0 + $0x3c] sm:$0xf]
    %v35 = vld [vmem:[%s0 + $0x40] sm:$0xf]
    %v36 = vld [vmem:[%s0 + $0x44] sm:$0xf]
    %v37 = vld [vmem:[%s0 + $0x48] sm:$0xf]
    %v38 = vld [vmem:[%s0 + $0x4c] sm:$0xf]
    %v39 = vld [vmem:[%s0 + $0x50] sm:$0xf]
    %v40 = vld [vmem:[%s0 + $0x54] sm:$0xf]
    %v41 = vld [vmem:[%s0 + $0x58] sm:$0xf]
    %v42 = vld [vmem:[%s0 + $0x5c] sm:$0xf]
    %v43 = vld [vmem:[%s0 + $0x60] sm:$0xf]
    %v44 = vld [vmem:[%s0 + $0x64] sm:$0xf]
    %v45 = vld [vmem:[%s0 + $0x68] sm:$0xf]
    %v46 = vld [vmem:[%s0 + $0x6c] sm:$0xf]
    %v47 = vld [vmem:[%s0 + $0x70] sm:$0xf]
    %v48 = vld [vmem:[%s0 + $0x74] sm:$0xf]
    %v49 = vld [vmem:[%s0 + $0x78] sm:$0xf]
    %v50 = vld [vmem:[%s0 + $0x7c] sm:$0xf]
    %v51 = vld [vmem:[%s0 + $0x80] sm:$0xf]
    %v52 = vld [vmem:[%s0 + $0x84] sm:$0xf]
    %v53 = vld [vmem:[%s0 + $0x88] sm:$0xf]
    %v54 = vld [vmem:[%s0 + $0x8c] sm:$0xf]
    %v55 = vld [vmem:[%s0 + $0x90] sm:$0xf]
    %v56 = vld [vmem:[%s0 + $0x94] sm:$0xf]
    %v57 = vld [vmem:[%s0 + $0x98] sm:$0xf]
    %v58 = vld [vmem:[%s0 + $0x9c] sm:$0xf]
    %v59 = vld [vmem:[%s0 + $0xa0] sm:$0xf]
    %v60 = vld [vmem:[%s0 + $0xa4] sm:$0xf]
    %v61 = vld [vmem:[%s0 + $0xa8] sm:$0xf]
    %v62 = vld [vmem:[%s0 + $0xac] sm:$0xf]
    %v63 = vld [vmem:[%s0 + $0xb0] sm:$0xf]
    %v64 = vld [vmem:[%s0 + $0xb4] sm:$0xf]
    %v65 = vld [vmem:[%s0 + $0xb8] sm:$0xf]
    %v66 = vld [vmem:[%s0 + $0xbc] sm:$0xf]
    %v67 = vld [vmem:[%s0 + $0xc0] sm:$0xf]
    %v68 = vld [vmem:[%s0 + $0xc4] sm:$0xf]
    %v69 = vld [vmem:[%s0 + $0xc8] sm:$0xf]
    %v70 = vld [vmem:[%s0 + $0xcc] sm:$0xf]
    %v71 = vld [vmem:[%s0 + $0xd0] sm:$0xf]
    %v72 = vld [vmem:[%s0 + $0xd4] sm:$0xf]
    %v73 = vld [vmem:[%s0 + $0xd8] sm:$0xf]
    %v74 = vld [vmem:[%s0 + $0xdc] sm:$0xf]
    %v75 = vld [vmem:[%s0 + $0xe0] sm:$0xf]
    %v76 = vld [vmem:[%s0 + $0xe4] sm:$0xf]
    %v77 = vld [vmem:[%s0 + $0xe8] sm:$0xf]
    %v78 = vld [vmem:[%s0 + $0xec] sm:$0xf]
    %v79 = vld [vmem:[%s0 + $0xf0] sm:$0xf]
    %v80 = vld [vmem:[%s0 + $0xf4] sm:$0xf]
    %v81 = vld [vmem:[%s0 + $0xf8] sm:$0xf]
    %v82 = vld [vmem:[%s0 + $0xfc] sm:$0xf]
    %v83 = vld [vmem:[%s0 + $0x100] sm:$0xf]
    %v84 = vld [vmem:[%s0 + $0x104] sm:$0xf]
    %v85 = vld [vmem:[%s0 + $0x108] sm:$0xf]
    %v86 = vld [vmem:[%s0 + $0x10c] sm:$0xf]
    %v87 = vld [vmem:[%s0 + $0x110] sm:$0xf]
    %v88 = vld [vmem:[%s0 + $0x114] sm:$0xf]
    %v89 = vld [vmem:[%s0 + $0x118] sm:$0xf]
    %v90 = vld [vmem:[%s0 + $0x11c] sm:$0xf]
    %v91 = vld [vmem:[%s0 + $0x120] sm:$0xf]
    %v92 = vld [vmem:[%s0 + $0x124] sm:$0xf]
    %v93 = vld [vmem:[%s0 + $0x128] sm:$0xf]
    %v94 = vld [vmem:[%s0 + $0x12c] sm:$0xf]
    %v95 = vld [vmem:[%s0 + $0x130] sm:$0xf]
    %v96 = vld [vmem:[%s0 + $0x134] sm:$0xf]
    %v97 = vld [vmem:[%s0 + $0x138] sm:$0xf]
    %v98 = vld [vmem:[%s0 + $0x13c] sm:$0xf]
    %v99 = vld [vmem:[%s0 + $0x140] sm:$0xf]
    %v100 = vld [vmem:[%s0 + $0x144] sm:$0xf]
    %v101 = vld [vmem:[%s0 + $0x148] sm:$0xf]
    %v102 = vld [vmem:[%s0 + $0x14c] sm:$0xf]
    %v103 = vld [vmem:[%s0 + $0x150] sm:$0xf]
    %v104 = vld [vmem:[%s0 + $0x154] sm:$0xf]
    %v105 = vld [vmem:[%s0 + $0x158] sm:$0xf]
    %v106 = vld [vmem:[%s0 + $0x15c] sm:$0xf]
    %v107 = vld [vmem:[%s0 + $0x160] sm:$0xf]
    %v108 = vld [vmem:[%s0 + $0x164] sm:$0xf]
    %v109 = vld [vmem:[%s0 + $0x168] sm:$0xf]
    %v110 = vld [vmem:[%s0 + $0x16c] sm:$0xf]
    %v111 = vld [vmem:[%s0 + $0x170] sm:$0xf]
    %v112 = vld [vmem:[%s0 + $0x174] sm:$0xf]
    %v113 = vld [vmem:[%s0 + $0x178] sm:$0xf]
    %v114 = vld [vmem:[%s0 + $0x17c] sm:$0xf]
    %v115 = vld [vmem:[%s0 + $0x180] sm:$0xf]
    %v116 = vld [vmem:[%s0 + $0x184] sm:$0xf]
    %v117 = vld [vmem:[%s0 + $0x188] sm:$0xf]
    %v118 = vld [vmem:[%s0 + $0x18c] sm:$0xf]
    %v119 = vld [vmem:[%s0 + $0x190] sm:$0xf]
    %v120 = vld [vmem:[%s0 + $0x194] sm:$0xf]
    %v121 = vld [vmem:[%s0 + $0x198] sm:$0xf]
    %v122 = vld [vmem:[%s0 + $0x19c] sm:$0xf]
    %v123 = vld [vmem:[%s0 + $0x1a0] sm:$0xf]
    %v124 = vld [vmem:[%s0 + $0x1a4] sm:$0xf]
    %v125 = vld [vmem:[%s0 + $0x1a8] sm:$0xf]
    %v126 = vld [vmem:[%s0 + $0x1ac] sm:$0xf]
    %v127 = vld [vmem:[%s0 + $0x1b0] sm:$0xf]
    %v128 = vld [vmem:[%s0 + $0x1b4] sm:$0xf]
    %v129 = vld [vmem:[%s0 + $0x1b8] sm:$0xf]
    %v130 = vld [vmem:[%s0 + $0x1bc] sm:$0xf]
    %v131 = vld [vmem:[%s0 + $0x1c0] sm:$0xf]
    %v132 = vld [vmem:[%s0 + $0x1c4] sm:$0xf]
    %v133 = vld [vmem:[%s0 + $0x1c8] sm:$0xf]
    %v134 = vld [vmem:[%s0 + $0x1cc] sm:$0xf]
    %v135 = vld [vmem:[%s0 + $0x1d0] sm:$0xf]
    %v136 = vld [vmem:[%s0 + $0x1d4] sm:$0xf]
    %v137 = vld [vmem:[%s0 + $0x1d8] sm:$0xf]
    %v138 = vld [vmem:[%s0 + $0x1dc] sm:$0xf]
    %v139 = vld [vmem:[%s0 + $0x1e0] sm:$0xf]
    %v140 = vld [vmem:[%s0 + $0x1e4] sm:$0xf]
    %v141 = vld [vmem:[%s0 + $0x1e8] sm:$0xf]
    %v142 = vld [vmem:[%s0 + $0x1ec] sm:$0xf]
    %v143 = vld [vmem:[%s0 + $0x1f0] sm:$0xf]
    %v144 = vld [vmem:[%s0 + $0x1f4] sm:$0xf]
    %v145 = vld [vmem:[%s0 + $0x1f8] sm:$0xf]
    %v146 = vld [vmem:[%s0 + $0x1fc] sm:$0xf]
    %v147 = vld [vmem:[%s0 + $0x200] sm:$0xf]
    %v148 = vld [vmem:[%s0 + $0x204] sm:$0xf]
    %v149 = vld [vmem:[%s0 + $0x208] sm:$0xf]
    %v150 = vld [vmem:[%s0 + $0x20c] sm:$0xf]
    %v151 = vld [vmem:[%s0 + $0x210] sm:$0xf]
    %v152 = vld [vmem:[%s0 + $0x214] sm:$0xf]
    %v153 = vld [vmem:[%s0 + $0x218] sm:$0xf]
    %v154 = vld [vmem:[%s0 + $0x21c] sm:$0xf]
    %v155 = vld [vmem:[%s0 + $0x220] sm:$0xf]
    %v156 = vld [vmem:[%s0 + $0x224] sm:$0xf]
    %v157 = vld [vmem:[%s0 + $0x228] sm:$0xf]
    %v158 = vld [vmem:[%s0 + $0x22c] sm:$0xf]
    %v159 = vld [vmem:[%s0 + $0x230] sm:$0xf]
    %v160 = vld [vmem:[%s0 + $0x234] sm:$0xf]
    %v161 = vld [vmem:[%s0 + $0x238] sm:$0xf]
    %v162 = vld [vmem:[%s0 + $0x23c] sm:$0xf]
    %v163 = vld [vmem:[%s0 + $0x240] sm:$0xf]
    %v164 = vld [vmem:[%s0 + $0x244] sm:$0xf]
    %v165 = vld [vmem:[%s0 + $0x248] sm:$0xf]
    %v166 = vld [vmem:[%s0 + $0x24c] sm:$0xf]
    %v167 = vld [vmem:[%s0 + $0x250] sm:$0xf]
    %v168 = vld [vmem:[%s0 + $0x254] sm:$0xf]
    %v169 = vld [vmem:[%s0 + $0x258] sm:$0xf]
    %v170 = vld [vmem:[%s0 + $0x25c] sm:$0xf]
    %v171 = vld [vmem:[%s0 + $0x260] sm:$0xf]
    %v172 = vld [vmem:[%s0 + $0x264] sm:$0xf]
    %v173 = vld [vmem:[%s0 + $0x268] sm:$0xf]
    %v174 = vld [vmem:[%s0 + $0x26c] sm:$0xf]
    %v175 = vld [vmem:[%s0 + $0x270] sm:$0xf]
    %v176 = vld [vmem:[%s0 + $0x274] sm:$0xf]
    %v177 = vld [vmem:[%s0 + $0x278] sm:$0xf]
    %v178 = vld [vmem:[%s0 + $0x27c] sm:$0xf]
    %v179 = vld [vmem:[%s0 + $0x280] sm:$0xf]
    %v180 = vld [vmem:[%s0 + $0x284] sm:$0xf]
    %v181 = vld [vmem:[%s0 + $0x288] sm:$0xf]
    %v182 = vld [vmem:[%s0 + $0x28c] sm:$0xf]
    %v183 = vld [vmem:[%s0 + $0x290] sm:$0xf]
    %v184 = vld [vmem:[%s0 + $0x294] sm:$0xf]
    %v185 = vld [vmem:[%s0 + $0x298] sm:$0xf]
    %v186 = vld [vmem:[%s0 + $0x29c] sm:$0xf]
    %v187 = vld [vmem:[%s0 + $0x2a0] sm:$0xf]
    %v188 = vld [vmem:[%s0 + $0x2a4] sm:$0xf]
    %v189 = vld [vmem:[%s0 + $0x2a8] sm:$0xf]
    %v190 = vld [vmem:[%s0 + $0x2ac] sm:$0xf]
    %v191 = vld [vmem:[%s0 + $0x2b0] sm:$0xf]
    %v192 = vld [vmem:[%s0 + $0x2b4] sm:$0xf]
    %v193 = vld [vmem:[%s0 + $0x2b8] sm:$0xf]
    %v194 = vld [vmem:[%s0 + $0x2bc] sm:$0xf]
    %v195 = vld [vmem:[%s0 + $0x2c0] sm:$0xf]
    %v196 = vld [vmem:[%s0 + $0x2c4] sm:$0xf]
    %v197 = vld [vmem:[%s0 + $0x2c8] sm:$0xf]
    %v198 = vld [vmem:[%s0 + $0x2cc] sm:$0xf]
    %v199 = vld [vmem:[%s0 + $0x2d0] sm:$0xf]
    %v200 = vld [vmem:[%s0 + $0x2d4] sm:$0xf]
    %v201 = vld [vmem:[%s0 + $0x2d8] sm:$0xf]
    %v202 = vld [vmem:[%s0 + $0x2dc] sm:$0xf]
    %v203 = vld [vmem:[%s0 + $0x2e0] sm:$0xf]
    %v204 = vld [vmem:[%s0 + $0x2e4] sm:$0xf]
    %v205 = vld [vmem:[%s0 + $0x2e8] sm:$0xf]
    %v206 = vld [vmem:[%s0 + $0x2ec] sm:$0xf]
    %v207 = vld [vmem:[%s0 + $0x2f0] sm:$0xf]
    %v208 = vld [vmem:[%s0 + $0x2f4] sm:$0xf]
    %v209 = vld [vmem:[%s0 + $0x2f8] sm:$0xf]
    %v210 = vld [vmem:[%s0 + $0x2fc] sm:$0xf]
    %v211 = vld [vmem:[%s0 + $0x300] sm:$0xf]
    %v212 = vld [vmem:[%s0 + $0x304] sm:$0xf]
    %v213 = vld [vmem:[%s0 + $0x308] sm:$0xf]
    %v214 = vld [vmem:[%s0 + $0x30c] sm:$0xf]
    %v215 = vld [vmem:[%s0 + $0x310] sm:$0xf]
    %v216 = vld [vmem:[%s0 + $0x314] sm:$0xf]
    %v217 = vld [vmem:[%s0 + $0x318] sm:$0xf]
    %v218 = vld [vmem:[%s0 + $0x31c] sm:$0xf]
    %v219 = vld [vmem:[%s0 + $0x320] sm:$0xf]
    %v220 = vld [vmem:[%s0 + $0x324] sm:$0xf]
    %v221 = vld [vmem:[%s0 + $0x328] sm:$0xf]
    %v222 = vld [vmem:[%s0 + $0x32c] sm:$0xf]
    %v223 = vld [vmem:[%s0 + $0x330] sm:$0xf]
    %v224 = vld [vmem:[%s0 + $0x334] sm:$0xf]
    %v225 = vld [vmem:[%s0 + $0x338] sm:$0xf]
    %v226 = vld [vmem:[%s0 + $0x33c] sm:$0xf]
    %v227 = vld [vmem:[%s0 + $0x340] sm:$0xf]
    %v228 = vld [vmem:[%s0 + $0x344] sm:$0xf]
    %v229 = vld [vmem:[%s0 + $0x348] sm:$0xf]
    %v230 = vld [vmem:[%s0 + $0x34c] sm:$0xf]
    %v231 = vld [vmem:[%s0 + $0x350] sm:$0xf]
    %v232 = vld [vmem:[%s0 + $0x354] sm:$0xf]
    %v233 = vld [vmem:[%s0 + $0x358] sm:$0xf]
    %v234 = vld [vmem:[%s0 + $0x35c] sm:$0xf]
    %v235 = vld [vmem:[%s0 + $0x360] sm:$0xf]
    %v236 = vld [vmem:[%s0 + $0x364] sm:$0xf]
    %v237 = vld [vmem:[%s0 + $0x368] sm:$0xf]
    %v238 = vld [vmem:[%s0 + $0x36c] sm:$0xf]
    %v239 = vld [vmem:[%s0 + $0x370] sm:$0xf]
    %v240 = vld [vmem:[%s0 + $0x374] sm:$0xf]
    %v241 = vld [vmem:[%s0 + $0x378] sm:$0xf]
    %v242 = vld [vmem:[%s0 + $0x37c] sm:$0xf]
    %v243 = vld [vmem:[%s0 + $0x380] sm:$0xf]
    %v244 = vld [vmem:[%s0 + $0x384] sm:$0xf]
    %v245 = vld [vmem:[%s0 + $0x388] sm:$0xf]
    %v246 = vld [vmem:[%s0 + $0x38c] sm:$0xf]
    %v247 = vld [vmem:[%s0 + $0x390] sm:$0xf]
    %v248 = vld [vmem:[%s0 + $0x394] sm:$0xf]
    %v249 = vld [vmem:[%s0 + $0x398] sm:$0xf]
    %v250 = vld [vmem:[%s0 + $0x39c] sm:$0xf]
    %v251 = vld [vmem:[%s0 + $0x3a0] sm:$0xf]
    %v252 = vld [vmem:[%s0 + $0x3a4] sm:$0xf]
    %v253 = vld [vmem:[%s0 + $0x3a8] sm:$0xf]
    %v254 = vld [vmem:[%s0 + $0x3ac] sm:$0xf]
    %v255 = vld [vmem:[%s0 + $0x3b0] sm:$0xf]
    %v256 = vld [vmem:[%s0 + $0x3b4] sm:$0xf]
    %v257 = vld [vmem:[%s0 + $0x3b8] sm:$0xf]
    %v258 = vld [vmem:[%s0 + $0x3bc] sm:$0xf]
    %v259 = vld [vmem:[%s0 + $0x3c0] sm:$0xf]
    %v260 = vld [vmem:[%s0 + $0x3c4] sm:$0xf]
    %v261 = vld [vmem:[%s0 + $0x3c8] sm:$0xf]
    %v262 = vld [vmem:[%s0 + $0x3cc] sm:$0xf]
    %v263 = vld [vmem:[%s0 + $0x3d0] sm:$0xf]
    %v264 = vld [vmem:[%s0 + $0x3d4] sm:$0xf]
    %v265 = vld [vmem:[%s0 + $0x3d8] sm:$0xf]
    %v266 = vld [vmem:[%s0 + $0x3dc] sm:$0xf]
    %v267 = vld [vmem:[%s0 + $0x3e0] sm:$0xf]
    %v268 = vld [vmem:[%s0 + $0x3e4] sm:$0xf]
    %v269 = vld [vmem:[%s0 + $0x3e8] sm:$0xf]
    %v270 = vld [vmem:[%s0 + $0x3ec] sm:$0xf]
    %v271 = vld [vmem:[%s0 + $0x3f0] sm:$0xf]
    %v272 = vld [vmem:[%s0 + $0x3f4] sm:$0xf]
    %v273 = vld [vmem:[%s0 + $0x3f8] sm:$0xf]
    %v274 = vld [vmem:[%s0 + $0x3fc] sm:$0xf]
    %v275 = vld [vmem:[%s1] sm:$0xf]
    %v276 = vld [vmem:[%s1 + $0x4] sm:$0xf]
    %v277 = vld [vmem:[%s1 + $0x8] sm:$0xf]
    %v278 = vld [vmem:[%s1 + $0xc] sm:$0x3]
    %v535 = vunpack.c.l.b16 %v19
    %v536 = vunpack.c.l.b16 %v20
    %v537 = vunpack.c.l.b16 %v21
    %v538 = vunpack.c.l.b16 %v22
    %v539 = vunpack.c.l.b16 %v23
    %v540 = vunpack.c.l.b16 %v24
    %v541 = vunpack.c.l.b16 %v25
    %v542 = vunpack.c.l.b16 %v26
    %v543 = vunpack.c.l.b16 %v27
    %v544 = vunpack.c.l.b16 %v28
    %v545 = vunpack.c.l.b16 %v29
    %v546 = vunpack.c.l.b16 %v30
    %v547 = vunpack.c.l.b16 %v31
    %v548 = vunpack.c.l.b16 %v32
    %v549 = vunpack.c.l.b16 %v33
    %v550 = vunpack.c.l.b16 %v34
    %v551 = vunpack.c.l.b16 %v35
    %v552 = vunpack.c.l.b16 %v36
    %v553 = vunpack.c.l.b16 %v37
    %v554 = vunpack.c.l.b16 %v38
    %v555 = vunpack.c.l.b16 %v39
    %v556 = vunpack.c.l.b16 %v40
    %v557 = vunpack.c.l.b16 %v41
    %v558 = vunpack.c.l.b16 %v42
    %v559 = vunpack.c.l.b16 %v43
    %v560 = vunpack.c.l.b16 %v44
    %v561 = vunpack.c.l.b16 %v45
    %v562 = vunpack.c.l.b16 %v46
    %v563 = vunpack.c.l.b16 %v47
    %v564 = vunpack.c.l.b16 %v48
    %v565 = vunpack.c.l.b16 %v49
    %v566 = vunpack.c.l.b16 %v50
    %v567 = vunpack.c.l.b16 %v51
    %v568 = vunpack.c.l.b16 %v52
    %v569 = vunpack.c.l.b16 %v53
    %v570 = vunpack.c.l.b16 %v54
    %v571 = vunpack.c.l.b16 %v55
    %v572 = vunpack.c.l.b16 %v56
    %v573 = vunpack.c.l.b16 %v57
    %v574 = vunpack.c.l.b16 %v58
    %v575 = vunpack.c.l.b16 %v59
    %v576 = vunpack.c.l.b16 %v60
    %v577 = vunpack.c.l.b16 %v61
    %v578 = vunpack.c.l.b16 %v62
    %v579 = vunpack.c.l.b16 %v63
    %v580 = vunpack.c.l.b16 %v64
    %v581 = vunpack.c.l.b16 %v65
    %v582 = vunpack.c.l.b16 %v66
    %v583 = vunpack.c.l.b16 %v67
    %v584 = vunpack.c.l.b16 %v68
    %v585 = vunpack.c.l.b16 %v69
    %v586 = vunpack.c.l.b16 %v70
    %v587 = vunpack.c.l.b16 %v71
    %v588 = vunpack.c.l.b16 %v72
    %v589 = vunpack.c.l.b16 %v73
    %v590 = vunpack.c.l.b16 %v74
    %v591 = vunpack.c.l.b16 %v75
    %v592 = vunpack.c.l.b16 %v76
    %v593 = vunpack.c.l.b16 %v77
    %v594 = vunpack.c.l.b16 %v78
    %v595 = vunpack.c.l.b16 %v79
    %v596 = vunpack.c.l.b16 %v80
    %v597 = vunpack.c.l.b16 %v81
    %v598 = vunpack.c.l.b16 %v82
    %v599 = vunpack.c.l.b16 %v83
    %v600 = vunpack.c.l.b16 %v84
    %v601 = vunpack.c.l.b16 %v85
    %v602 = vunpack.c.l.b16 %v86
    %v603 = vunpack.c.l.b16 %v87
    %v604 = vunpack.c.l.b16 %v88
    %v605 = vunpack.c.l.b16 %v89
    %v606 = vunpack.c.l.b16 %v90
    %v607 = vunpack.c.l.b16 %v91
    %v608 = vunpack.c.l.b16 %v92
    %v609 = vunpack.c.l.b16 %v93
    %v610 = vunpack.c.l.b16 %v94
    %v611 = vunpack.c.l.b16 %v95
    %v612 = vunpack.c.l.b16 %v96
    %v613 = vunpack.c.l.b16 %v97
    %v614 = vunpack.c.l.b16 %v98
    %v615 = vunpack.c.l.b16 %v99
    %v616 = vunpack.c.l.b16 %v100
    %v617 = vunpack.c.l.b16 %v101
    %v618 = vunpack.c.l.b16 %v102
    %v619 = vunpack.c.l.b16 %v103
    %v620 = vunpack.c.l.b16 %v104
    %v621 = vunpack.c.l.b16 %v105
    %v622 = vunpack.c.l.b16 %v106
    %v623 = vunpack.c.l.b16 %v107
    %v624 = vunpack.c.l.b16 %v108
    %v625 = vunpack.c.l.b16 %v109
    %v626 = vunpack.c.l.b16 %v110
    %v627 = vunpack.c.l.b16 %v111
    %v628 = vunpack.c.l.b16 %v112
    %v629 = vunpack.c.l.b16 %v113
    %v630 = vunpack.c.l.b16 %v114
    %v631 = vunpack.c.l.b16 %v115
    %v632 = vunpack.c.l.b16 %v116
    %v633 = vunpack.c.l.b16 %v117
    %v634 = vunpack.c.l.b16 %v118
    %v635 = vunpack.c.l.b16 %v119
    %v636 = vunpack.c.l.b16 %v120
    %v637 = vunpack.c.l.b16 %v121
    %v638 = vunpack.c.l.b16 %v122
    %v639 = vunpack.c.l.b16 %v123
    %v640 = vunpack.c.l.b16 %v124
    %v641 = vunpack.c.l.b16 %v125
    %v642 = vunpack.c.l.b16 %v126
    %v643 = vunpack.c.l.b16 %v127
    %v644 = vunpack.c.l.b16 %v128
    %v645 = vunpack.c.l.b16 %v129
    %v646 = vunpack.c.l.b16 %v130
    %v647 = vunpack.c.l.b16 %v131
    %v648 = vunpack.c.l.b16 %v132
    %v649 = vunpack.c.l.b16 %v133
    %v650 = vunpack.c.l.b16 %v134
    %v651 = vunpack.c.l.b16 %v135
    %v652 = vunpack.c.l.b16 %v136
    %v653 = vunpack.c.l.b16 %v137
    %v654 = vunpack.c.l.b16 %v138
    %v655 = vunpack.c.l.b16 %v139
    %v656 = vunpack.c.l.b16 %v140
    %v657 = vunpack.c.l.b16 %v141
    %v658 = vunpack.c.l.b16 %v142
    %v659 = vunpack.c.l.b16 %v143
    %v660 = vunpack.c.l.b16 %v144
    %v661 = vunpack.c.l.b16 %v145
    %v662 = vunpack.c.l.b16 %v146
    %v663 = vunpack.c.l.b16 %v147
    %v664 = vunpack.c.l.b16 %v148
    %v665 = vunpack.c.l.b16 %v149
    %v666 = vunpack.c.l.b16 %v150
    %v667 = vunpack.c.l.b16 %v151
    %v668 = vunpack.c.l.b16 %v152
    %v669 = vunpack.c.l.b16 %v153
    %v670 = vunpack.c.l.b16 %v154
    %v671 = vunpack.c.l.b16 %v155
    %v672 = vunpack.c.l.b16 %v156
    %v673 = vunpack.c.l.b16 %v157
    %v674 = vunpack.c.l.b16 %v158
    %v675 = vunpack.c.l.b16 %v159
    %v676 = vunpack.c.l.b16 %v160
    %v677 = vunpack.c.l.b16 %v161
    %v678 = vunpack.c.l.b16 %v162
    %v679 = vunpack.c.l.b16 %v163
    %v680 = vunpack.c.l.b16 %v164
    %v681 = vunpack.c.l.b16 %v165
    %v682 = vunpack.c.l.b16 %v166
    %v683 = vunpack.c.l.b16 %v167
    %v684 = vunpack.c.l.b16 %v168
    %v685 = vunpack.c.l.b16 %v169
    %v686 = vunpack.c.l.b16 %v170
    %v687 = vunpack.c.l.b16 %v171
    %v688 = vunpack.c.l.b16 %v172
    %v689 = vunpack.c.l.b16 %v173
    %v690 = vunpack.c.l.b16 %v174
    %v691 = vunpack.c.l.b16 %v175
    %v692 = vunpack.c.l.b16 %v176
    %v693 = vunpack.c.l.b16 %v177
    %v694 = vunpack.c.l.b16 %v178
    %v695 = vunpack.c.l.b16 %v179
    %v696 = vunpack.c.l.b16 %v180
    %v697 = vunpack.c.l.b16 %v181
    %v698 = vunpack.c.l.b16 %v182
    %v699 = vunpack.c.l.b16 %v183
    %v700 = vunpack.c.l.b16 %v184
    %v701 = vunpack.c.l.b16 %v185
    %v702 = vunpack.c.l.b16 %v186
    %v703 = vunpack.c.l.b16 %v187
    %v704 = vunpack.c.l.b16 %v188
    %v705 = vunpack.c.l.b16 %v189
    %v706 = vunpack.c.l.b16 %v190
    %v707 = vunpack.c.l.b16 %v191
    %v708 = vunpack.c.l.b16 %v192
    %v709 = vunpack.c.l.b16 %v193
    %v710 = vunpack.c.l.b16 %v194
    %v711 = vunpack.c.l.b16 %v195
    %v712 = vunpack.c.l.b16 %v196
    %v713 = vunpack.c.l.b16 %v197
    %v714 = vunpack.c.l.b16 %v198
    %v715 = vunpack.c.l.b16 %v199
    %v716 = vunpack.c.l.b16 %v200
    %v717 = vunpack.c.l.b16 %v201
    %v718 = vunpack.c.l.b16 %v202
    %v719 = vunpack.c.l.b16 %v203
    %v720 = vunpack.c.l.b16 %v204
    %v721 = vunpack.c.l.b16 %v205
    %v722 = vunpack.c.l.b16 %v206
    %v723 = vunpack.c.l.b16 %v207
    %v724 = vunpack.c.l.b16 %v208
    %v725 = vunpack.c.l.b16 %v209
    %v726 = vunpack.c.l.b16 %v210
    %v727 = vunpack.c.l.b16 %v211
    %v728 = vunpack.c.l.b16 %v212
    %v729 = vunpack.c.l.b16 %v213
    %v730 = vunpack.c.l.b16 %v214
    %v731 = vunpack.c.l.b16 %v215
    %v732 = vunpack.c.l.b16 %v216
    %v733 = vunpack.c.l.b16 %v217
    %v734 = vunpack.c.l.b16 %v218
    %v735 = vunpack.c.l.b16 %v219
    %v736 = vunpack.c.l.b16 %v220
    %v737 = vunpack.c.l.b16 %v221
    %v738 = vunpack.c.l.b16 %v222
    %v739 = vunpack.c.l.b16 %v223
    %v740 = vunpack.c.l.b16 %v224
    %v741 = vunpack.c.l.b16 %v225
    %v742 = vunpack.c.l.b16 %v226
    %v743 = vunpack.c.l.b16 %v227
    %v744 = vunpack.c.l.b16 %v228
    %v745 = vunpack.c.l.b16 %v229
    %v746 = vunpack.c.l.b16 %v230
    %v747 = vunpack.c.l.b16 %v231
    %v748 = vunpack.c.l.b16 %v232
    %v749 = vunpack.c.l.b16 %v233
    %v750 = vunpack.c.l.b16 %v234
    %v751 = vunpack.c.l.b16 %v235
    %v752 = vunpack.c.l.b16 %v236
    %v753 = vunpack.c.l.b16 %v237
    %v754 = vunpack.c.l.b16 %v238
    %v755 = vunpack.c.l.b16 %v239
    %v756 = vunpack.c.l.b16 %v240
    %v757 = vunpack.c.l.b16 %v241
    %v758 = vunpack.c.l.b16 %v242
    %v759 = vunpack.c.l.b16 %v243
    %v760 = vunpack.c.l.b16 %v244
    %v761 = vunpack.c.l.b16 %v245
    %v762 = vunpack.c.l.b16 %v246
    %v763 = vunpack.c.l.b16 %v247
    %v764 = vunpack.c.l.b16 %v248
    %v765 = vunpack.c.l.b16 %v249
    %v766 = vunpack.c.l.b16 %v250
    %v767 = vunpack.c.l.b16 %v251
    %v768 = vunpack.c.l.b16 %v252
    %v769 = vunpack.c.l.b16 %v253
    %v770 = vunpack.c.l.b16 %v254
    %v771 = vunpack.c.l.b16 %v255
    %v772 = vunpack.c.l.b16 %v256
    %v773 = vunpack.c.l.b16 %v257
    %v774 = vunpack.c.l.b16 %v258
    %v775 = vunpack.c.l.b16 %v259
    %v776 = vunpack.c.l.b16 %v260
    %v777 = vunpack.c.l.b16 %v261
    %v778 = vunpack.c.l.b16 %v262
    %v779 = vunpack.c.l.b16 %v263
    %v780 = vunpack.c.l.b16 %v264
    %v781 = vunpack.c.l.b16 %v265
    %v782 = vunpack.c.l.b16 %v266
    %v783 = vunpack.c.l.b16 %v267
    %v784 = vunpack.c.l.b16 %v268
    %v785 = vunpack.c.l.b16 %v269
    %v786 = vunpack.c.l.b16 %v270
    %v787 = vunpack.c.l.b16 %v271
    %v788 = vunpack.c.l.b16 %v272
    %v789 = vunpack.c.l.b16 %v273
    %v790 = vunpack.c.l.b16 %v274
    %v791 = vpack.c.b16 %v536, %v535
    %v792 = vpack.c.b16 %v538, %v537
    %v793 = vpack.c.b16 %v540, %v539
    %v794 = vpack.c.b16 %v542, %v541
    %v795 = vpack.c.b16 %v544, %v543
    %v796 = vpack.c.b16 %v546, %v545
    %v797 = vpack.c.b16 %v548, %v547
    %v798 = vpack.c.b16 %v550, %v549
    %v799 = vpack.c.b16 %v552, %v551
    %v800 = vpack.c.b16 %v554, %v553
    %v801 = vpack.c.b16 %v556, %v555
    %v802 = vpack.c.b16 %v558, %v557
    %v803 = vpack.c.b16 %v560, %v559
    %v804 = vpack.c.b16 %v562, %v561
    %v805 = vpack.c.b16 %v564, %v563
    %v806 = vpack.c.b16 %v566, %v565
    %v807 = vpack.c.b16 %v568, %v567
    %v808 = vpack.c.b16 %v570, %v569
    %v809 = vpack.c.b16 %v572, %v571
    %v810 = vpack.c.b16 %v574, %v573
    %v811 = vpack.c.b16 %v576, %v575
    %v812 = vpack.c.b16 %v578, %v577
    %v813 = vpack.c.b16 %v580, %v579
    %v814 = vpack.c.b16 %v582, %v581
    %v815 = vpack.c.b16 %v584, %v583
    %v816 = vpack.c.b16 %v586, %v585
    %v817 = vpack.c.b16 %v588, %v587
    %v818 = vpack.c.b16 %v590, %v589
    %v819 = vpack.c.b16 %v592, %v591
    %v820 = vpack.c.b16 %v594, %v593
    %v821 = vpack.c.b16 %v596, %v595
    %v822 = vpack.c.b16 %v598, %v597
    %v823 = vpack.c.b16 %v600, %v599
    %v824 = vpack.c.b16 %v602, %v601
    %v825 = vpack.c.b16 %v604, %v603
    %v826 = vpack.c.b16 %v606, %v605
    %v827 = vpack.c.b16 %v608, %v607
    %v828 = vpack.c.b16 %v610, %v609
    %v829 = vpack.c.b16 %v612, %v611
    %v830 = vpack.c.b16 %v614, %v613
    %v831 = vpack.c.b16 %v616, %v615
    %v832 = vpack.c.b16 %v618, %v617
    %v833 = vpack.c.b16 %v620, %v619
    %v834 = vpack.c.b16 %v622, %v621
    %v835 = vpack.c.b16 %v624, %v623
    %v836 = vpack.c.b16 %v626, %v625
    %v837 = vpack.c.b16 %v628, %v627
    %v838 = vpack.c.b16 %v630, %v629
    %v839 = vpack.c.b16 %v632, %v631
    %v840 = vpack.c.b16 %v634, %v633
    %v841 = vpack.c.b16 %v636, %v635
    %v842 = vpack.c.b16 %v638, %v637
    %v843 = vpack.c.b16 %v640, %v639
    %v844 = vpack.c.b16 %v642, %v641
    %v845 = vpack.c.b16 %v644, %v643
    %v846 = vpack.c.b16 %v646, %v645
    %v847 = vpack.c.b16 %v648, %v647
    %v848 = vpack.c.b16 %v650, %v649
    %v849 = vpack.c.b16 %v652, %v651
    %v850 = vpack.c.b16 %v654, %v653
    %v851 = vpack.c.b16 %v656, %v655
    %v852 = vpack.c.b16 %v658, %v657
    %v853 = vpack.c.b16 %v660, %v659
    %v854 = vpack.c.b16 %v662, %v661
    %v855 = vpack.c.b16 %v664, %v663
    %v856 = vpack.c.b16 %v666, %v665
    %v857 = vpack.c.b16 %v668, %v667
    %v858 = vpack.c.b16 %v670, %v669
    %v859 = vpack.c.b16 %v672, %v671
    %v860 = vpack.c.b16 %v674, %v673
    %v861 = vpack.c.b16 %v676, %v675
    %v862 = vpack.c.b16 %v678, %v677
    %v863 = vpack.c.b16 %v680, %v679
    %v864 = vpack.c.b16 %v682, %v681
    %v865 = vpack.c.b16 %v684, %v683
    %v866 = vpack.c.b16 %v686, %v685
    %v867 = vpack.c.b16 %v688, %v687
    %v868 = vpack.c.b16 %v690, %v689
    %v869 = vpack.c.b16 %v692, %v691
    %v870 = vpack.c.b16 %v694, %v693
    %v871 = vpack.c.b16 %v696, %v695
    %v872 = vpack.c.b16 %v698, %v697
    %v873 = vpack.c.b16 %v700, %v699
    %v874 = vpack.c.b16 %v702, %v701
    %v875 = vpack.c.b16 %v704, %v703
    %v876 = vpack.c.b16 %v706, %v705
    %v877 = vpack.c.b16 %v708, %v707
    %v878 = vpack.c.b16 %v710, %v709
    %v879 = vpack.c.b16 %v712, %v711
    %v880 = vpack.c.b16 %v714, %v713
    %v881 = vpack.c.b16 %v716, %v715
    %v882 = vpack.c.b16 %v718, %v717
    %v883 = vpack.c.b16 %v720, %v719
    %v884 = vpack.c.b16 %v722, %v721
    %v885 = vpack.c.b16 %v724, %v723
    %v886 = vpack.c.b16 %v726, %v725
    %v887 = vpack.c.b16 %v728, %v727
    %v888 = vpack.c.b16 %v730, %v729
    %v889 = vpack.c.b16 %v732, %v731
    %v890 = vpack.c.b16 %v734, %v733
    %v891 = vpack.c.b16 %v736, %v735
    %v892 = vpack.c.b16 %v738, %v737
    %v893 = vpack.c.b16 %v740, %v739
    %v894 = vpack.c.b16 %v742, %v741
    %v895 = vpack.c.b16 %v744, %v743
    %v896 = vpack.c.b16 %v746, %v745
    %v897 = vpack.c.b16 %v748, %v747
    %v898 = vpack.c.b16 %v750, %v749
    %v899 = vpack.c.b16 %v752, %v751
    %v900 = vpack.c.b16 %v754, %v753
    %v901 = vpack.c.b16 %v756, %v755
    %v902 = vpack.c.b16 %v758, %v757
    %v903 = vpack.c.b16 %v760, %v759
    %v904 = vpack.c.b16 %v762, %v761
    %v905 = vpack.c.b16 %v764, %v763
    %v906 = vpack.c.b16 %v766, %v765
    %v907 = vpack.c.b16 %v768, %v767
    %v908 = vpack.c.b16 %v770, %v769
    %v909 = vpack.c.b16 %v772, %v771
    %v910 = vpack.c.b16 %v774, %v773
    %v911 = vpack.c.b16 %v776, %v775
    %v912 = vpack.c.b16 %v778, %v777
    %v913 = vpack.c.b16 %v780, %v779
    %v914 = vpack.c.b16 %v782, %v781
    %v915 = vpack.c.b16 %v784, %v783
    %v916 = vpack.c.b16 %v786, %v785
    %v917 = vpack.c.b16 %v788, %v787
    %v918 = vpack.c.b16 %v790, %v789
    %v923 = vunpack.c.l.b16 %v275
    %v924 = vunpack.c.l.b16 %v276
    %v925 = vunpack.c.l.b16 %v277
    %v926 = vunpack.c.l.b16 %v278
    %v927 = vpack.c.b16 %v924, %v923
    %v928 = vpack.c.b16 %v926, %v925
    %vm930 = vcmask 220160
    %v932 = vsel %vm930, %v791, 0
    %v935 = vsel %vm930, %v792, 0
    %v938 = vsel %vm930, %v793, 0
    %v941 = vsel %vm930, %v794, 0
    %v944 = vsel %vm930, %v795, 0
    %v947 = vsel %vm930, %v796, 0
    %v950 = vsel %vm930, %v797, 0
    %v953 = vsel %vm930, %v798, 0
    %v956 = vsel %vm930, %v799, 0
    %v959 = vsel %vm930, %v800, 0
    %v962 = vsel %vm930, %v801, 0
    %v965 = vsel %vm930, %v802, 0
    %v968 = vsel %vm930, %v803, 0
    %v971 = vsel %vm930, %v804, 0
    %v974 = vsel %vm930, %v805, 0
    %v977 = vsel %vm930, %v806, 0
    %v980 = vsel %vm930, %v807, 0
    %v983 = vsel %vm930, %v808, 0
    %v986 = vsel %vm930, %v809, 0
    %v989 = vsel %vm930, %v810, 0
    %v992 = vsel %vm930, %v811, 0
    %v995 = vsel %vm930, %v812, 0
    %v998 = vsel %vm930, %v813, 0
    %v1001 = vsel %vm930, %v814, 0
    %v1004 = vsel %vm930, %v815, 0
    %v1007 = vsel %vm930, %v816, 0
    %v1010 = vsel %vm930, %v817, 0
    %v1013 = vsel %vm930, %v818, 0
    %v1016 = vsel %vm930, %v819, 0
    %v1019 = vsel %vm930, %v820, 0
    %v1022 = vsel %vm930, %v821, 0
    %v1025 = vsel %vm930, %v822, 0
    %v1028 = vsel %vm930, %v823, 0
    %v1031 = vsel %vm930, %v824, 0
    %v1034 = vsel %vm930, %v825, 0
    %v1037 = vsel %vm930, %v826, 0
    %v1040 = vsel %vm930, %v827, 0
    %v1043 = vsel %vm930, %v828, 0
    %v1046 = vsel %vm930, %v829, 0
    %v1049 = vsel %vm930, %v830, 0
    %v1052 = vsel %vm930, %v831, 0
    %v1055 = vsel %vm930, %v832, 0
    %v1058 = vsel %vm930, %v833, 0
    %v1061 = vsel %vm930, %v834, 0
    %v1064 = vsel %vm930, %v835, 0
    %v1067 = vsel %vm930, %v836, 0
    %v1070 = vsel %vm930, %v837, 0
    %v1073 = vsel %vm930, %v838, 0
    %v1076 = vsel %vm930, %v839, 0
    %v1079 = vsel %vm930, %v840, 0
    %v1082 = vsel %vm930, %v841, 0
    %v1085 = vsel %vm930, %v842, 0
    %v1088 = vsel %vm930, %v843, 0
    %v1091 = vsel %vm930, %v844, 0
    %v1094 = vsel %vm930, %v845, 0
    %v1097 = vsel %vm930, %v846, 0
    %v1100 = vsel %vm930, %v847, 0
    %v1103 = vsel %vm930, %v848, 0
    %v1106 = vsel %vm930, %v849, 0
    %v1109 = vsel %vm930, %v850, 0
    %v1112 = vsel %vm930, %v851, 0
    %v1115 = vsel %vm930, %v852, 0
    %v1118 = vsel %vm930, %v853, 0
    %v1121 = vsel %vm930, %v854, 0
    %v1124 = vsel %vm930, %v855, 0
    %v1127 = vsel %vm930, %v856, 0
    %v1130 = vsel %vm930, %v857, 0
    %v1133 = vsel %vm930, %v858, 0
    %v1136 = vsel %vm930, %v859, 0
    %v1139 = vsel %vm930, %v860, 0
    %v1142 = vsel %vm930, %v861, 0
    %v1145 = vsel %vm930, %v862, 0
    %v1148 = vsel %vm930, %v863, 0
    %v1151 = vsel %vm930, %v864, 0
    %v1154 = vsel %vm930, %v865, 0
    %v1157 = vsel %vm930, %v866, 0
    %v1160 = vsel %vm930, %v867, 0
    %v1163 = vsel %vm930, %v868, 0
    %v1166 = vsel %vm930, %v869, 0
    %v1169 = vsel %vm930, %v870, 0
    %v1172 = vsel %vm930, %v871, 0
    %v1175 = vsel %vm930, %v872, 0
    %v1178 = vsel %vm930, %v873, 0
    %v1181 = vsel %vm930, %v874, 0
    %v1184 = vsel %vm930, %v875, 0
    %v1187 = vsel %vm930, %v876, 0
    %v1190 = vsel %vm930, %v877, 0
    %v1193 = vsel %vm930, %v878, 0
    %v1196 = vsel %vm930, %v879, 0
    %v1199 = vsel %vm930, %v880, 0
    %v1202 = vsel %vm930, %v881, 0
    %v1205 = vsel %vm930, %v882, 0
    %v1208 = vsel %vm930, %v883, 0
    %v1211 = vsel %vm930, %v884, 0
    %v1214 = vsel %vm930, %v885, 0
    %v1217 = vsel %vm930, %v886, 0
    %v1220 = vsel %vm930, %v887, 0
    %v1223 = vsel %vm930, %v888, 0
    %v1226 = vsel %vm930, %v889, 0
    %v1229 = vsel %vm930, %v890, 0
    %v1232 = vsel %vm930, %v891, 0
    %v1235 = vsel %vm930, %v892, 0
    %v1238 = vsel %vm930, %v893, 0
    %v1241 = vsel %vm930, %v894, 0
    %v1244 = vsel %vm930, %v895, 0
    %v1247 = vsel %vm930, %v896, 0
    %v1250 = vsel %vm930, %v897, 0
    %v1253 = vsel %vm930, %v898, 0
    %v1256 = vsel %vm930, %v899, 0
    %v1259 = vsel %vm930, %v900, 0
    %v1262 = vsel %vm930, %v901, 0
    %v1265 = vsel %vm930, %v902, 0
    %v1268 = vsel %vm930, %v903, 0
    %v1271 = vsel %vm930, %v904, 0
    %v1274 = vsel %vm930, %v905, 0
    %v1277 = vsel %vm930, %v906, 0
    %v1280 = vsel %vm930, %v907, 0
    %v1283 = vsel %vm930, %v908, 0
    %v1286 = vsel %vm930, %v909, 0
    %v1289 = vsel %vm930, %v910, 0
    %v1292 = vsel %vm930, %v911, 0
    %v1295 = vsel %vm930, %v912, 0
    %v1298 = vsel %vm930, %v913, 0
    %v1301 = vsel %vm930, %v914, 0
    %v1304 = vsel %vm930, %v915, 0
    %v1307 = vsel %vm930, %v916, 0
    %v1310 = vsel %vm930, %v917, 0
    %v1313 = vsel %vm930, %v918, 0
    %vm1315 = vcmask 1044480
    %vm1316 = vcmask 1045504
    %v1317 = vsel %vm1315, 4294967295, 65535
    %v1318 = vsel %vm1316, %v1317, 0
    %v1320 = vand.u32 %v928, %v1318
    %1322 = vmatprep.subr.bf16.mxu0 0
    %1323 = vmatpush1.bf16.msra.mxu0 %v927
    %1324 = vmatprep.subr.bf16.mxu0 0
    %1325 = vmatpush1.bf16.msra.mxu0 %v1320
    %1326 = vmatprep.subr.bf16.mxu0 0
    %1327 = vmatpush1.bf16.msra.mxu0 0
    %1328 = vmatprep.subr.bf16.mxu0 0
    %1329 = vmatpush1.bf16.msra.mxu0 0
    %1330 = vmatprep.subr.bf16.mxu0 0
    %1331 = vmatpush1.bf16.msra.mxu0 0
    %1332 = vmatprep.subr.bf16.mxu0 0
    %1333 = vmatpush1.bf16.msra.mxu0 0
    %1334 = vmatprep.subr.bf16.mxu0 0
    %1335 = vmatpush1.bf16.msra.mxu0 0
    %1336 = vmatprep.subr.bf16.mxu0 0
    %1337 = vmatpush1.bf16.msra.mxu0 0
    %1338 = vmatprep.subr.bf16.mxu0 0
    %1339 = vmatpush1.bf16.msra.mxu0 0
    %1340 = vmatprep.subr.bf16.mxu0 0
    %1341 = vmatpush1.bf16.msra.mxu0 0
    %1342 = vmatprep.subr.bf16.mxu0 0
    %1343 = vmatpush1.bf16.msra.mxu0 0
    %1344 = vmatprep.subr.bf16.mxu0 0
    %1345 = vmatpush1.bf16.msra.mxu0 0
    %1346 = vmatprep.subr.bf16.mxu0 0
    %1347 = vmatpush1.bf16.msra.mxu0 0
    %1348 = vmatprep.subr.bf16.mxu0 0
    %1349 = vmatpush1.bf16.msra.mxu0 0
    %1350 = vmatprep.subr.bf16.mxu0 0
    %1351 = vmatpush1.bf16.msra.mxu0 0
    %1352 = vmatprep.subr.bf16.mxu0 0
    %1353 = vmatpush1.bf16.msra.mxu0 0
    %1354 = vmatprep.mubr.bf16.mxu0 0
    %1355 = vmatmul.mubr.bf16.gmra.mrb[0].mxu0 %v932
    %v1356 = vpop.f32.mrb[0].mxu0
    %v1357 = vadd.f32 0.0, %v1356
    %v1358 = vpop.f32.mrb[0].mxu0
    %v1359 = vpop.f32.mrb[0].mxu0
    %v1360 = vadd.f32 0.0, %v1359
    %v1361 = vpop.f32.mrb[0].mxu0
    %1362 = vmatprep.mubr.bf16.mxu0 0
    %1363 = vmatmul.mubr.bf16.gmra.mrb[0].mxu0 %v935
    %v1364 = vpop.f32.mrb[0].mxu0
    %v1365 = vadd.f32 0.0, %v1364
    %v1366 = vpop.f32.mrb[0].mxu0
    %v1367 = vpop.f32.mrb[0].mxu0
    %v1368 = vadd.f32 0.0, %v1367
    %v1369 = vpop.f32.mrb[0].mxu0
    %1370 = vmatprep.mubr.bf16.mxu0 0
    %1371 = vmatmul.mubr.bf16.gmra.mrb[0].mxu0 %v938
    %v1372 = vpop.f32.mrb[0].mxu0
    %v1373 = vadd.f32 0.0, %v1372
    %v1374 = vpop.f32.mrb[0].mxu0
    %v1375 = vpop.f32.mrb[0].mxu0
    %v1376 = vadd.f32 0.0, %v1375
    %v1377 = vpop.f32.mrb[0].mxu0
    %1378 = vmatprep.mubr.bf16.mxu0 0
    %1379 = vmatmul.mubr.bf16.gmra.mrb[0].mxu0 %v941
    %v1380 = vpop.f32.mrb[0].mxu0
    %v1381 = vadd.f32 0.0, %v1380
    %v1382 = vpop.f32.mrb[0].mxu0
    %v1383 = vpop.f32.mrb[0].mxu0
    %v1384 = vadd.f32 0.0, %v1383
    %v1385 = vpop.f32.mrb[0].mxu0
    %1386 = vmatprep.mubr.bf16.mxu0 0
    %1387 = vmatmul.mubr.bf16.gmra.mrb[0].mxu0 %v944
    %v1388 = vpop.f32.mrb[0].mxu0
    %v1389 = vadd.f32 0.0, %v1388
    %v1390 = vpop.f32.mrb[0].mxu0
    %v1391 = vpop.f32.mrb[0].mxu0
    %v1392 = vadd.f32 0.0, %v1391
    %v1393 = vpop.f32.mrb[0].mxu0
    %1394 = vmatprep.mubr.bf16.mxu0 0
    %1395 = vmatmul.mubr.bf16.gmra.mrb[0].mxu0 %v947
    %v1396 = vpop.f32.mrb[0].mxu0
    %v1397 = vadd.f32 0.0, %v1396
    %v1398 = vpop.f32.mrb[0].mxu0
    %v1399 = vpop.f32.mrb[0].mxu0
    %v1400 = vadd.f32 0.0, %v1399
    %v1401 = vpop.f32.mrb[0].mxu0
    %1402 = vmatprep.mubr.bf16.mxu0 0
    %1403 = vmatmul.mubr.bf16.gmra.mrb[0].mxu0 %v950
    %v1404 = vpop.f32.mrb[0].mxu0
    %v1405 = vadd.f32 0.0, %v1404
    %v1406 = vpop.f32.mrb[0].mxu0
    %v1407 = vpop.f32.mrb[0].mxu0
    %v1408 = vadd.f32 0.0, %v1407
    %v1409 = vpop.f32.mrb[0].mxu0
    %1410 = vmatprep.mubr.bf16.mxu0 0
    %1411 = vmatmul.mubr.bf16.gmra.mrb[0].mxu0 %v953
    %v1412 = vpop.f32.mrb[0].mxu0
    %v1413 = vadd.f32 0.0, %v1412
    %v1414 = vpop.f32.mrb[0].mxu0
    %v1415 = vpop.f32.mrb[0].mxu0
    %v1416 = vadd.f32 0.0, %v1415
    %v1417 = vpop.f32.mrb[0].mxu0
    %1418 = vmatprep.mubr.bf16.mxu0 0
    %1419 = vmatmul.mubr.bf16.gmra.mrb[0].mxu0 %v956
    %v1420 = vpop.f32.mrb[0].mxu0
    %v1421 = vadd.f32 0.0, %v1420
    %v1422 = vpop.f32.mrb[0].mxu0
    %v1423 = vpop.f32.mrb[0].mxu0
    %v1424 = vadd.f32 0.0, %v1423
    %v1425 = vpop.f32.mrb[0].mxu0
    %1426 = vmatprep.mubr.bf16.mxu0 0
    %1427 = vmatmul.mubr.bf16.gmra.mrb[0].mxu0 %v959
    %v1428 = vpop.f32.mrb[0].mxu0
    %v1429 = vadd.f32 0.0, %v1428
    %v1430 = vpop.f32.mrb[0].mxu0
    %v1431 = vpop.f32.mrb[0].mxu0
    %v1432 = vadd.f32 0.0, %v1431
    %v1433 = vpop.f32.mrb[0].mxu0
    %1434 = vmatprep.mubr.bf16.mxu0 0
    %1435 = vmatmul.mubr.bf16.gmra.mrb[0].mxu0 %v962
    %v1436 = vpop.f32.mrb[0].mxu0
    %v1437 = vadd.f32 0.0, %v1436
    %v1438 = vpop.f32.mrb[0].mxu0
    %v1439 = vpop.f32.mrb[0].mxu0
    %v1440 = vadd.f32 0.0, %v1439
    %v1441 = vpop.f32.mrb[0].mxu0
    %1442 = vmatprep.mubr.bf16.mxu0 0
    %1443 = vmatmul.mubr.bf16.gmra.mrb[0].mxu0 %v965
    %v1444 = vpop.f32.mrb[0].mxu0
    %v1445 = vadd.f32 0.0, %v1444
    %v1446 = vpop.f32.mrb[0].mxu0
    %v1447 = vpop.f32.mrb[0].mxu0
    %v1448 = vadd.f32 0.0, %v1447
    %v1449 = vpop.f32.mrb[0].mxu0
    %1450 = vmatprep.mubr.bf16.mxu0 0
    %1451 = vmatmul.mubr.bf16.gmra.mrb[0].mxu0 %v968
    %v1452 = vpop.f32.mrb[0].mxu0
    %v1453 = vadd.f32 0.0, %v1452
    %v1454 = vpop.f32.mrb[0].mxu0
    %v1455 = vpop.f32.mrb[0].mxu0
    %v1456 = vadd.f32 0.0, %v1455
    %v1457 = vpop.f32.mrb[0].mxu0
    %1458 = vmatprep.mubr.bf16.mxu0 0
    %1459 = vmatmul.mubr.bf16.gmra.mrb[0].mxu0 %v971
    %v1460 = vpop.f32.mrb[0].mxu0
    %v1461 = vadd.f32 0.0, %v1460
    %v1462 = vpop.f32.mrb[0].mxu0
    %v1463 = vpop.f32.mrb[0].mxu0
    %v1464 = vadd.f32 0.0, %v1463
    %v1465 = vpop.f32.mrb[0].mxu0
    %1466 = vmatprep.mubr.bf16.mxu0 0
    %1467 = vmatmul.mubr.bf16.gmra.mrb[0].mxu0 %v974
    %v1468 = vpop.f32.mrb[0].mxu0
    %v1469 = vadd.f32 0.0, %v1468
    %v1470 = vpop.f32.mrb[0].mxu0
    %v1471 = vpop.f32.mrb[0].mxu0
    %v1472 = vadd.f32 0.0, %v1471
    %v1473 = vpop.f32.mrb[0].mxu0
    %1474 = vmatprep.mubr.bf16.mxu0 0
    %1475 = vmatmul.mubr.bf16.gmra.mrb[0].mxu0 %v977
    %v1476 = vpop.f32.mrb[0].mxu0
    %v1477 = vadd.f32 0.0, %v1476
    %v1478 = vpop.f32.mrb[0].mxu0
    %v1479 = vpop.f32.mrb[0].mxu0
    %v1480 = vadd.f32 0.0, %v1479
    %v1481 = vpop.f32.mrb[0].mxu0
    %1482 = vmatprep.mubr.bf16.mxu0 0
    %1483 = vmatmul.mubr.bf16.gmra.mrb[0].mxu0 %v980
    %v1484 = vpop.f32.mrb[0].mxu0
    %v1485 = vadd.f32 0.0, %v1484
    %v1486 = vpop.f32.mrb[0].mxu0
    %v1487 = vpop.f32.mrb[0].mxu0
    %v1488 = vadd.f32 0.0, %v1487
    %v1489 = vpop.f32.mrb[0].mxu0
    %1490 = vmatprep.mubr.bf16.mxu0 0
    %1491 = vmatmul.mubr.bf16.gmra.mrb[0].mxu0 %v983
    %v1492 = vpop.f32.mrb[0].mxu0
    %v1493 = vadd.f32 0.0, %v1492
    %v1494 = vpop.f32.mrb[0].mxu0
    %v1495 = vpop.f32.mrb[0].mxu0
    %v1496 = vadd.f32 0.0, %v1495
    %v1497 = vpop.f32.mrb[0].mxu0
    %1498 = vmatprep.mubr.bf16.mxu0 0
    %1499 = vmatmul.mubr.bf16.gmra.mrb[0].mxu0 %v986
    %v1500 = vpop.f32.mrb[0].mxu0
    %v1501 = vadd.f32 0.0, %v1500
    %v1502 = vpop.f32.mrb[0].mxu0
    %v1503 = vpop.f32.mrb[0].mxu0
    %v1504 = vadd.f32 0.0, %v1503
    %v1505 = vpop.f32.mrb[0].mxu0
    %1506 = vmatprep.mubr.bf16.mxu0 0
    %1507 = vmatmul.mubr.bf16.gmra.mrb[0].mxu0 %v989
    %v1508 = vpop.f32.mrb[0].mxu0
    %v1509 = vadd.f32 0.0, %v1508
    %v1510 = vpop.f32.mrb[0].mxu0
    %v1511 = vpop.f32.mrb[0].mxu0
    %v1512 = vadd.f32 0.0, %v1511
    %v1513 = vpop.f32.mrb[0].mxu0
    %1514 = vmatprep.mubr.bf16.mxu0 0
    %1515 = vmatmul.mubr.bf16.gmra.mrb[0].mxu0 %v992
    %v1516 = vpop.f32.mrb[0].mxu0
    %v1517 = vadd.f32 0.0, %v1516
    %v1518 = vpop.f32.mrb[0].mxu0
    %v1519 = vpop.f32.mrb[0].mxu0
    %v1520 = vadd.f32 0.0, %v1519
    %v1521 = vpop.f32.mrb[0].mxu0
    %1522 = vmatprep.mubr.bf16.mxu0 0
    %1523 = vmatmul.mubr.bf16.gmra.mrb[0].mxu0 %v995
    %v1524 = vpop.f32.mrb[0].mxu0
    %v1525 = vadd.f32 0.0, %v1524
    %v1526 = vpop.f32.mrb[0].mxu0
    %v1527 = vpop.f32.mrb[0].mxu0
    %v1528 = vadd.f32 0.0, %v1527
    %v1529 = vpop.f32.mrb[0].mxu0
    %1530 = vmatprep.mubr.bf16.mxu0 0
    %1531 = vmatmul.mubr.bf16.gmra.mrb[0].mxu0 %v998
    %v1532 = vpop.f32.mrb[0].mxu0
    %v1533 = vadd.f32 0.0, %v1532
    %v1534 = vpop.f32.mrb[0].mxu0
    %v1535 = vpop.f32.mrb[0].mxu0
    %v1536 = vadd.f32 0.0, %v1535
    %v1537 = vpop.f32.mrb[0].mxu0
    %1538 = vmatprep.mubr.bf16.mxu0 0
    %1539 = vmatmul.mubr.bf16.gmra.mrb[0].mxu0 %v1001
    %v1540 = vpop.f32.mrb[0].mxu0
    %v1541 = vadd.f32 0.0, %v1540
    %v1542 = vpop.f32.mrb[0].mxu0
    %v1543 = vpop.f32.mrb[0].mxu0
    %v1544 = vadd.f32 0.0, %v1543
    %v1545 = vpop.f32.mrb[0].mxu0
    %1546 = vmatprep.mubr.bf16.mxu0 0
    %1547 = vmatmul.mubr.bf16.gmra.mrb[0].mxu0 %v1004
    %v1548 = vpop.f32.mrb[0].mxu0
    %v1549 = vadd.f32 0.0, %v1548
    %v1550 = vpop.f32.mrb[0].mxu0
    %v1551 = vpop.f32.mrb[0].mxu0
    %v1552 = vadd.f32 0.0, %v1551
    %v1553 = vpop.f32.mrb[0].mxu0
    %1554 = vmatprep.mubr.bf16.mxu0 0
    %1555 = vmatmul.mubr.bf16.gmra.mrb[0].mxu0 %v1007
    %v1556 = vpop.f32.mrb[0].mxu0
    %v1557 = vadd.f32 0.0, %v1556
    %v1558 = vpop.f32.mrb[0].mxu0
    %v1559 = vpop.f32.mrb[0].mxu0
    %v1560 = vadd.f32 0.0, %v1559
    %v1561 = vpop.f32.mrb[0].mxu0
    %1562 = vmatprep.mubr.bf16.mxu0 0
    %1563 = vmatmul.mubr.bf16.gmra.mrb[0].mxu0 %v1010
    %v1564 = vpop.f32.mrb[0].mxu0
    %v1565 = vadd.f32 0.0, %v1564
    %v1566 = vpop.f32.mrb[0].mxu0
    %v1567 = vpop.f32.mrb[0].mxu0
    %v1568 = vadd.f32 0.0, %v1567
    %v1569 = vpop.f32.mrb[0].mxu0
    %1570 = vmatprep.mubr.bf16.mxu0 0
    %1571 = vmatmul.mubr.bf16.gmra.mrb[0].mxu0 %v1013
    %v1572 = vpop.f32.mrb[0].mxu0
    %v1573 = vadd.f32 0.0, %v1572
    %v1574 = vpop.f32.mrb[0].mxu0
    %v1575 = vpop.f32.mrb[0].mxu0
    %v1576 = vadd.f32 0.0, %v1575
    %v1577 = vpop.f32.mrb[0].mxu0
    %1578 = vmatprep.mubr.bf16.mxu0 0
    %1579 = vmatmul.mubr.bf16.gmra.mrb[0].mxu0 %v1016
    %v1580 = vpop.f32.mrb[0].mxu0
    %v1581 = vadd.f32 0.0, %v1580
    %v1582 = vpop.f32.mrb[0].mxu0
    %v1583 = vpop.f32.mrb[0].mxu0
    %v1584 = vadd.f32 0.0, %v1583
    %v1585 = vpop.f32.mrb[0].mxu0
    %1586 = vmatprep.mubr.bf16.mxu0 0
    %1587 = vmatmul.mubr.bf16.gmra.mrb[0].mxu0 %v1019
    %v1588 = vpop.f32.mrb[0].mxu0
    %v1589 = vadd.f32 0.0, %v1588
    %v1590 = vpop.f32.mrb[0].mxu0
    %v1591 = vpop.f32.mrb[0].mxu0
    %v1592 = vadd.f32 0.0, %v1591
    %v1593 = vpop.f32.mrb[0].mxu0
    %1594 = vmatprep.mubr.bf16.mxu0 0
    %1595 = vmatmul.mubr.bf16.gmra.mrb[0].mxu0 %v1022
    %v1596 = vpop.f32.mrb[0].mxu0
    %v1597 = vadd.f32 0.0, %v1596
    %v1598 = vpop.f32.mrb[0].mxu0
    %v1599 = vpop.f32.mrb[0].mxu0
    %v1600 = vadd.f32 0.0, %v1599
    %v1601 = vpop.f32.mrb[0].mxu0
    %1602 = vmatprep.mubr.bf16.mxu0 0
    %1603 = vmatmul.mubr.bf16.gmra.mrb[0].mxu0 %v1025
    %v1604 = vpop.f32.mrb[0].mxu0
    %v1605 = vadd.f32 0.0, %v1604
    %v1606 = vpop.f32.mrb[0].mxu0
    %v1607 = vpop.f32.mrb[0].mxu0
    %v1608 = vadd.f32 0.0, %v1607
    %v1609 = vpop.f32.mrb[0].mxu0
    %1610 = vmatprep.mubr.bf16.mxu0 0
    %1611 = vmatmul.mubr.bf16.gmra.mrb[0].mxu0 %v1028
    %v1612 = vpop.f32.mrb[0].mxu0
    %v1613 = vadd.f32 0.0, %v1612
    %v1614 = vpop.f32.mrb[0].mxu0
    %v1615 = vpop.f32.mrb[0].mxu0
    %v1616 = vadd.f32 0.0, %v1615
    %v1617 = vpop.f32.mrb[0].mxu0
    %1618 = vmatprep.mubr.bf16.mxu0 0
    %1619 = vmatmul.mubr.bf16.gmra.mrb[0].mxu0 %v1031
    %v1620 = vpop.f32.mrb[0].mxu0
    %v1621 = vadd.f32 0.0, %v1620
    %v1622 = vpop.f32.mrb[0].mxu0
    %v1623 = vpop.f32.mrb[0].mxu0
    %v1624 = vadd.f32 0.0, %v1623
    %v1625 = vpop.f32.mrb[0].mxu0
    %1626 = vmatprep.mubr.bf16.mxu0 0
    %1627 = vmatmul.mubr.bf16.gmra.mrb[0].mxu0 %v1034
    %v1628 = vpop.f32.mrb[0].mxu0
    %v1629 = vadd.f32 0.0, %v1628
    %v1630 = vpop.f32.mrb[0].mxu0
    %v1631 = vpop.f32.mrb[0].mxu0
    %v1632 = vadd.f32 0.0, %v1631
    %v1633 = vpop.f32.mrb[0].mxu0
    %1634 = vmatprep.mubr.bf16.mxu0 0
    %1635 = vmatmul.mubr.bf16.gmra.mrb[0].mxu0 %v1037
    %v1636 = vpop.f32.mrb[0].mxu0
    %v1637 = vadd.f32 0.0, %v1636
    %v1638 = vpop.f32.mrb[0].mxu0
    %v1639 = vpop.f32.mrb[0].mxu0
    %v1640 = vadd.f32 0.0, %v1639
    %v1641 = vpop.f32.mrb[0].mxu0
    %1642 = vmatprep.mubr.bf16.mxu0 0
    %1643 = vmatmul.mubr.bf16.gmra.mrb[0].mxu0 %v1040
    %v1644 = vpop.f32.mrb[0].mxu0
    %v1645 = vadd.f32 0.0, %v1644
    %v1646 = vpop.f32.mrb[0].mxu0
    %v1647 = vpop.f32.mrb[0].mxu0
    %v1648 = vadd.f32 0.0, %v1647
    %v1649 = vpop.f32.mrb[0].mxu0
    %1650 = vmatprep.mubr.bf16.mxu0 0
    %1651 = vmatmul.mubr.bf16.gmra.mrb[0].mxu0 %v1043
    %v1652 = vpop.f32.mrb[0].mxu0
    %v1653 = vadd.f32 0.0, %v1652
    %v1654 = vpop.f32.mrb[0].mxu0
    %v1655 = vpop.f32.mrb[0].mxu0
    %v1656 = vadd.f32 0.0, %v1655
    %v1657 = vpop.f32.mrb[0].mxu0
    %1658 = vmatprep.mubr.bf16.mxu0 0
    %1659 = vmatmul.mubr.bf16.gmra.mrb[0].mxu0 %v1046
    %v1660 = vpop.f32.mrb[0].mxu0
    %v1661 = vadd.f32 0.0, %v1660
    %v1662 = vpop.f32.mrb[0].mxu0
    %v1663 = vpop.f32.mrb[0].mxu0
    %v1664 = vadd.f32 0.0, %v1663
    %v1665 = vpop.f32.mrb[0].mxu0
    %1666 = vmatprep.mubr.bf16.mxu0 0
    %1667 = vmatmul.mubr.bf16.gmra.mrb[0].mxu0 %v1049
    %v1668 = vpop.f32.mrb[0].mxu0
    %v1669 = vadd.f32 0.0, %v1668
    %v1670 = vpop.f32.mrb[0].mxu0
    %v1671 = vpop.f32.mrb[0].mxu0
    %v1672 = vadd.f32 0.0, %v1671
    %v1673 = vpop.f32.mrb[0].mxu0
    %1674 = vmatprep.mubr.bf16.mxu0 0
    %1675 = vmatmul.mubr.bf16.gmra.mrb[0].mxu0 %v1052
    %v1676 = vpop.f32.mrb[0].mxu0
    %v1677 = vadd.f32 0.0, %v1676
    %v1678 = vpop.f32.mrb[0].mxu0
    %v1679 = vpop.f32.mrb[0].mxu0
    %v1680 = vadd.f32 0.0, %v1679
    %v1681 = vpop.f32.mrb[0].mxu0
    %1682 = vmatprep.mubr.bf16.mxu0 0
    %1683 = vmatmul.mubr.bf16.gmra.mrb[0].mxu0 %v1055
    %v1684 = vpop.f32.mrb[0].mxu0
    %v1685 = vadd.f32 0.0, %v1684
    %v1686 = vpop.f32.mrb[0].mxu0
    %v1687 = vpop.f32.mrb[0].mxu0
    %v1688 = vadd.f32 0.0, %v1687
    %v1689 = vpop.f32.mrb[0].mxu0
    %1690 = vmatprep.mubr.bf16.mxu0 0
    %1691 = vmatmul.mubr.bf16.gmra.mrb[0].mxu0 %v1058
    %v1692 = vpop.f32.mrb[0].mxu0
    %v1693 = vadd.f32 0.0, %v1692
    %v1694 = vpop.f32.mrb[0].mxu0
    %v1695 = vpop.f32.mrb[0].mxu0
    %v1696 = vadd.f32 0.0, %v1695
    %v1697 = vpop.f32.mrb[0].mxu0
    %1698 = vmatprep.mubr.bf16.mxu0 0
    %1699 = vmatmul.mubr.bf16.gmra.mrb[0].mxu0 %v1061
    %v1700 = vpop.f32.mrb[0].mxu0
    %v1701 = vadd.f32 0.0, %v1700
    %v1702 = vpop.f32.mrb[0].mxu0
    %v1703 = vpop.f32.mrb[0].mxu0
    %v1704 = vadd.f32 0.0, %v1703
    %v1705 = vpop.f32.mrb[0].mxu0
    %1706 = vmatprep.mubr.bf16.mxu0 0
    %1707 = vmatmul.mubr.bf16.gmra.mrb[0].mxu0 %v1064
    %v1708 = vpop.f32.mrb[0].mxu0
    %v1709 = vadd.f32 0.0, %v1708
    %v1710 = vpop.f32.mrb[0].mxu0
    %v1711 = vpop.f32.mrb[0].mxu0
    %v1712 = vadd.f32 0.0, %v1711
    %v1713 = vpop.f32.mrb[0].mxu0
    %1714 = vmatprep.mubr.bf16.mxu0 0
    %1715 = vmatmul.mubr.bf16.gmra.mrb[0].mxu0 %v1067
    %v1716 = vpop.f32.mrb[0].mxu0
    %v1717 = vadd.f32 0.0, %v1716
    %v1718 = vpop.f32.mrb[0].mxu0
    %v1719 = vpop.f32.mrb[0].mxu0
    %v1720 = vadd.f32 0.0, %v1719
    %v1721 = vpop.f32.mrb[0].mxu0
    %1722 = vmatprep.mubr.bf16.mxu0 0
    %1723 = vmatmul.mubr.bf16.gmra.mrb[0].mxu0 %v1070
    %v1724 = vpop.f32.mrb[0].mxu0
    %v1725 = vadd.f32 0.0, %v1724
    %v1726 = vpop.f32.mrb[0].mxu0
    %v1727 = vpop.f32.mrb[0].mxu0
    %v1728 = vadd.f32 0.0, %v1727
    %v1729 = vpop.f32.mrb[0].mxu0
    %1730 = vmatprep.mubr.bf16.mxu0 0
    %1731 = vmatmul.mubr.bf16.gmra.mrb[0].mxu0 %v1073
    %v1732 = vpop.f32.mrb[0].mxu0
    %v1733 = vadd.f32 0.0, %v1732
    %v1734 = vpop.f32.mrb[0].mxu0
    %v1735 = vpop.f32.mrb[0].mxu0
    %v1736 = vadd.f32 0.0, %v1735
    %v1737 = vpop.f32.mrb[0].mxu0
    %1738 = vmatprep.mubr.bf16.mxu0 0
    %1739 = vmatmul.mubr.bf16.gmra.mrb[0].mxu0 %v1076
    %v1740 = vpop.f32.mrb[0].mxu0
    %v1741 = vadd.f32 0.0, %v1740
    %v1742 = vpop.f32.mrb[0].mxu0
    %v1743 = vpop.f32.mrb[0].mxu0
    %v1744 = vadd.f32 0.0, %v1743
    %v1745 = vpop.f32.mrb[0].mxu0
    %1746 = vmatprep.mubr.bf16.mxu0 0
    %1747 = vmatmul.mubr.bf16.gmra.mrb[0].mxu0 %v1079
    %v1748 = vpop.f32.mrb[0].mxu0
    %v1749 = vadd.f32 0.0, %v1748
    %v1750 = vpop.f32.mrb[0].mxu0
    %v1751 = vpop.f32.mrb[0].mxu0
    %v1752 = vadd.f32 0.0, %v1751
    %v1753 = vpop.f32.mrb[0].mxu0
    %1754 = vmatprep.mubr.bf16.mxu0 0
    %1755 = vmatmul.mubr.bf16.gmra.mrb[0].mxu0 %v1082
    %v1756 = vpop.f32.mrb[0].mxu0
    %v1757 = vadd.f32 0.0, %v1756
    %v1758 = vpop.f32.mrb[0].mxu0
    %v1759 = vpop.f32.mrb[0].mxu0
    %v1760 = vadd.f32 0.0, %v1759
    %v1761 = vpop.f32.mrb[0].mxu0
    %1762 = vmatprep.mubr.bf16.mxu0 0
    %1763 = vmatmul.mubr.bf16.gmra.mrb[0].mxu0 %v1085
    %v1764 = vpop.f32.mrb[0].mxu0
    %v1765 = vadd.f32 0.0, %v1764
    %v1766 = vpop.f32.mrb[0].mxu0
    %v1767 = vpop.f32.mrb[0].mxu0
    %v1768 = vadd.f32 0.0, %v1767
    %v1769 = vpop.f32.mrb[0].mxu0
    %1770 = vmatprep.mubr.bf16.mxu0 0
    %1771 = vmatmul.mubr.bf16.gmra.mrb[0].mxu0 %v1088
    %v1772 = vpop.f32.mrb[0].mxu0
    %v1773 = vadd.f32 0.0, %v1772
    %v1774 = vpop.f32.mrb[0].mxu0
    %v1775 = vpop.f32.mrb[0].mxu0
    %v1776 = vadd.f32 0.0, %v1775
    %v1777 = vpop.f32.mrb[0].mxu0
    %1778 = vmatprep.mubr.bf16.mxu0 0
    %1779 = vmatmul.mubr.bf16.gmra.mrb[0].mxu0 %v1091
    %v1780 = vpop.f32.mrb[0].mxu0
    %v1781 = vadd.f32 0.0, %v1780
    %v1782 = vpop.f32.mrb[0].mxu0
    %v1783 = vpop.f32.mrb[0].mxu0
    %v1784 = vadd.f32 0.0, %v1783
    %v1785 = vpop.f32.mrb[0].mxu0
    %1786 = vmatprep.mubr.bf16.mxu0 0
    %1787 = vmatmul.mubr.bf16.gmra.mrb[0].mxu0 %v1094
    %v1788 = vpop.f32.mrb[0].mxu0
    %v1789 = vadd.f32 0.0, %v1788
    %v1790 = vpop.f32.mrb[0].mxu0
    %v1791 = vpop.f32.mrb[0].mxu0
    %v1792 = vadd.f32 0.0, %v1791
    %v1793 = vpop.f32.mrb[0].mxu0
    %1794 = vmatprep.mubr.bf16.mxu0 0
    %1795 = vmatmul.mubr.bf16.gmra.mrb[0].mxu0 %v1097
    %v1796 = vpop.f32.mrb[0].mxu0
    %v1797 = vadd.f32 0.0, %v1796
    %v1798 = vpop.f32.mrb[0].mxu0
    %v1799 = vpop.f32.mrb[0].mxu0
    %v1800 = vadd.f32 0.0, %v1799
    %v1801 = vpop.f32.mrb[0].mxu0
    %1802 = vmatprep.mubr.bf16.mxu0 0
    %1803 = vmatmul.mubr.bf16.gmra.mrb[0].mxu0 %v1100
    %v1804 = vpop.f32.mrb[0].mxu0
    %v1805 = vadd.f32 0.0, %v1804
    %v1806 = vpop.f32.mrb[0].mxu0
    %v1807 = vpop.f32.mrb[0].mxu0
    %v1808 = vadd.f32 0.0, %v1807
    %v1809 = vpop.f32.mrb[0].mxu0
    %1810 = vmatprep.mubr.bf16.mxu0 0
    %1811 = vmatmul.mubr.bf16.gmra.mrb[0].mxu0 %v1103
    %v1812 = vpop.f32.mrb[0].mxu0
    %v1813 = vadd.f32 0.0, %v1812
    %v1814 = vpop.f32.mrb[0].mxu0
    %v1815 = vpop.f32.mrb[0].mxu0
    %v1816 = vadd.f32 0.0, %v1815
    %v1817 = vpop.f32.mrb[0].mxu0
    %1818 = vmatprep.mubr.bf16.mxu0 0
    %1819 = vmatmul.mubr.bf16.gmra.mrb[0].mxu0 %v1106
    %v1820 = vpop.f32.mrb[0].mxu0
    %v1821 = vadd.f32 0.0, %v1820
    %v1822 = vpop.f32.mrb[0].mxu0
    %v1823 = vpop.f32.mrb[0].mxu0
    %v1824 = vadd.f32 0.0, %v1823
    %v1825 = vpop.f32.mrb[0].mxu0
    %1826 = vmatprep.mubr.bf16.mxu0 0
    %1827 = vmatmul.mubr.bf16.gmra.mrb[0].mxu0 %v1109
    %v1828 = vpop.f32.mrb[0].mxu0
    %v1829 = vadd.f32 0.0, %v1828
    %v1830 = vpop.f32.mrb[0].mxu0
    %v1831 = vpop.f32.mrb[0].mxu0
    %v1832 = vadd.f32 0.0, %v1831
    %v1833 = vpop.f32.mrb[0].mxu0
    %1834 = vmatprep.mubr.bf16.mxu0 0
    %1835 = vmatmul.mubr.bf16.gmra.mrb[0].mxu0 %v1112
    %v1836 = vpop.f32.mrb[0].mxu0
    %v1837 = vadd.f32 0.0, %v1836
    %v1838 = vpop.f32.mrb[0].mxu0
    %v1839 = vpop.f32.mrb[0].mxu0
    %v1840 = vadd.f32 0.0, %v1839
    %v1841 = vpop.f32.mrb[0].mxu0
    %1842 = vmatprep.mubr.bf16.mxu0 0
    %1843 = vmatmul.mubr.bf16.gmra.mrb[0].mxu0 %v1115
    %v1844 = vpop.f32.mrb[0].mxu0
    %v1845 = vadd.f32 0.0, %v1844
    %v1846 = vpop.f32.mrb[0].mxu0
    %v1847 = vpop.f32.mrb[0].mxu0
    %v1848 = vadd.f32 0.0, %v1847
    %v1849 = vpop.f32.mrb[0].mxu0
    %1850 = vmatprep.mubr.bf16.mxu0 0
    %1851 = vmatmul.mubr.bf16.gmra.mrb[0].mxu0 %v1118
    %v1852 = vpop.f32.mrb[0].mxu0
    %v1853 = vadd.f32 0.0, %v1852
    %v1854 = vpop.f32.mrb[0].mxu0
    %v1855 = vpop.f32.mrb[0].mxu0
    %v1856 = vadd.f32 0.0, %v1855
    %v1857 = vpop.f32.mrb[0].mxu0
    %1858 = vmatprep.mubr.bf16.mxu0 0
    %1859 = vmatmul.mubr.bf16.gmra.mrb[0].mxu0 %v1121
    %v1860 = vpop.f32.mrb[0].mxu0
    %v1861 = vadd.f32 0.0, %v1860
    %v1862 = vpop.f32.mrb[0].mxu0
    %v1863 = vpop.f32.mrb[0].mxu0
    %v1864 = vadd.f32 0.0, %v1863
    %v1865 = vpop.f32.mrb[0].mxu0
    %1866 = vmatprep.mubr.bf16.mxu0 0
    %1867 = vmatmul.mubr.bf16.gmra.mrb[0].mxu0 %v1124
    %v1868 = vpop.f32.mrb[0].mxu0
    %v1869 = vadd.f32 0.0, %v1868
    %v1870 = vpop.f32.mrb[0].mxu0
    %v1871 = vpop.f32.mrb[0].mxu0
    %v1872 = vadd.f32 0.0, %v1871
    %v1873 = vpop.f32.mrb[0].mxu0
    %1874 = vmatprep.mubr.bf16.mxu0 0
    %1875 = vmatmul.mubr.bf16.gmra.mrb[0].mxu0 %v1127
    %v1876 = vpop.f32.mrb[0].mxu0
    %v1877 = vadd.f32 0.0, %v1876
    %v1878 = vpop.f32.mrb[0].mxu0
    %v1879 = vpop.f32.mrb[0].mxu0
    %v1880 = vadd.f32 0.0, %v1879
    %v1881 = vpop.f32.mrb[0].mxu0
    %1882 = vmatprep.mubr.bf16.mxu0 0
    %1883 = vmatmul.mubr.bf16.gmra.mrb[0].mxu0 %v1130
    %v1884 = vpop.f32.mrb[0].mxu0
    %v1885 = vadd.f32 0.0, %v1884
    %v1886 = vpop.f32.mrb[0].mxu0
    %v1887 = vpop.f32.mrb[0].mxu0
    %v1888 = vadd.f32 0.0, %v1887
    %v1889 = vpop.f32.mrb[0].mxu0
    %1890 = vmatprep.mubr.bf16.mxu0 0
    %1891 = vmatmul.mubr.bf16.gmra.mrb[0].mxu0 %v1133
    %v1892 = vpop.f32.mrb[0].mxu0
    %v1893 = vadd.f32 0.0, %v1892
    %v1894 = vpop.f32.mrb[0].mxu0
    %v1895 = vpop.f32.mrb[0].mxu0
    %v1896 = vadd.f32 0.0, %v1895
    %v1897 = vpop.f32.mrb[0].mxu0
    %1898 = vmatprep.mubr.bf16.mxu0 0
    %1899 = vmatmul.mubr.bf16.gmra.mrb[0].mxu0 %v1136
    %v1900 = vpop.f32.mrb[0].mxu0
    %v1901 = vadd.f32 0.0, %v1900
    %v1902 = vpop.f32.mrb[0].mxu0
    %v1903 = vpop.f32.mrb[0].mxu0
    %v1904 = vadd.f32 0.0, %v1903
    %v1905 = vpop.f32.mrb[0].mxu0
    %1906 = vmatprep.mubr.bf16.mxu0 0
    %1907 = vmatmul.mubr.bf16.gmra.mrb[0].mxu0 %v1139
    %v1908 = vpop.f32.mrb[0].mxu0
    %v1909 = vadd.f32 0.0, %v1908
    %v1910 = vpop.f32.mrb[0].mxu0
    %v1911 = vpop.f32.mrb[0].mxu0
    %v1912 = vadd.f32 0.0, %v1911
    %v1913 = vpop.f32.mrb[0].mxu0
    %1914 = vmatprep.mubr.bf16.mxu0 0
    %1915 = vmatmul.mubr.bf16.gmra.mrb[0].mxu0 %v1142
    %v1916 = vpop.f32.mrb[0].mxu0
    %v1917 = vadd.f32 0.0, %v1916
    %v1918 = vpop.f32.mrb[0].mxu0
    %v1919 = vpop.f32.mrb[0].mxu0
    %v1920 = vadd.f32 0.0, %v1919
    %v1921 = vpop.f32.mrb[0].mxu0
    %1922 = vmatprep.mubr.bf16.mxu0 0
    %1923 = vmatmul.mubr.bf16.gmra.mrb[0].mxu0 %v1145
    %v1924 = vpop.f32.mrb[0].mxu0
    %v1925 = vadd.f32 0.0, %v1924
    %v1926 = vpop.f32.mrb[0].mxu0
    %v1927 = vpop.f32.mrb[0].mxu0
    %v1928 = vadd.f32 0.0, %v1927
    %v1929 = vpop.f32.mrb[0].mxu0
    %1930 = vmatprep.mubr.bf16.mxu0 0
    %1931 = vmatmul.mubr.bf16.gmra.mrb[0].mxu0 %v1148
    %v1932 = vpop.f32.mrb[0].mxu0
    %v1933 = vadd.f32 0.0, %v1932
    %v1934 = vpop.f32.mrb[0].mxu0
    %v1935 = vpop.f32.mrb[0].mxu0
    %v1936 = vadd.f32 0.0, %v1935
    %v1937 = vpop.f32.mrb[0].mxu0
    %1938 = vmatprep.mubr.bf16.mxu0 0
    %1939 = vmatmul.mubr.bf16.gmra.mrb[0].mxu0 %v1151
    %v1940 = vpop.f32.mrb[0].mxu0
    %v1941 = vadd.f32 0.0, %v1940
    %v1942 = vpop.f32.mrb[0].mxu0
    %v1943 = vpop.f32.mrb[0].mxu0
    %v1944 = vadd.f32 0.0, %v1943
    %v1945 = vpop.f32.mrb[0].mxu0
    %1946 = vmatprep.mubr.bf16.mxu0 0
    %1947 = vmatmul.mubr.bf16.gmra.mrb[0].mxu0 %v1154
    %v1948 = vpop.f32.mrb[0].mxu0
    %v1949 = vadd.f32 0.0, %v1948
    %v1950 = vpop.f32.mrb[0].mxu0
    %v1951 = vpop.f32.mrb[0].mxu0
    %v1952 = vadd.f32 0.0, %v1951
    %v1953 = vpop.f32.mrb[0].mxu0
    %1954 = vmatprep.mubr.bf16.mxu0 0
    %1955 = vmatmul.mubr.bf16.gmra.mrb[0].mxu0 %v1157
    %v1956 = vpop.f32.mrb[0].mxu0
    %v1957 = vadd.f32 0.0, %v1956
    %v1958 = vpop.f32.mrb[0].mxu0
    %v1959 = vpop.f32.mrb[0].mxu0
    %v1960 = vadd.f32 0.0, %v1959
    %v1961 = vpop.f32.mrb[0].mxu0
    %1962 = vmatprep.mubr.bf16.mxu0 0
    %1963 = vmatmul.mubr.bf16.gmra.mrb[0].mxu0 %v1160
    %v1964 = vpop.f32.mrb[0].mxu0
    %v1965 = vadd.f32 0.0, %v1964
    %v1966 = vpop.f32.mrb[0].mxu0
    %v1967 = vpop.f32.mrb[0].mxu0
    %v1968 = vadd.f32 0.0, %v1967
    %v1969 = vpop.f32.mrb[0].mxu0
    %1970 = vmatprep.mubr.bf16.mxu0 0
    %1971 = vmatmul.mubr.bf16.gmra.mrb[0].mxu0 %v1163
    %v1972 = vpop.f32.mrb[0].mxu0
    %v1973 = vadd.f32 0.0, %v1972
    %v1974 = vpop.f32.mrb[0].mxu0
    %v1975 = vpop.f32.mrb[0].mxu0
    %v1976 = vadd.f32 0.0, %v1975
    %v1977 = vpop.f32.mrb[0].mxu0
    %1978 = vmatprep.mubr.bf16.mxu0 0
    %1979 = vmatmul.mubr.bf16.gmra.mrb[0].mxu0 %v1166
    %v1980 = vpop.f32.mrb[0].mxu0
    %v1981 = vadd.f32 0.0, %v1980
    %v1982 = vpop.f32.mrb[0].mxu0
    %v1983 = vpop.f32.mrb[0].mxu0
    %v1984 = vadd.f32 0.0, %v1983
    %v1985 = vpop.f32.mrb[0].mxu0
    %1986 = vmatprep.mubr.bf16.mxu0 0
    %1987 = vmatmul.mubr.bf16.gmra.mrb[0].mxu0 %v1169
    %v1988 = vpop.f32.mrb[0].mxu0
    %v1989 = vadd.f32 0.0, %v1988
    %v1990 = vpop.f32.mrb[0].mxu0
    %v1991 = vpop.f32.mrb[0].mxu0
    %v1992 = vadd.f32 0.0, %v1991
    %v1993 = vpop.f32.mrb[0].mxu0
    %1994 = vmatprep.mubr.bf16.mxu0 0
    %1995 = vmatmul.mubr.bf16.gmra.mrb[0].mxu0 %v1172
    %v1996 = vpop.f32.mrb[0].mxu0
    %v1997 = vadd.f32 0.0, %v1996
    %v1998 = vpop.f32.mrb[0].mxu0
    %v1999 = vpop.f32.mrb[0].mxu0
    %v2000 = vadd.f32 0.0, %v1999
    %v2001 = vpop.f32.mrb[0].mxu0
    %2002 = vmatprep.mubr.bf16.mxu0 0
    %2003 = vmatmul.mubr.bf16.gmra.mrb[0].mxu0 %v1175
    %v2004 = vpop.f32.mrb[0].mxu0
    %v2005 = vadd.f32 0.0, %v2004
    %v2006 = vpop.f32.mrb[0].mxu0
    %v2007 = vpop.f32.mrb[0].mxu0
    %v2008 = vadd.f32 0.0, %v2007
    %v2009 = vpop.f32.mrb[0].mxu0
    %2010 = vmatprep.mubr.bf16.mxu0 0
    %2011 = vmatmul.mubr.bf16.gmra.mrb[0].mxu0 %v1178
    %v2012 = vpop.f32.mrb[0].mxu0
    %v2013 = vadd.f32 0.0, %v2012
    %v2014 = vpop.f32.mrb[0].mxu0
    %v2015 = vpop.f32.mrb[0].mxu0
    %v2016 = vadd.f32 0.0, %v2015
    %v2017 = vpop.f32.mrb[0].mxu0
    %2018 = vmatprep.mubr.bf16.mxu0 0
    %2019 = vmatmul.mubr.bf16.gmra.mrb[0].mxu0 %v1181
    %v2020 = vpop.f32.mrb[0].mxu0
    %v2021 = vadd.f32 0.0, %v2020
    %v2022 = vpop.f32.mrb[0].mxu0
    %v2023 = vpop.f32.mrb[0].mxu0
    %v2024 = vadd.f32 0.0, %v2023
    %v2025 = vpop.f32.mrb[0].mxu0
    %2026 = vmatprep.mubr.bf16.mxu0 0
    %2027 = vmatmul.mubr.bf16.gmra.mrb[0].mxu0 %v1184
    %v2028 = vpop.f32.mrb[0].mxu0
    %v2029 = vadd.f32 0.0, %v2028
    %v2030 = vpop.f32.mrb[0].mxu0
    %v2031 = vpop.f32.mrb[0].mxu0
    %v2032 = vadd.f32 0.0, %v2031
    %v2033 = vpop.f32.mrb[0].mxu0
    %2034 = vmatprep.mubr.bf16.mxu0 0
    %2035 = vmatmul.mubr.bf16.gmra.mrb[0].mxu0 %v1187
    %v2036 = vpop.f32.mrb[0].mxu0
    %v2037 = vadd.f32 0.0, %v2036
    %v2038 = vpop.f32.mrb[0].mxu0
    %v2039 = vpop.f32.mrb[0].mxu0
    %v2040 = vadd.f32 0.0, %v2039
    %v2041 = vpop.f32.mrb[0].mxu0
    %2042 = vmatprep.mubr.bf16.mxu0 0
    %2043 = vmatmul.mubr.bf16.gmra.mrb[0].mxu0 %v1190
    %v2044 = vpop.f32.mrb[0].mxu0
    %v2045 = vadd.f32 0.0, %v2044
    %v2046 = vpop.f32.mrb[0].mxu0
    %v2047 = vpop.f32.mrb[0].mxu0
    %v2048 = vadd.f32 0.0, %v2047
    %v2049 = vpop.f32.mrb[0].mxu0
    %2050 = vmatprep.mubr.bf16.mxu0 0
    %2051 = vmatmul.mubr.bf16.gmra.mrb[0].mxu0 %v1193
    %v2052 = vpop.f32.mrb[0].mxu0
    %v2053 = vadd.f32 0.0, %v2052
    %v2054 = vpop.f32.mrb[0].mxu0
    %v2055 = vpop.f32.mrb[0].mxu0
    %v2056 = vadd.f32 0.0, %v2055
    %v2057 = vpop.f32.mrb[0].mxu0
    %2058 = vmatprep.mubr.bf16.mxu0 0
    %2059 = vmatmul.mubr.bf16.gmra.mrb[0].mxu0 %v1196
    %v2060 = vpop.f32.mrb[0].mxu0
    %v2061 = vadd.f32 0.0, %v2060
    %v2062 = vpop.f32.mrb[0].mxu0
    %v2063 = vpop.f32.mrb[0].mxu0
    %v2064 = vadd.f32 0.0, %v2063
    %v2065 = vpop.f32.mrb[0].mxu0
    %2066 = vmatprep.mubr.bf16.mxu0 0
    %2067 = vmatmul.mubr.bf16.gmra.mrb[0].mxu0 %v1199
    %v2068 = vpop.f32.mrb[0].mxu0
    %v2069 = vadd.f32 0.0, %v2068
    %v2070 = vpop.f32.mrb[0].mxu0
    %v2071 = vpop.f32.mrb[0].mxu0
    %v2072 = vadd.f32 0.0, %v2071
    %v2073 = vpop.f32.mrb[0].mxu0
    %2074 = vmatprep.mubr.bf16.mxu0 0
    %2075 = vmatmul.mubr.bf16.gmra.mrb[0].mxu0 %v1202
    %v2076 = vpop.f32.mrb[0].mxu0
    %v2077 = vadd.f32 0.0, %v2076
    %v2078 = vpop.f32.mrb[0].mxu0
    %v2079 = vpop.f32.mrb[0].mxu0
    %v2080 = vadd.f32 0.0, %v2079
    %v2081 = vpop.f32.mrb[0].mxu0
    %2082 = vmatprep.mubr.bf16.mxu0 0
    %2083 = vmatmul.mubr.bf16.gmra.mrb[0].mxu0 %v1205
    %v2084 = vpop.f32.mrb[0].mxu0
    %v2085 = vadd.f32 0.0, %v2084
    %v2086 = vpop.f32.mrb[0].mxu0
    %v2087 = vpop.f32.mrb[0].mxu0
    %v2088 = vadd.f32 0.0, %v2087
    %v2089 = vpop.f32.mrb[0].mxu0
    %2090 = vmatprep.mubr.bf16.mxu0 0
    %2091 = vmatmul.mubr.bf16.gmra.mrb[0].mxu0 %v1208
    %v2092 = vpop.f32.mrb[0].mxu0
    %v2093 = vadd.f32 0.0, %v2092
    %v2094 = vpop.f32.mrb[0].mxu0
    %v2095 = vpop.f32.mrb[0].mxu0
    %v2096 = vadd.f32 0.0, %v2095
    %v2097 = vpop.f32.mrb[0].mxu0
    %2098 = vmatprep.mubr.bf16.mxu0 0
    %2099 = vmatmul.mubr.bf16.gmra.mrb[0].mxu0 %v1211
    %v2100 = vpop.f32.mrb[0].mxu0
    %v2101 = vadd.f32 0.0, %v2100
    %v2102 = vpop.f32.mrb[0].mxu0
    %v2103 = vpop.f32.mrb[0].mxu0
    %v2104 = vadd.f32 0.0, %v2103
    %v2105 = vpop.f32.mrb[0].mxu0
    %2106 = vmatprep.mubr.bf16.mxu0 0
    %2107 = vmatmul.mubr.bf16.gmra.mrb[0].mxu0 %v1214
    %v2108 = vpop.f32.mrb[0].mxu0
    %v2109 = vadd.f32 0.0, %v2108
    %v2110 = vpop.f32.mrb[0].mxu0
    %v2111 = vpop.f32.mrb[0].mxu0
    %v2112 = vadd.f32 0.0, %v2111
    %v2113 = vpop.f32.mrb[0].mxu0
    %2114 = vmatprep.mubr.bf16.mxu0 0
    %2115 = vmatmul.mubr.bf16.gmra.mrb[0].mxu0 %v1217
    %v2116 = vpop.f32.mrb[0].mxu0
    %v2117 = vadd.f32 0.0, %v2116
    %v2118 = vpop.f32.mrb[0].mxu0
    %v2119 = vpop.f32.mrb[0].mxu0
    %v2120 = vadd.f32 0.0, %v2119
    %v2121 = vpop.f32.mrb[0].mxu0
    %2122 = vmatprep.mubr.bf16.mxu0 0
    %2123 = vmatmul.mubr.bf16.gmra.mrb[0].mxu0 %v1220
    %v2124 = vpop.f32.mrb[0].mxu0
    %v2125 = vadd.f32 0.0, %v2124
    %v2126 = vpop.f32.mrb[0].mxu0
    %v2127 = vpop.f32.mrb[0].mxu0
    %v2128 = vadd.f32 0.0, %v2127
    %v2129 = vpop.f32.mrb[0].mxu0
    %2130 = vmatprep.mubr.bf16.mxu0 0
    %2131 = vmatmul.mubr.bf16.gmra.mrb[0].mxu0 %v1223
    %v2132 = vpop.f32.mrb[0].mxu0
    %v2133 = vadd.f32 0.0, %v2132
    %v2134 = vpop.f32.mrb[0].mxu0
    %v2135 = vpop.f32.mrb[0].mxu0
    %v2136 = vadd.f32 0.0, %v2135
    %v2137 = vpop.f32.mrb[0].mxu0
    %2138 = vmatprep.mubr.bf16.mxu0 0
    %2139 = vmatmul.mubr.bf16.gmra.mrb[0].mxu0 %v1226
    %v2140 = vpop.f32.mrb[0].mxu0
    %v2141 = vadd.f32 0.0, %v2140
    %v2142 = vpop.f32.mrb[0].mxu0
    %v2143 = vpop.f32.mrb[0].mxu0
    %v2144 = vadd.f32 0.0, %v2143
    %v2145 = vpop.f32.mrb[0].mxu0
    %2146 = vmatprep.mubr.bf16.mxu0 0
    %2147 = vmatmul.mubr.bf16.gmra.mrb[0].mxu0 %v1229
    %v2148 = vpop.f32.mrb[0].mxu0
    %v2149 = vadd.f32 0.0, %v2148
    %v2150 = vpop.f32.mrb[0].mxu0
    %v2151 = vpop.f32.mrb[0].mxu0
    %v2152 = vadd.f32 0.0, %v2151
    %v2153 = vpop.f32.mrb[0].mxu0
    %2154 = vmatprep.mubr.bf16.mxu0 0
    %2155 = vmatmul.mubr.bf16.gmra.mrb[0].mxu0 %v1232
    %v2156 = vpop.f32.mrb[0].mxu0
    %v2157 = vadd.f32 0.0, %v2156
    %v2158 = vpop.f32.mrb[0].mxu0
    %v2159 = vpop.f32.mrb[0].mxu0
    %v2160 = vadd.f32 0.0, %v2159
    %v2161 = vpop.f32.mrb[0].mxu0
    %2162 = vmatprep.mubr.bf16.mxu0 0
    %2163 = vmatmul.mubr.bf16.gmra.mrb[0].mxu0 %v1235
    %v2164 = vpop.f32.mrb[0].mxu0
    %v2165 = vadd.f32 0.0, %v2164
    %v2166 = vpop.f32.mrb[0].mxu0
    %v2167 = vpop.f32.mrb[0].mxu0
    %v2168 = vadd.f32 0.0, %v2167
    %v2169 = vpop.f32.mrb[0].mxu0
    %2170 = vmatprep.mubr.bf16.mxu0 0
    %2171 = vmatmul.mubr.bf16.gmra.mrb[0].mxu0 %v1238
    %v2172 = vpop.f32.mrb[0].mxu0
    %v2173 = vadd.f32 0.0, %v2172
    %v2174 = vpop.f32.mrb[0].mxu0
    %v2175 = vpop.f32.mrb[0].mxu0
    %v2176 = vadd.f32 0.0, %v2175
    %v2177 = vpop.f32.mrb[0].mxu0
    %2178 = vmatprep.mubr.bf16.mxu0 0
    %2179 = vmatmul.mubr.bf16.gmra.mrb[0].mxu0 %v1241
    %v2180 = vpop.f32.mrb[0].mxu0
    %v2181 = vadd.f32 0.0, %v2180
    %v2182 = vpop.f32.mrb[0].mxu0
    %v2183 = vpop.f32.mrb[0].mxu0
    %v2184 = vadd.f32 0.0, %v2183
    %v2185 = vpop.f32.mrb[0].mxu0
    %2186 = vmatprep.mubr.bf16.mxu0 0
    %2187 = vmatmul.mubr.bf16.gmra.mrb[0].mxu0 %v1244
    %v2188 = vpop.f32.mrb[0].mxu0
    %v2189 = vadd.f32 0.0, %v2188
    %v2190 = vpop.f32.mrb[0].mxu0
    %v2191 = vpop.f32.mrb[0].mxu0
    %v2192 = vadd.f32 0.0, %v2191
    %v2193 = vpop.f32.mrb[0].mxu0
    %2194 = vmatprep.mubr.bf16.mxu0 0
    %2195 = vmatmul.mubr.bf16.gmra.mrb[0].mxu0 %v1247
    %v2196 = vpop.f32.mrb[0].mxu0
    %v2197 = vadd.f32 0.0, %v2196
    %v2198 = vpop.f32.mrb[0].mxu0
    %v2199 = vpop.f32.mrb[0].mxu0
    %v2200 = vadd.f32 0.0, %v2199
    %v2201 = vpop.f32.mrb[0].mxu0
    %2202 = vmatprep.mubr.bf16.mxu0 0
    %2203 = vmatmul.mubr.bf16.gmra.mrb[0].mxu0 %v1250
    %v2204 = vpop.f32.mrb[0].mxu0
    %v2205 = vadd.f32 0.0, %v2204
    %v2206 = vpop.f32.mrb[0].mxu0
    %v2207 = vpop.f32.mrb[0].mxu0
    %v2208 = vadd.f32 0.0, %v2207
    %v2209 = vpop.f32.mrb[0].mxu0
    %2210 = vmatprep.mubr.bf16.mxu0 0
    %2211 = vmatmul.mubr.bf16.gmra.mrb[0].mxu0 %v1253
    %v2212 = vpop.f32.mrb[0].mxu0
    %v2213 = vadd.f32 0.0, %v2212
    %v2214 = vpop.f32.mrb[0].mxu0
    %v2215 = vpop.f32.mrb[0].mxu0
    %v2216 = vadd.f32 0.0, %v2215
    %v2217 = vpop.f32.mrb[0].mxu0
    %2218 = vmatprep.mubr.bf16.mxu0 0
    %2219 = vmatmul.mubr.bf16.gmra.mrb[0].mxu0 %v1256
    %v2220 = vpop.f32.mrb[0].mxu0
    %v2221 = vadd.f32 0.0, %v2220
    %v2222 = vpop.f32.mrb[0].mxu0
    %v2223 = vpop.f32.mrb[0].mxu0
    %v2224 = vadd.f32 0.0, %v2223
    %v2225 = vpop.f32.mrb[0].mxu0
    %2226 = vmatprep.mubr.bf16.mxu0 0
    %2227 = vmatmul.mubr.bf16.gmra.mrb[0].mxu0 %v1259
    %v2228 = vpop.f32.mrb[0].mxu0
    %v2229 = vadd.f32 0.0, %v2228
    %v2230 = vpop.f32.mrb[0].mxu0
    %v2231 = vpop.f32.mrb[0].mxu0
    %v2232 = vadd.f32 0.0, %v2231
    %v2233 = vpop.f32.mrb[0].mxu0
    %2234 = vmatprep.mubr.bf16.mxu0 0
    %2235 = vmatmul.mubr.bf16.gmra.mrb[0].mxu0 %v1262
    %v2236 = vpop.f32.mrb[0].mxu0
    %v2237 = vadd.f32 0.0, %v2236
    %v2238 = vpop.f32.mrb[0].mxu0
    %v2239 = vpop.f32.mrb[0].mxu0
    %v2240 = vadd.f32 0.0, %v2239
    %v2241 = vpop.f32.mrb[0].mxu0
    %2242 = vmatprep.mubr.bf16.mxu0 0
    %2243 = vmatmul.mubr.bf16.gmra.mrb[0].mxu0 %v1265
    %v2244 = vpop.f32.mrb[0].mxu0
    %v2245 = vadd.f32 0.0, %v2244
    %v2246 = vpop.f32.mrb[0].mxu0
    %v2247 = vpop.f32.mrb[0].mxu0
    %v2248 = vadd.f32 0.0, %v2247
    %v2249 = vpop.f32.mrb[0].mxu0
    %2250 = vmatprep.mubr.bf16.mxu0 0
    %2251 = vmatmul.mubr.bf16.gmra.mrb[0].mxu0 %v1268
    %v2252 = vpop.f32.mrb[0].mxu0
    %v2253 = vadd.f32 0.0, %v2252
    %v2254 = vpop.f32.mrb[0].mxu0
    %v2255 = vpop.f32.mrb[0].mxu0
    %v2256 = vadd.f32 0.0, %v2255
    %v2257 = vpop.f32.mrb[0].mxu0
    %2258 = vmatprep.mubr.bf16.mxu0 0
    %2259 = vmatmul.mubr.bf16.gmra.mrb[0].mxu0 %v1271
    %v2260 = vpop.f32.mrb[0].mxu0
    %v2261 = vadd.f32 0.0, %v2260
    %v2262 = vpop.f32.mrb[0].mxu0
    %v2263 = vpop.f32.mrb[0].mxu0
    %v2264 = vadd.f32 0.0, %v2263
    %v2265 = vpop.f32.mrb[0].mxu0
    %2266 = vmatprep.mubr.bf16.mxu0 0
    %2267 = vmatmul.mubr.bf16.gmra.mrb[0].mxu0 %v1274
    %v2268 = vpop.f32.mrb[0].mxu0
    %v2269 = vadd.f32 0.0, %v2268
    %v2270 = vpop.f32.mrb[0].mxu0
    %v2271 = vpop.f32.mrb[0].mxu0
    %v2272 = vadd.f32 0.0, %v2271
    %v2273 = vpop.f32.mrb[0].mxu0
    %2274 = vmatprep.mubr.bf16.mxu0 0
    %2275 = vmatmul.mubr.bf16.gmra.mrb[0].mxu0 %v1277
    %v2276 = vpop.f32.mrb[0].mxu0
    %v2277 = vadd.f32 0.0, %v2276
    %v2278 = vpop.f32.mrb[0].mxu0
    %v2279 = vpop.f32.mrb[0].mxu0
    %v2280 = vadd.f32 0.0, %v2279
    %v2281 = vpop.f32.mrb[0].mxu0
    %2282 = vmatprep.mubr.bf16.mxu0 0
    %2283 = vmatmul.mubr.bf16.gmra.mrb[0].mxu0 %v1280
    %v2284 = vpop.f32.mrb[0].mxu0
    %v2285 = vadd.f32 0.0, %v2284
    %v2286 = vpop.f32.mrb[0].mxu0
    %v2287 = vpop.f32.mrb[0].mxu0
    %v2288 = vadd.f32 0.0, %v2287
    %v2289 = vpop.f32.mrb[0].mxu0
    %2290 = vmatprep.mubr.bf16.mxu0 0
    %2291 = vmatmul.mubr.bf16.gmra.mrb[0].mxu0 %v1283
    %v2292 = vpop.f32.mrb[0].mxu0
    %v2293 = vadd.f32 0.0, %v2292
    %v2294 = vpop.f32.mrb[0].mxu0
    %v2295 = vpop.f32.mrb[0].mxu0
    %v2296 = vadd.f32 0.0, %v2295
    %v2297 = vpop.f32.mrb[0].mxu0
    %2298 = vmatprep.mubr.bf16.mxu0 0
    %2299 = vmatmul.mubr.bf16.gmra.mrb[0].mxu0 %v1286
    %v2300 = vpop.f32.mrb[0].mxu0
    %v2301 = vadd.f32 0.0, %v2300
    %v2302 = vpop.f32.mrb[0].mxu0
    %v2303 = vpop.f32.mrb[0].mxu0
    %v2304 = vadd.f32 0.0, %v2303
    %v2305 = vpop.f32.mrb[0].mxu0
    %2306 = vmatprep.mubr.bf16.mxu0 0
    %2307 = vmatmul.mubr.bf16.gmra.mrb[0].mxu0 %v1289
    %v2308 = vpop.f32.mrb[0].mxu0
    %v2309 = vadd.f32 0.0, %v2308
    %v2310 = vpop.f32.mrb[0].mxu0
    %v2311 = vpop.f32.mrb[0].mxu0
    %v2312 = vadd.f32 0.0, %v2311
    %v2313 = vpop.f32.mrb[0].mxu0
    %2314 = vmatprep.mubr.bf16.mxu0 0
    %2315 = vmatmul.mubr.bf16.gmra.mrb[0].mxu0 %v1292
    %v2316 = vpop.f32.mrb[0].mxu0
    %v2317 = vadd.f32 0.0, %v2316
    %v2318 = vpop.f32.mrb[0].mxu0
    %v2319 = vpop.f32.mrb[0].mxu0
    %v2320 = vadd.f32 0.0, %v2319
    %v2321 = vpop.f32.mrb[0].mxu0
    %2322 = vmatprep.mubr.bf16.mxu0 0
    %2323 = vmatmul.mubr.bf16.gmra.mrb[0].mxu0 %v1295
    %v2324 = vpop.f32.mrb[0].mxu0
    %v2325 = vadd.f32 0.0, %v2324
    %v2326 = vpop.f32.mrb[0].mxu0
    %v2327 = vpop.f32.mrb[0].mxu0
    %v2328 = vadd.f32 0.0, %v2327
    %v2329 = vpop.f32.mrb[0].mxu0
    %2330 = vmatprep.mubr.bf16.mxu0 0
    %2331 = vmatmul.mubr.bf16.gmra.mrb[0].mxu0 %v1298
    %v2332 = vpop.f32.mrb[0].mxu0
    %v2333 = vadd.f32 0.0, %v2332
    %v2334 = vpop.f32.mrb[0].mxu0
    %v2335 = vpop.f32.mrb[0].mxu0
    %v2336 = vadd.f32 0.0, %v2335
    %v2337 = vpop.f32.mrb[0].mxu0
    %2338 = vmatprep.mubr.bf16.mxu0 0
    %2339 = vmatmul.mubr.bf16.gmra.mrb[0].mxu0 %v1301
    %v2340 = vpop.f32.mrb[0].mxu0
    %v2341 = vadd.f32 0.0, %v2340
    %v2342 = vpop.f32.mrb[0].mxu0
    %v2343 = vpop.f32.mrb[0].mxu0
    %v2344 = vadd.f32 0.0, %v2343
    %v2345 = vpop.f32.mrb[0].mxu0
    %2346 = vmatprep.mubr.bf16.mxu0 0
    %2347 = vmatmul.mubr.bf16.gmra.mrb[0].mxu0 %v1304
    %v2348 = vpop.f32.mrb[0].mxu0
    %v2349 = vadd.f32 0.0, %v2348
    %v2350 = vpop.f32.mrb[0].mxu0
    %v2351 = vpop.f32.mrb[0].mxu0
    %v2352 = vadd.f32 0.0, %v2351
    %v2353 = vpop.f32.mrb[0].mxu0
    %2354 = vmatprep.mubr.bf16.mxu0 0
    %2355 = vmatmul.mubr.bf16.gmra.mrb[0].mxu0 %v1307
    %v2356 = vpop.f32.mrb[0].mxu0
    %v2357 = vadd.f32 0.0, %v2356
    %v2358 = vpop.f32.mrb[0].mxu0
    %v2359 = vpop.f32.mrb[0].mxu0
    %v2360 = vadd.f32 0.0, %v2359
    %v2361 = vpop.f32.mrb[0].mxu0
    %2362 = vmatprep.mubr.bf16.mxu0 0
    %2363 = vmatmul.mubr.bf16.gmra.mrb[0].mxu0 %v1310
    %v2364 = vpop.f32.mrb[0].mxu0
    %v2365 = vadd.f32 0.0, %v2364
    %v2366 = vpop.f32.mrb[0].mxu0
    %v2367 = vpop.f32.mrb[0].mxu0
    %v2368 = vadd.f32 0.0, %v2367
    %v2369 = vpop.f32.mrb[0].mxu0
    %2370 = vmatprep.mubr.bf16.mxu0 0
    %2371 = vmatmul.mubr.bf16.gmra.mrb[0].mxu0 %v1313
    %v2372 = vpop.f32.mrb[0].mxu0
    %v2373 = vadd.f32 0.0, %v2372
    %v2374 = vpop.f32.mrb[0].mxu0
    %v2375 = vpop.f32.mrb[0].mxu0
    %v2376 = vadd.f32 0.0, %v2375
    %v2377 = vpop.f32.mrb[0].mxu0
    %2378 = vdwg.mxu0
    %v2379 = vld [vmem:[%s2] sm:$0x1]
    %v2381 = vlaneseq
    %v2382 = vshrl.u32 %v2381, 7
    %v2383 = vsub.s32 0, %v2382
    %v2384 = vrot.slane %v2379, %v2383
    %v2386 = vmul.f32 %v1357, %v2384
    %v2387 = vmul.f32 %v1360, %v2384
    %v2388 = vmul.f32 %v1365, %v2384
    %v2389 = vmul.f32 %v1368, %v2384
    %v2390 = vmul.f32 %v1373, %v2384
    %v2391 = vmul.f32 %v1376, %v2384
    %v2392 = vmul.f32 %v1381, %v2384
    %v2393 = vmul.f32 %v1384, %v2384
    %v2394 = vmul.f32 %v1389, %v2384
    %v2395 = vmul.f32 %v1392, %v2384
    %v2396 = vmul.f32 %v1397, %v2384
    %v2397 = vmul.f32 %v1400, %v2384
    %v2398 = vmul.f32 %v1405, %v2384
    %v2399 = vmul.f32 %v1408, %v2384
    %v2400 = vmul.f32 %v1413, %v2384
    %v2401 = vmul.f32 %v1416, %v2384
    %v2402 = vmul.f32 %v1421, %v2384
    %v2403 = vmul.f32 %v1424, %v2384
    %v2404 = vmul.f32 %v1429, %v2384
    %v2405 = vmul.f32 %v1432, %v2384
    %v2406 = vmul.f32 %v1437, %v2384
    %v2407 = vmul.f32 %v1440, %v2384
    %v2408 = vmul.f32 %v1445, %v2384
    %v2409 = vmul.f32 %v1448, %v2384
    %v2410 = vmul.f32 %v1453, %v2384
    %v2411 = vmul.f32 %v1456, %v2384
    %v2412 = vmul.f32 %v1461, %v2384
    %v2413 = vmul.f32 %v1464, %v2384
    %v2414 = vmul.f32 %v1469, %v2384
    %v2415 = vmul.f32 %v1472, %v2384
    %v2416 = vmul.f32 %v1477, %v2384
    %v2417 = vmul.f32 %v1480, %v2384
    %v2418 = vmul.f32 %v1485, %v2384
    %v2419 = vmul.f32 %v1488, %v2384
    %v2420 = vmul.f32 %v1493, %v2384
    %v2421 = vmul.f32 %v1496, %v2384
    %v2422 = vmul.f32 %v1501, %v2384
    %v2423 = vmul.f32 %v1504, %v2384
    %v2424 = vmul.f32 %v1509, %v2384
    %v2425 = vmul.f32 %v1512, %v2384
    %v2426 = vmul.f32 %v1517, %v2384
    %v2427 = vmul.f32 %v1520, %v2384
    %v2428 = vmul.f32 %v1525, %v2384
    %v2429 = vmul.f32 %v1528, %v2384
    %v2430 = vmul.f32 %v1533, %v2384
    %v2431 = vmul.f32 %v1536, %v2384
    %v2432 = vmul.f32 %v1541, %v2384
    %v2433 = vmul.f32 %v1544, %v2384
    %v2434 = vmul.f32 %v1549, %v2384
    %v2435 = vmul.f32 %v1552, %v2384
    %v2436 = vmul.f32 %v1557, %v2384
    %v2437 = vmul.f32 %v1560, %v2384
    %v2438 = vmul.f32 %v1565, %v2384
    %v2439 = vmul.f32 %v1568, %v2384
    %v2440 = vmul.f32 %v1573, %v2384
    %v2441 = vmul.f32 %v1576, %v2384
    %v2442 = vmul.f32 %v1581, %v2384
    %v2443 = vmul.f32 %v1584, %v2384
    %v2444 = vmul.f32 %v1589, %v2384
    %v2445 = vmul.f32 %v1592, %v2384
    %v2446 = vmul.f32 %v1597, %v2384
    %v2447 = vmul.f32 %v1600, %v2384
    %v2448 = vmul.f32 %v1605, %v2384
    %v2449 = vmul.f32 %v1608, %v2384
    %v2450 = vmul.f32 %v1613, %v2384
    %v2451 = vmul.f32 %v1616, %v2384
    %v2452 = vmul.f32 %v1621, %v2384
    %v2453 = vmul.f32 %v1624, %v2384
    %v2454 = vmul.f32 %v1629, %v2384
    %v2455 = vmul.f32 %v1632, %v2384
    %v2456 = vmul.f32 %v1637, %v2384
    %v2457 = vmul.f32 %v1640, %v2384
    %v2458 = vmul.f32 %v1645, %v2384
    %v2459 = vmul.f32 %v1648, %v2384
    %v2460 = vmul.f32 %v1653, %v2384
    %v2461 = vmul.f32 %v1656, %v2384
    %v2462 = vmul.f32 %v1661, %v2384
    %v2463 = vmul.f32 %v1664, %v2384
    %v2464 = vmul.f32 %v1669, %v2384
    %v2465 = vmul.f32 %v1672, %v2384
    %v2466 = vmul.f32 %v1677, %v2384
    %v2467 = vmul.f32 %v1680, %v2384
    %v2468 = vmul.f32 %v1685, %v2384
    %v2469 = vmul.f32 %v1688, %v2384
    %v2470 = vmul.f32 %v1693, %v2384
    %v2471 = vmul.f32 %v1696, %v2384
    %v2472 = vmul.f32 %v1701, %v2384
    %v2473 = vmul.f32 %v1704, %v2384
    %v2474 = vmul.f32 %v1709, %v2384
    %v2475 = vmul.f32 %v1712, %v2384
    %v2476 = vmul.f32 %v1717, %v2384
    %v2477 = vmul.f32 %v1720, %v2384
    %v2478 = vmul.f32 %v1725, %v2384
    %v2479 = vmul.f32 %v1728, %v2384
    %v2480 = vmul.f32 %v1733, %v2384
    %v2481 = vmul.f32 %v1736, %v2384
    %v2482 = vmul.f32 %v1741, %v2384
    %v2483 = vmul.f32 %v1744, %v2384
    %v2484 = vmul.f32 %v1749, %v2384
    %v2485 = vmul.f32 %v1752, %v2384
    %v2486 = vmul.f32 %v1757, %v2384
    %v2487 = vmul.f32 %v1760, %v2384
    %v2488 = vmul.f32 %v1765, %v2384
    %v2489 = vmul.f32 %v1768, %v2384
    %v2490 = vmul.f32 %v1773, %v2384
    %v2491 = vmul.f32 %v1776, %v2384
    %v2492 = vmul.f32 %v1781, %v2384
    %v2493 = vmul.f32 %v1784, %v2384
    %v2494 = vmul.f32 %v1789, %v2384
    %v2495 = vmul.f32 %v1792, %v2384
    %v2496 = vmul.f32 %v1797, %v2384
    %v2497 = vmul.f32 %v1800, %v2384
    %v2498 = vmul.f32 %v1805, %v2384
    %v2499 = vmul.f32 %v1808, %v2384
    %v2500 = vmul.f32 %v1813, %v2384
    %v2501 = vmul.f32 %v1816, %v2384
    %v2502 = vmul.f32 %v1821, %v2384
    %v2503 = vmul.f32 %v1824, %v2384
    %v2504 = vmul.f32 %v1829, %v2384
    %v2505 = vmul.f32 %v1832, %v2384
    %v2506 = vmul.f32 %v1837, %v2384
    %v2507 = vmul.f32 %v1840, %v2384
    %v2508 = vmul.f32 %v1845, %v2384
    %v2509 = vmul.f32 %v1848, %v2384
    %v2510 = vmul.f32 %v1853, %v2384
    %v2511 = vmul.f32 %v1856, %v2384
    %v2512 = vmul.f32 %v1861, %v2384
    %v2513 = vmul.f32 %v1864, %v2384
    %v2514 = vmul.f32 %v1869, %v2384
    %v2515 = vmul.f32 %v1872, %v2384
    %v2516 = vmul.f32 %v1877, %v2384
    %v2517 = vmul.f32 %v1880, %v2384
    %v2518 = vmul.f32 %v1885, %v2384
    %v2519 = vmul.f32 %v1888, %v2384
    %v2520 = vmul.f32 %v1893, %v2384
    %v2521 = vmul.f32 %v1896, %v2384
    %v2522 = vmul.f32 %v1901, %v2384
    %v2523 = vmul.f32 %v1904, %v2384
    %v2524 = vmul.f32 %v1909, %v2384
    %v2525 = vmul.f32 %v1912, %v2384
    %v2526 = vmul.f32 %v1917, %v2384
    %v2527 = vmul.f32 %v1920, %v2384
    %v2528 = vmul.f32 %v1925, %v2384
    %v2529 = vmul.f32 %v1928, %v2384
    %v2530 = vmul.f32 %v1933, %v2384
    %v2531 = vmul.f32 %v1936, %v2384
    %v2532 = vmul.f32 %v1941, %v2384
    %v2533 = vmul.f32 %v1944, %v2384
    %v2534 = vmul.f32 %v1949, %v2384
    %v2535 = vmul.f32 %v1952, %v2384
    %v2536 = vmul.f32 %v1957, %v2384
    %v2537 = vmul.f32 %v1960, %v2384
    %v2538 = vmul.f32 %v1965, %v2384
    %v2539 = vmul.f32 %v1968, %v2384
    %v2540 = vmul.f32 %v1973, %v2384
    %v2541 = vmul.f32 %v1976, %v2384
    %v2542 = vmul.f32 %v1981, %v2384
    %v2543 = vmul.f32 %v1984, %v2384
    %v2544 = vmul.f32 %v1989, %v2384
    %v2545 = vmul.f32 %v1992, %v2384
    %v2546 = vmul.f32 %v1997, %v2384
    %v2547 = vmul.f32 %v2000, %v2384
    %v2548 = vmul.f32 %v2005, %v2384
    %v2549 = vmul.f32 %v2008, %v2384
    %v2550 = vmul.f32 %v2013, %v2384
    %v2551 = vmul.f32 %v2016, %v2384
    %v2552 = vmul.f32 %v2021, %v2384
    %v2553 = vmul.f32 %v2024, %v2384
    %v2554 = vmul.f32 %v2029, %v2384
    %v2555 = vmul.f32 %v2032, %v2384
    %v2556 = vmul.f32 %v2037, %v2384
    %v2557 = vmul.f32 %v2040, %v2384
    %v2558 = vmul.f32 %v2045, %v2384
    %v2559 = vmul.f32 %v2048, %v2384
    %v2560 = vmul.f32 %v2053, %v2384
    %v2561 = vmul.f32 %v2056, %v2384
    %v2562 = vmul.f32 %v2061, %v2384
    %v2563 = vmul.f32 %v2064, %v2384
    %v2564 = vmul.f32 %v2069, %v2384
    %v2565 = vmul.f32 %v2072, %v2384
    %v2566 = vmul.f32 %v2077, %v2384
    %v2567 = vmul.f32 %v2080, %v2384
    %v2568 = vmul.f32 %v2085, %v2384
    %v2569 = vmul.f32 %v2088, %v2384
    %v2570 = vmul.f32 %v2093, %v2384
    %v2571 = vmul.f32 %v2096, %v2384
    %v2572 = vmul.f32 %v2101, %v2384
    %v2573 = vmul.f32 %v2104, %v2384
    %v2574 = vmul.f32 %v2109, %v2384
    %v2575 = vmul.f32 %v2112, %v2384
    %v2576 = vmul.f32 %v2117, %v2384
    %v2577 = vmul.f32 %v2120, %v2384
    %v2578 = vmul.f32 %v2125, %v2384
    %v2579 = vmul.f32 %v2128, %v2384
    %v2580 = vmul.f32 %v2133, %v2384
    %v2581 = vmul.f32 %v2136, %v2384
    %v2582 = vmul.f32 %v2141, %v2384
    %v2583 = vmul.f32 %v2144, %v2384
    %v2584 = vmul.f32 %v2149, %v2384
    %v2585 = vmul.f32 %v2152, %v2384
    %v2586 = vmul.f32 %v2157, %v2384
    %v2587 = vmul.f32 %v2160, %v2384
    %v2588 = vmul.f32 %v2165, %v2384
    %v2589 = vmul.f32 %v2168, %v2384
    %v2590 = vmul.f32 %v2173, %v2384
    %v2591 = vmul.f32 %v2176, %v2384
    %v2592 = vmul.f32 %v2181, %v2384
    %v2593 = vmul.f32 %v2184, %v2384
    %v2594 = vmul.f32 %v2189, %v2384
    %v2595 = vmul.f32 %v2192, %v2384
    %v2596 = vmul.f32 %v2197, %v2384
    %v2597 = vmul.f32 %v2200, %v2384
    %v2598 = vmul.f32 %v2205, %v2384
    %v2599 = vmul.f32 %v2208, %v2384
    %v2600 = vmul.f32 %v2213, %v2384
    %v2601 = vmul.f32 %v2216, %v2384
    %v2602 = vmul.f32 %v2221, %v2384
    %v2603 = vmul.f32 %v2224, %v2384
    %v2604 = vmul.f32 %v2229, %v2384
    %v2605 = vmul.f32 %v2232, %v2384
    %v2606 = vmul.f32 %v2237, %v2384
    %v2607 = vmul.f32 %v2240, %v2384
    %v2608 = vmul.f32 %v2245, %v2384
    %v2609 = vmul.f32 %v2248, %v2384
    %v2610 = vmul.f32 %v2253, %v2384
    %v2611 = vmul.f32 %v2256, %v2384
    %v2612 = vmul.f32 %v2261, %v2384
    %v2613 = vmul.f32 %v2264, %v2384
    %v2614 = vmul.f32 %v2269, %v2384
    %v2615 = vmul.f32 %v2272, %v2384
    %v2616 = vmul.f32 %v2277, %v2384
    %v2617 = vmul.f32 %v2280, %v2384
    %v2618 = vmul.f32 %v2285, %v2384
    %v2619 = vmul.f32 %v2288, %v2384
    %v2620 = vmul.f32 %v2293, %v2384
    %v2621 = vmul.f32 %v2296, %v2384
    %v2622 = vmul.f32 %v2301, %v2384
    %v2623 = vmul.f32 %v2304, %v2384
    %v2624 = vmul.f32 %v2309, %v2384
    %v2625 = vmul.f32 %v2312, %v2384
    %v2626 = vmul.f32 %v2317, %v2384
    %v2627 = vmul.f32 %v2320, %v2384
    %v2628 = vmul.f32 %v2325, %v2384
    %v2629 = vmul.f32 %v2328, %v2384
    %v2630 = vmul.f32 %v2333, %v2384
    %v2631 = vmul.f32 %v2336, %v2384
    %v2632 = vmul.f32 %v2341, %v2384
    %v2633 = vmul.f32 %v2344, %v2384
    %v2634 = vmul.f32 %v2349, %v2384
    %v2635 = vmul.f32 %v2352, %v2384
    %v2636 = vmul.f32 %v2357, %v2384
    %v2637 = vmul.f32 %v2360, %v2384
    %v2638 = vmul.f32 %v2365, %v2384
    %v2639 = vmul.f32 %v2368, %v2384
    %v2640 = vmul.f32 %v2373, %v2384
    %v2641 = vmul.f32 %v2376, %v2384
    %v2642 = vld [vmem:[%s3] sm:$0x1]
    %v2644 = vlaneseq
    %v2645 = vshrl.u32 %v2644, 7
    %v2646 = vsub.s32 0, %v2645
    %v2647 = vrot.slane %v2642, %v2646
    %v2649 = vadd.f32 %v2386, %v2647
    %v2650 = vadd.f32 %v2387, %v2647
    %v2651 = vadd.f32 %v2388, %v2647
    %v2652 = vadd.f32 %v2389, %v2647
    %v2653 = vadd.f32 %v2390, %v2647
    %v2654 = vadd.f32 %v2391, %v2647
    %v2655 = vadd.f32 %v2392, %v2647
    %v2656 = vadd.f32 %v2393, %v2647
    %v2657 = vadd.f32 %v2394, %v2647
    %v2658 = vadd.f32 %v2395, %v2647
    %v2659 = vadd.f32 %v2396, %v2647
    %v2660 = vadd.f32 %v2397, %v2647
    %v2661 = vadd.f32 %v2398, %v2647
    %v2662 = vadd.f32 %v2399, %v2647
    %v2663 = vadd.f32 %v2400, %v2647
    %v2664 = vadd.f32 %v2401, %v2647
    %v2665 = vadd.f32 %v2402, %v2647
    %v2666 = vadd.f32 %v2403, %v2647
    %v2667 = vadd.f32 %v2404, %v2647
    %v2668 = vadd.f32 %v2405, %v2647
    %v2669 = vadd.f32 %v2406, %v2647
    %v2670 = vadd.f32 %v2407, %v2647
    %v2671 = vadd.f32 %v2408, %v2647
    %v2672 = vadd.f32 %v2409, %v2647
    %v2673 = vadd.f32 %v2410, %v2647
    %v2674 = vadd.f32 %v2411, %v2647
    %v2675 = vadd.f32 %v2412, %v2647
    %v2676 = vadd.f32 %v2413, %v2647
    %v2677 = vadd.f32 %v2414, %v2647
    %v2678 = vadd.f32 %v2415, %v2647
    %v2679 = vadd.f32 %v2416, %v2647
    %v2680 = vadd.f32 %v2417, %v2647
    %v2681 = vadd.f32 %v2418, %v2647
    %v2682 = vadd.f32 %v2419, %v2647
    %v2683 = vadd.f32 %v2420, %v2647
    %v2684 = vadd.f32 %v2421, %v2647
    %v2685 = vadd.f32 %v2422, %v2647
    %v2686 = vadd.f32 %v2423, %v2647
    %v2687 = vadd.f32 %v2424, %v2647
    %v2688 = vadd.f32 %v2425, %v2647
    %v2689 = vadd.f32 %v2426, %v2647
    %v2690 = vadd.f32 %v2427, %v2647
    %v2691 = vadd.f32 %v2428, %v2647
    %v2692 = vadd.f32 %v2429, %v2647
    %v2693 = vadd.f32 %v2430, %v2647
    %v2694 = vadd.f32 %v2431, %v2647
    %v2695 = vadd.f32 %v2432, %v2647
    %v2696 = vadd.f32 %v2433, %v2647
    %v2697 = vadd.f32 %v2434, %v2647
    %v2698 = vadd.f32 %v2435, %v2647
    %v2699 = vadd.f32 %v2436, %v2647
    %v2700 = vadd.f32 %v2437, %v2647
    %v2701 = vadd.f32 %v2438, %v2647
    %v2702 = vadd.f32 %v2439, %v2647
    %v2703 = vadd.f32 %v2440, %v2647
    %v2704 = vadd.f32 %v2441, %v2647
    %v2705 = vadd.f32 %v2442, %v2647
    %v2706 = vadd.f32 %v2443, %v2647
    %v2707 = vadd.f32 %v2444, %v2647
    %v2708 = vadd.f32 %v2445, %v2647
    %v2709 = vadd.f32 %v2446, %v2647
    %v2710 = vadd.f32 %v2447, %v2647
    %v2711 = vadd.f32 %v2448, %v2647
    %v2712 = vadd.f32 %v2449, %v2647
    %v2713 = vadd.f32 %v2450, %v2647
    %v2714 = vadd.f32 %v2451, %v2647
    %v2715 = vadd.f32 %v2452, %v2647
    %v2716 = vadd.f32 %v2453, %v2647
    %v2717 = vadd.f32 %v2454, %v2647
    %v2718 = vadd.f32 %v2455, %v2647
    %v2719 = vadd.f32 %v2456, %v2647
    %v2720 = vadd.f32 %v2457, %v2647
    %v2721 = vadd.f32 %v2458, %v2647
    %v2722 = vadd.f32 %v2459, %v2647
    %v2723 = vadd.f32 %v2460, %v2647
    %v2724 = vadd.f32 %v2461, %v2647
    %v2725 = vadd.f32 %v2462, %v2647
    %v2726 = vadd.f32 %v2463, %v2647
    %v2727 = vadd.f32 %v2464, %v2647
    %v2728 = vadd.f32 %v2465, %v2647
    %v2729 = vadd.f32 %v2466, %v2647
    %v2730 = vadd.f32 %v2467, %v2647
    %v2731 = vadd.f32 %v2468, %v2647
    %v2732 = vadd.f32 %v2469, %v2647
    %v2733 = vadd.f32 %v2470, %v2647
    %v2734 = vadd.f32 %v2471, %v2647
    %v2735 = vadd.f32 %v2472, %v2647
    %v2736 = vadd.f32 %v2473, %v2647
    %v2737 = vadd.f32 %v2474, %v2647
    %v2738 = vadd.f32 %v2475, %v2647
    %v2739 = vadd.f32 %v2476, %v2647
    %v2740 = vadd.f32 %v2477, %v2647
    %v2741 = vadd.f32 %v2478, %v2647
    %v2742 = vadd.f32 %v2479, %v2647
    %v2743 = vadd.f32 %v2480, %v2647
    %v2744 = vadd.f32 %v2481, %v2647
    %v2745 = vadd.f32 %v2482, %v2647
    %v2746 = vadd.f32 %v2483, %v2647
    %v2747 = vadd.f32 %v2484, %v2647
    %v2748 = vadd.f32 %v2485, %v2647
    %v2749 = vadd.f32 %v2486, %v2647
    %v2750 = vadd.f32 %v2487, %v2647
    %v2751 = vadd.f32 %v2488, %v2647
    %v2752 = vadd.f32 %v2489, %v2647
    %v2753 = vadd.f32 %v2490, %v2647
    %v2754 = vadd.f32 %v2491, %v2647
    %v2755 = vadd.f32 %v2492, %v2647
    %v2756 = vadd.f32 %v2493, %v2647
    %v2757 = vadd.f32 %v2494, %v2647
    %v2758 = vadd.f32 %v2495, %v2647
    %v2759 = vadd.f32 %v2496, %v2647
    %v2760 = vadd.f32 %v2497, %v2647
    %v2761 = vadd.f32 %v2498, %v2647
    %v2762 = vadd.f32 %v2499, %v2647
    %v2763 = vadd.f32 %v2500, %v2647
    %v2764 = vadd.f32 %v2501, %v2647
    %v2765 = vadd.f32 %v2502, %v2647
    %v2766 = vadd.f32 %v2503, %v2647
    %v2767 = vadd.f32 %v2504, %v2647
    %v2768 = vadd.f32 %v2505, %v2647
    %v2769 = vadd.f32 %v2506, %v2647
    %v2770 = vadd.f32 %v2507, %v2647
    %v2771 = vadd.f32 %v2508, %v2647
    %v2772 = vadd.f32 %v2509, %v2647
    %v2773 = vadd.f32 %v2510, %v2647
    %v2774 = vadd.f32 %v2511, %v2647
    %v2775 = vadd.f32 %v2512, %v2647
    %v2776 = vadd.f32 %v2513, %v2647
    %v2777 = vadd.f32 %v2514, %v2647
    %v2778 = vadd.f32 %v2515, %v2647
    %v2779 = vadd.f32 %v2516, %v2647
    %v2780 = vadd.f32 %v2517, %v2647
    %v2781 = vadd.f32 %v2518, %v2647
    %v2782 = vadd.f32 %v2519, %v2647
    %v2783 = vadd.f32 %v2520, %v2647
    %v2784 = vadd.f32 %v2521, %v2647
    %v2785 = vadd.f32 %v2522, %v2647
    %v2786 = vadd.f32 %v2523, %v2647
    %v2787 = vadd.f32 %v2524, %v2647
    %v2788 = vadd.f32 %v2525, %v2647
    %v2789 = vadd.f32 %v2526, %v2647
    %v2790 = vadd.f32 %v2527, %v2647
    %v2791 = vadd.f32 %v2528, %v2647
    %v2792 = vadd.f32 %v2529, %v2647
    %v2793 = vadd.f32 %v2530, %v2647
    %v2794 = vadd.f32 %v2531, %v2647
    %v2795 = vadd.f32 %v2532, %v2647
    %v2796 = vadd.f32 %v2533, %v2647
    %v2797 = vadd.f32 %v2534, %v2647
    %v2798 = vadd.f32 %v2535, %v2647
    %v2799 = vadd.f32 %v2536, %v2647
    %v2800 = vadd.f32 %v2537, %v2647
    %v2801 = vadd.f32 %v2538, %v2647
    %v2802 = vadd.f32 %v2539, %v2647
    %v2803 = vadd.f32 %v2540, %v2647
    %v2804 = vadd.f32 %v2541, %v2647
    %v2805 = vadd.f32 %v2542, %v2647
    %v2806 = vadd.f32 %v2543, %v2647
    %v2807 = vadd.f32 %v2544, %v2647
    %v2808 = vadd.f32 %v2545, %v2647
    %v2809 = vadd.f32 %v2546, %v2647
    %v2810 = vadd.f32 %v2547, %v2647
    %v2811 = vadd.f32 %v2548, %v2647
    %v2812 = vadd.f32 %v2549, %v2647
    %v2813 = vadd.f32 %v2550, %v2647
    %v2814 = vadd.f32 %v2551, %v2647
    %v2815 = vadd.f32 %v2552, %v2647
    %v2816 = vadd.f32 %v2553, %v2647
    %v2817 = vadd.f32 %v2554, %v2647
    %v2818 = vadd.f32 %v2555, %v2647
    %v2819 = vadd.f32 %v2556, %v2647
    %v2820 = vadd.f32 %v2557, %v2647
    %v2821 = vadd.f32 %v2558, %v2647
    %v2822 = vadd.f32 %v2559, %v2647
    %v2823 = vadd.f32 %v2560, %v2647
    %v2824 = vadd.f32 %v2561, %v2647
    %v2825 = vadd.f32 %v2562, %v2647
    %v2826 = vadd.f32 %v2563, %v2647
    %v2827 = vadd.f32 %v2564, %v2647
    %v2828 = vadd.f32 %v2565, %v2647
    %v2829 = vadd.f32 %v2566, %v2647
    %v2830 = vadd.f32 %v2567, %v2647
    %v2831 = vadd.f32 %v2568, %v2647
    %v2832 = vadd.f32 %v2569, %v2647
    %v2833 = vadd.f32 %v2570, %v2647
    %v2834 = vadd.f32 %v2571, %v2647
    %v2835 = vadd.f32 %v2572, %v2647
    %v2836 = vadd.f32 %v2573, %v2647
    %v2837 = vadd.f32 %v2574, %v2647
    %v2838 = vadd.f32 %v2575, %v2647
    %v2839 = vadd.f32 %v2576, %v2647
    %v2840 = vadd.f32 %v2577, %v2647
    %v2841 = vadd.f32 %v2578, %v2647
    %v2842 = vadd.f32 %v2579, %v2647
    %v2843 = vadd.f32 %v2580, %v2647
    %v2844 = vadd.f32 %v2581, %v2647
    %v2845 = vadd.f32 %v2582, %v2647
    %v2846 = vadd.f32 %v2583, %v2647
    %v2847 = vadd.f32 %v2584, %v2647
    %v2848 = vadd.f32 %v2585, %v2647
    %v2849 = vadd.f32 %v2586, %v2647
    %v2850 = vadd.f32 %v2587, %v2647
    %v2851 = vadd.f32 %v2588, %v2647
    %v2852 = vadd.f32 %v2589, %v2647
    %v2853 = vadd.f32 %v2590, %v2647
    %v2854 = vadd.f32 %v2591, %v2647
    %v2855 = vadd.f32 %v2592, %v2647
    %v2856 = vadd.f32 %v2593, %v2647
    %v2857 = vadd.f32 %v2594, %v2647
    %v2858 = vadd.f32 %v2595, %v2647
    %v2859 = vadd.f32 %v2596, %v2647
    %v2860 = vadd.f32 %v2597, %v2647
    %v2861 = vadd.f32 %v2598, %v2647
    %v2862 = vadd.f32 %v2599, %v2647
    %v2863 = vadd.f32 %v2600, %v2647
    %v2864 = vadd.f32 %v2601, %v2647
    %v2865 = vadd.f32 %v2602, %v2647
    %v2866 = vadd.f32 %v2603, %v2647
    %v2867 = vadd.f32 %v2604, %v2647
    %v2868 = vadd.f32 %v2605, %v2647
    %v2869 = vadd.f32 %v2606, %v2647
    %v2870 = vadd.f32 %v2607, %v2647
    %v2871 = vadd.f32 %v2608, %v2647
    %v2872 = vadd.f32 %v2609, %v2647
    %v2873 = vadd.f32 %v2610, %v2647
    %v2874 = vadd.f32 %v2611, %v2647
    %v2875 = vadd.f32 %v2612, %v2647
    %v2876 = vadd.f32 %v2613, %v2647
    %v2877 = vadd.f32 %v2614, %v2647
    %v2878 = vadd.f32 %v2615, %v2647
    %v2879 = vadd.f32 %v2616, %v2647
    %v2880 = vadd.f32 %v2617, %v2647
    %v2881 = vadd.f32 %v2618, %v2647
    %v2882 = vadd.f32 %v2619, %v2647
    %v2883 = vadd.f32 %v2620, %v2647
    %v2884 = vadd.f32 %v2621, %v2647
    %v2885 = vadd.f32 %v2622, %v2647
    %v2886 = vadd.f32 %v2623, %v2647
    %v2887 = vadd.f32 %v2624, %v2647
    %v2888 = vadd.f32 %v2625, %v2647
    %v2889 = vadd.f32 %v2626, %v2647
    %v2890 = vadd.f32 %v2627, %v2647
    %v2891 = vadd.f32 %v2628, %v2647
    %v2892 = vadd.f32 %v2629, %v2647
    %v2893 = vadd.f32 %v2630, %v2647
    %v2894 = vadd.f32 %v2631, %v2647
    %v2895 = vadd.f32 %v2632, %v2647
    %v2896 = vadd.f32 %v2633, %v2647
    %v2897 = vadd.f32 %v2634, %v2647
    %v2898 = vadd.f32 %v2635, %v2647
    %v2899 = vadd.f32 %v2636, %v2647
    %v2900 = vadd.f32 %v2637, %v2647
    %v2901 = vadd.f32 %v2638, %v2647
    %v2902 = vadd.f32 %v2639, %v2647
    %v2903 = vadd.f32 %v2640, %v2647
    %v2904 = vadd.f32 %v2641, %v2647
    %v2905 = vmax.f32 %v2649, 0.0
    %v2906 = vmax.f32 %v2650, 0.0
    %v2907 = vmax.f32 %v2651, 0.0
    %v2908 = vmax.f32 %v2652, 0.0
    %v2909 = vmax.f32 %v2653, 0.0
    %v2910 = vmax.f32 %v2654, 0.0
    %v2911 = vmax.f32 %v2655, 0.0
    %v2912 = vmax.f32 %v2656, 0.0
    %v2913 = vmax.f32 %v2657, 0.0
    %v2914 = vmax.f32 %v2658, 0.0
    %v2915 = vmax.f32 %v2659, 0.0
    %v2916 = vmax.f32 %v2660, 0.0
    %v2917 = vmax.f32 %v2661, 0.0
    %v2918 = vmax.f32 %v2662, 0.0
    %v2919 = vmax.f32 %v2663, 0.0
    %v2920 = vmax.f32 %v2664, 0.0
    %v2921 = vmax.f32 %v2665, 0.0
    %v2922 = vmax.f32 %v2666, 0.0
    %v2923 = vmax.f32 %v2667, 0.0
    %v2924 = vmax.f32 %v2668, 0.0
    %v2925 = vmax.f32 %v2669, 0.0
    %v2926 = vmax.f32 %v2670, 0.0
    %v2927 = vmax.f32 %v2671, 0.0
    %v2928 = vmax.f32 %v2672, 0.0
    %v2929 = vmax.f32 %v2673, 0.0
    %v2930 = vmax.f32 %v2674, 0.0
    %v2931 = vmax.f32 %v2675, 0.0
    %v2932 = vmax.f32 %v2676, 0.0
    %v2933 = vmax.f32 %v2677, 0.0
    %v2934 = vmax.f32 %v2678, 0.0
    %v2935 = vmax.f32 %v2679, 0.0
    %v2936 = vmax.f32 %v2680, 0.0
    %v2937 = vmax.f32 %v2681, 0.0
    %v2938 = vmax.f32 %v2682, 0.0
    %v2939 = vmax.f32 %v2683, 0.0
    %v2940 = vmax.f32 %v2684, 0.0
    %v2941 = vmax.f32 %v2685, 0.0
    %v2942 = vmax.f32 %v2686, 0.0
    %v2943 = vmax.f32 %v2687, 0.0
    %v2944 = vmax.f32 %v2688, 0.0
    %v2945 = vmax.f32 %v2689, 0.0
    %v2946 = vmax.f32 %v2690, 0.0
    %v2947 = vmax.f32 %v2691, 0.0
    %v2948 = vmax.f32 %v2692, 0.0
    %v2949 = vmax.f32 %v2693, 0.0
    %v2950 = vmax.f32 %v2694, 0.0
    %v2951 = vmax.f32 %v2695, 0.0
    %v2952 = vmax.f32 %v2696, 0.0
    %v2953 = vmax.f32 %v2697, 0.0
    %v2954 = vmax.f32 %v2698, 0.0
    %v2955 = vmax.f32 %v2699, 0.0
    %v2956 = vmax.f32 %v2700, 0.0
    %v2957 = vmax.f32 %v2701, 0.0
    %v2958 = vmax.f32 %v2702, 0.0
    %v2959 = vmax.f32 %v2703, 0.0
    %v2960 = vmax.f32 %v2704, 0.0
    %v2961 = vmax.f32 %v2705, 0.0
    %v2962 = vmax.f32 %v2706, 0.0
    %v2963 = vmax.f32 %v2707, 0.0
    %v2964 = vmax.f32 %v2708, 0.0
    %v2965 = vmax.f32 %v2709, 0.0
    %v2966 = vmax.f32 %v2710, 0.0
    %v2967 = vmax.f32 %v2711, 0.0
    %v2968 = vmax.f32 %v2712, 0.0
    %v2969 = vmax.f32 %v2713, 0.0
    %v2970 = vmax.f32 %v2714, 0.0
    %v2971 = vmax.f32 %v2715, 0.0
    %v2972 = vmax.f32 %v2716, 0.0
    %v2973 = vmax.f32 %v2717, 0.0
    %v2974 = vmax.f32 %v2718, 0.0
    %v2975 = vmax.f32 %v2719, 0.0
    %v2976 = vmax.f32 %v2720, 0.0
    %v2977 = vmax.f32 %v2721, 0.0
    %v2978 = vmax.f32 %v2722, 0.0
    %v2979 = vmax.f32 %v2723, 0.0
    %v2980 = vmax.f32 %v2724, 0.0
    %v2981 = vmax.f32 %v2725, 0.0
    %v2982 = vmax.f32 %v2726, 0.0
    %v2983 = vmax.f32 %v2727, 0.0
    %v2984 = vmax.f32 %v2728, 0.0
    %v2985 = vmax.f32 %v2729, 0.0
    %v2986 = vmax.f32 %v2730, 0.0
    %v2987 = vmax.f32 %v2731, 0.0
    %v2988 = vmax.f32 %v2732, 0.0
    %v2989 = vmax.f32 %v2733, 0.0
    %v2990 = vmax.f32 %v2734, 0.0
    %v2991 = vmax.f32 %v2735, 0.0
    %v2992 = vmax.f32 %v2736, 0.0
    %v2993 = vmax.f32 %v2737, 0.0
    %v2994 = vmax.f32 %v2738, 0.0
    %v2995 = vmax.f32 %v2739, 0.0
    %v2996 = vmax.f32 %v2740, 0.0
    %v2997 = vmax.f32 %v2741, 0.0
    %v2998 = vmax.f32 %v2742, 0.0
    %v2999 = vmax.f32 %v2743, 0.0
    %v3000 = vmax.f32 %v2744, 0.0
    %v3001 = vmax.f32 %v2745, 0.0
    %v3002 = vmax.f32 %v2746, 0.0
    %v3003 = vmax.f32 %v2747, 0.0
    %v3004 = vmax.f32 %v2748, 0.0
    %v3005 = vmax.f32 %v2749, 0.0
    %v3006 = vmax.f32 %v2750, 0.0
    %v3007 = vmax.f32 %v2751, 0.0
    %v3008 = vmax.f32 %v2752, 0.0
    %v3009 = vmax.f32 %v2753, 0.0
    %v3010 = vmax.f32 %v2754, 0.0
    %v3011 = vmax.f32 %v2755, 0.0
    %v3012 = vmax.f32 %v2756, 0.0
    %v3013 = vmax.f32 %v2757, 0.0
    %v3014 = vmax.f32 %v2758, 0.0
    %v3015 = vmax.f32 %v2759, 0.0
    %v3016 = vmax.f32 %v2760, 0.0
    %v3017 = vmax.f32 %v2761, 0.0
    %v3018 = vmax.f32 %v2762, 0.0
    %v3019 = vmax.f32 %v2763, 0.0
    %v3020 = vmax.f32 %v2764, 0.0
    %v3021 = vmax.f32 %v2765, 0.0
    %v3022 = vmax.f32 %v2766, 0.0
    %v3023 = vmax.f32 %v2767, 0.0
    %v3024 = vmax.f32 %v2768, 0.0
    %v3025 = vmax.f32 %v2769, 0.0
    %v3026 = vmax.f32 %v2770, 0.0
    %v3027 = vmax.f32 %v2771, 0.0
    %v3028 = vmax.f32 %v2772, 0.0
    %v3029 = vmax.f32 %v2773, 0.0
    %v3030 = vmax.f32 %v2774, 0.0
    %v3031 = vmax.f32 %v2775, 0.0
    %v3032 = vmax.f32 %v2776, 0.0
    %v3033 = vmax.f32 %v2777, 0.0
    %v3034 = vmax.f32 %v2778, 0.0
    %v3035 = vmax.f32 %v2779, 0.0
    %v3036 = vmax.f32 %v2780, 0.0
    %v3037 = vmax.f32 %v2781, 0.0
    %v3038 = vmax.f32 %v2782, 0.0
    %v3039 = vmax.f32 %v2783, 0.0
    %v3040 = vmax.f32 %v2784, 0.0
    %v3041 = vmax.f32 %v2785, 0.0
    %v3042 = vmax.f32 %v2786, 0.0
    %v3043 = vmax.f32 %v2787, 0.0
    %v3044 = vmax.f32 %v2788, 0.0
    %v3045 = vmax.f32 %v2789, 0.0
    %v3046 = vmax.f32 %v2790, 0.0
    %v3047 = vmax.f32 %v2791, 0.0
    %v3048 = vmax.f32 %v2792, 0.0
    %v3049 = vmax.f32 %v2793, 0.0
    %v3050 = vmax.f32 %v2794, 0.0
    %v3051 = vmax.f32 %v2795, 0.0
    %v3052 = vmax.f32 %v2796, 0.0
    %v3053 = vmax.f32 %v2797, 0.0
    %v3054 = vmax.f32 %v2798, 0.0
    %v3055 = vmax.f32 %v2799, 0.0
    %v3056 = vmax.f32 %v2800, 0.0
    %v3057 = vmax.f32 %v2801, 0.0
    %v3058 = vmax.f32 %v2802, 0.0
    %v3059 = vmax.f32 %v2803, 0.0
    %v3060 = vmax.f32 %v2804, 0.0
    %v3061 = vmax.f32 %v2805, 0.0
    %v3062 = vmax.f32 %v2806, 0.0
    %v3063 = vmax.f32 %v2807, 0.0
    %v3064 = vmax.f32 %v2808, 0.0
    %v3065 = vmax.f32 %v2809, 0.0
    %v3066 = vmax.f32 %v2810, 0.0
    %v3067 = vmax.f32 %v2811, 0.0
    %v3068 = vmax.f32 %v2812, 0.0
    %v3069 = vmax.f32 %v2813, 0.0
    %v3070 = vmax.f32 %v2814, 0.0
    %v3071 = vmax.f32 %v2815, 0.0
    %v3072 = vmax.f32 %v2816, 0.0
    %v3073 = vmax.f32 %v2817, 0.0
    %v3074 = vmax.f32 %v2818, 0.0
    %v3075 = vmax.f32 %v2819, 0.0
    %v3076 = vmax.f32 %v2820, 0.0
    %v3077 = vmax.f32 %v2821, 0.0
    %v3078 = vmax.f32 %v2822, 0.0
    %v3079 = vmax.f32 %v2823, 0.0
    %v3080 = vmax.f32 %v2824, 0.0
    %v3081 = vmax.f32 %v2825, 0.0
    %v3082 = vmax.f32 %v2826, 0.0
    %v3083 = vmax.f32 %v2827, 0.0
    %v3084 = vmax.f32 %v2828, 0.0
    %v3085 = vmax.f32 %v2829, 0.0
    %v3086 = vmax.f32 %v2830, 0.0
    %v3087 = vmax.f32 %v2831, 0.0
    %v3088 = vmax.f32 %v2832, 0.0
    %v3089 = vmax.f32 %v2833, 0.0
    %v3090 = vmax.f32 %v2834, 0.0
    %v3091 = vmax.f32 %v2835, 0.0
    %v3092 = vmax.f32 %v2836, 0.0
    %v3093 = vmax.f32 %v2837, 0.0
    %v3094 = vmax.f32 %v2838, 0.0
    %v3095 = vmax.f32 %v2839, 0.0
    %v3096 = vmax.f32 %v2840, 0.0
    %v3097 = vmax.f32 %v2841, 0.0
    %v3098 = vmax.f32 %v2842, 0.0
    %v3099 = vmax.f32 %v2843, 0.0
    %v3100 = vmax.f32 %v2844, 0.0
    %v3101 = vmax.f32 %v2845, 0.0
    %v3102 = vmax.f32 %v2846, 0.0
    %v3103 = vmax.f32 %v2847, 0.0
    %v3104 = vmax.f32 %v2848, 0.0
    %v3105 = vmax.f32 %v2849, 0.0
    %v3106 = vmax.f32 %v2850, 0.0
    %v3107 = vmax.f32 %v2851, 0.0
    %v3108 = vmax.f32 %v2852, 0.0
    %v3109 = vmax.f32 %v2853, 0.0
    %v3110 = vmax.f32 %v2854, 0.0
    %v3111 = vmax.f32 %v2855, 0.0
    %v3112 = vmax.f32 %v2856, 0.0
    %v3113 = vmax.f32 %v2857, 0.0
    %v3114 = vmax.f32 %v2858, 0.0
    %v3115 = vmax.f32 %v2859, 0.0
    %v3116 = vmax.f32 %v2860, 0.0
    %v3117 = vmax.f32 %v2861, 0.0
    %v3118 = vmax.f32 %v2862, 0.0
    %v3119 = vmax.f32 %v2863, 0.0
    %v3120 = vmax.f32 %v2864, 0.0
    %v3121 = vmax.f32 %v2865, 0.0
    %v3122 = vmax.f32 %v2866, 0.0
    %v3123 = vmax.f32 %v2867, 0.0
    %v3124 = vmax.f32 %v2868, 0.0
    %v3125 = vmax.f32 %v2869, 0.0
    %v3126 = vmax.f32 %v2870, 0.0
    %v3127 = vmax.f32 %v2871, 0.0
    %v3128 = vmax.f32 %v2872, 0.0
    %v3129 = vmax.f32 %v2873, 0.0
    %v3130 = vmax.f32 %v2874, 0.0
    %v3131 = vmax.f32 %v2875, 0.0
    %v3132 = vmax.f32 %v2876, 0.0
    %v3133 = vmax.f32 %v2877, 0.0
    %v3134 = vmax.f32 %v2878, 0.0
    %v3135 = vmax.f32 %v2879, 0.0
    %v3136 = vmax.f32 %v2880, 0.0
    %v3137 = vmax.f32 %v2881, 0.0
    %v3138 = vmax.f32 %v2882, 0.0
    %v3139 = vmax.f32 %v2883, 0.0
    %v3140 = vmax.f32 %v2884, 0.0
    %v3141 = vmax.f32 %v2885, 0.0
    %v3142 = vmax.f32 %v2886, 0.0
    %v3143 = vmax.f32 %v2887, 0.0
    %v3144 = vmax.f32 %v2888, 0.0
    %v3145 = vmax.f32 %v2889, 0.0
    %v3146 = vmax.f32 %v2890, 0.0
    %v3147 = vmax.f32 %v2891, 0.0
    %v3148 = vmax.f32 %v2892, 0.0
    %v3149 = vmax.f32 %v2893, 0.0
    %v3150 = vmax.f32 %v2894, 0.0
    %v3151 = vmax.f32 %v2895, 0.0
    %v3152 = vmax.f32 %v2896, 0.0
    %v3153 = vmax.f32 %v2897, 0.0
    %v3154 = vmax.f32 %v2898, 0.0
    %v3155 = vmax.f32 %v2899, 0.0
    %v3156 = vmax.f32 %v2900, 0.0
    %v3157 = vmax.f32 %v2901, 0.0
    %v3158 = vmax.f32 %v2902, 0.0
    %v3159 = vmax.f32 %v2903, 0.0
    %v3160 = vmax.f32 %v2904, 0.0
    %v3161 = vpack.c.bf16 %v2906, %v2905
    %v3162 = vpack.c.bf16 %v2908, %v2907
    %v3163 = vpack.c.bf16 %v2910, %v2909
    %v3164 = vpack.c.bf16 %v2912, %v2911
    %v3165 = vpack.c.bf16 %v2914, %v2913
    %v3166 = vpack.c.bf16 %v2916, %v2915
    %v3167 = vpack.c.bf16 %v2918, %v2917
    %v3168 = vpack.c.bf16 %v2920, %v2919
    %v3169 = vpack.c.bf16 %v2922, %v2921
    %v3170 = vpack.c.bf16 %v2924, %v2923
    %v3171 = vpack.c.bf16 %v2926, %v2925
    %v3172 = vpack.c.bf16 %v2928, %v2927
    %v3173 = vpack.c.bf16 %v2930, %v2929
    %v3174 = vpack.c.bf16 %v2932, %v2931
    %v3175 = vpack.c.bf16 %v2934, %v2933
    %v3176 = vpack.c.bf16 %v2936, %v2935
    %v3177 = vpack.c.bf16 %v2938, %v2937
    %v3178 = vpack.c.bf16 %v2940, %v2939
    %v3179 = vpack.c.bf16 %v2942, %v2941
    %v3180 = vpack.c.bf16 %v2944, %v2943
    %v3181 = vpack.c.bf16 %v2946, %v2945
    %v3182 = vpack.c.bf16 %v2948, %v2947
    %v3183 = vpack.c.bf16 %v2950, %v2949
    %v3184 = vpack.c.bf16 %v2952, %v2951
    %v3185 = vpack.c.bf16 %v2954, %v2953
    %v3186 = vpack.c.bf16 %v2956, %v2955
    %v3187 = vpack.c.bf16 %v2958, %v2957
    %v3188 = vpack.c.bf16 %v2960, %v2959
    %v3189 = vpack.c.bf16 %v2962, %v2961
    %v3190 = vpack.c.bf16 %v2964, %v2963
    %v3191 = vpack.c.bf16 %v2966, %v2965
    %v3192 = vpack.c.bf16 %v2968, %v2967
    %v3193 = vpack.c.bf16 %v2970, %v2969
    %v3194 = vpack.c.bf16 %v2972, %v2971
    %v3195 = vpack.c.bf16 %v2974, %v2973
    %v3196 = vpack.c.bf16 %v2976, %v2975
    %v3197 = vpack.c.bf16 %v2978, %v2977
    %v3198 = vpack.c.bf16 %v2980, %v2979
    %v3199 = vpack.c.bf16 %v2982, %v2981
    %v3200 = vpack.c.bf16 %v2984, %v2983
    %v3201 = vpack.c.bf16 %v2986, %v2985
    %v3202 = vpack.c.bf16 %v2988, %v2987
    %v3203 = vpack.c.bf16 %v2990, %v2989
    %v3204 = vpack.c.bf16 %v2992, %v2991
    %v3205 = vpack.c.bf16 %v2994, %v2993
    %v3206 = vpack.c.bf16 %v2996, %v2995
    %v3207 = vpack.c.bf16 %v2998, %v2997
    %v3208 = vpack.c.bf16 %v3000, %v2999
    %v3209 = vpack.c.bf16 %v3002, %v3001
    %v3210 = vpack.c.bf16 %v3004, %v3003
    %v3211 = vpack.c.bf16 %v3006, %v3005
    %v3212 = vpack.c.bf16 %v3008, %v3007
    %v3213 = vpack.c.bf16 %v3010, %v3009
    %v3214 = vpack.c.bf16 %v3012, %v3011
    %v3215 = vpack.c.bf16 %v3014, %v3013
    %v3216 = vpack.c.bf16 %v3016, %v3015
    %v3217 = vpack.c.bf16 %v3018, %v3017
    %v3218 = vpack.c.bf16 %v3020, %v3019
    %v3219 = vpack.c.bf16 %v3022, %v3021
    %v3220 = vpack.c.bf16 %v3024, %v3023
    %v3221 = vpack.c.bf16 %v3026, %v3025
    %v3222 = vpack.c.bf16 %v3028, %v3027
    %v3223 = vpack.c.bf16 %v3030, %v3029
    %v3224 = vpack.c.bf16 %v3032, %v3031
    %v3225 = vpack.c.bf16 %v3034, %v3033
    %v3226 = vpack.c.bf16 %v3036, %v3035
    %v3227 = vpack.c.bf16 %v3038, %v3037
    %v3228 = vpack.c.bf16 %v3040, %v3039
    %v3229 = vpack.c.bf16 %v3042, %v3041
    %v3230 = vpack.c.bf16 %v3044, %v3043
    %v3231 = vpack.c.bf16 %v3046, %v3045
    %v3232 = vpack.c.bf16 %v3048, %v3047
    %v3233 = vpack.c.bf16 %v3050, %v3049
    %v3234 = vpack.c.bf16 %v3052, %v3051
    %v3235 = vpack.c.bf16 %v3054, %v3053
    %v3236 = vpack.c.bf16 %v3056, %v3055
    %v3237 = vpack.c.bf16 %v3058, %v3057
    %v3238 = vpack.c.bf16 %v3060, %v3059
    %v3239 = vpack.c.bf16 %v3062, %v3061
    %v3240 = vpack.c.bf16 %v3064, %v3063
    %v3241 = vpack.c.bf16 %v3066, %v3065
    %v3242 = vpack.c.bf16 %v3068, %v3067
    %v3243 = vpack.c.bf16 %v3070, %v3069
    %v3244 = vpack.c.bf16 %v3072, %v3071
    %v3245 = vpack.c.bf16 %v3074, %v3073
    %v3246 = vpack.c.bf16 %v3076, %v3075
    %v3247 = vpack.c.bf16 %v3078, %v3077
    %v3248 = vpack.c.bf16 %v3080, %v3079
    %v3249 = vpack.c.bf16 %v3082, %v3081
    %v3250 = vpack.c.bf16 %v3084, %v3083
    %v3251 = vpack.c.bf16 %v3086, %v3085
    %v3252 = vpack.c.bf16 %v3088, %v3087
    %v3253 = vpack.c.bf16 %v3090, %v3089
    %v3254 = vpack.c.bf16 %v3092, %v3091
    %v3255 = vpack.c.bf16 %v3094, %v3093
    %v3256 = vpack.c.bf16 %v3096, %v3095
    %v3257 = vpack.c.bf16 %v3098, %v3097
    %v3258 = vpack.c.bf16 %v3100, %v3099
    %v3259 = vpack.c.bf16 %v3102, %v3101
    %v3260 = vpack.c.bf16 %v3104, %v3103
    %v3261 = vpack.c.bf16 %v3106, %v3105
    %v3262 = vpack.c.bf16 %v3108, %v3107
    %v3263 = vpack.c.bf16 %v3110, %v3109
    %v3264 = vpack.c.bf16 %v3112, %v3111
    %v3265 = vpack.c.bf16 %v3114, %v3113
    %v3266 = vpack.c.bf16 %v3116, %v3115
    %v3267 = vpack.c.bf16 %v3118, %v3117
    %v3268 = vpack.c.bf16 %v3120, %v3119
    %v3269 = vpack.c.bf16 %v3122, %v3121
    %v3270 = vpack.c.bf16 %v3124, %v3123
    %v3271 = vpack.c.bf16 %v3126, %v3125
    %v3272 = vpack.c.bf16 %v3128, %v3127
    %v3273 = vpack.c.bf16 %v3130, %v3129
    %v3274 = vpack.c.bf16 %v3132, %v3131
    %v3275 = vpack.c.bf16 %v3134, %v3133
    %v3276 = vpack.c.bf16 %v3136, %v3135
    %v3277 = vpack.c.bf16 %v3138, %v3137
    %v3278 = vpack.c.bf16 %v3140, %v3139
    %v3279 = vpack.c.bf16 %v3142, %v3141
    %v3280 = vpack.c.bf16 %v3144, %v3143
    %v3281 = vpack.c.bf16 %v3146, %v3145
    %v3282 = vpack.c.bf16 %v3148, %v3147
    %v3283 = vpack.c.bf16 %v3150, %v3149
    %v3284 = vpack.c.bf16 %v3152, %v3151
    %v3285 = vpack.c.bf16 %v3154, %v3153
    %v3286 = vpack.c.bf16 %v3156, %v3155
    %v3287 = vpack.c.bf16 %v3158, %v3157
    %v3288 = vpack.c.bf16 %v3160, %v3159
    %v3417 = vunpack.c.l.b16 %v3161
    %v3418 = vunpack.c.h.b16 %v3161
    %v3419 = vunpack.c.l.b16 %v3162
    %v3420 = vunpack.c.h.b16 %v3162
    %v3421 = vunpack.c.l.b16 %v3163
    %v3422 = vunpack.c.h.b16 %v3163
    %v3423 = vunpack.c.l.b16 %v3164
    %v3424 = vunpack.c.h.b16 %v3164
    %v3425 = vunpack.c.l.b16 %v3165
    %v3426 = vunpack.c.h.b16 %v3165
    %v3427 = vunpack.c.l.b16 %v3166
    %v3428 = vunpack.c.h.b16 %v3166
    %v3429 = vunpack.c.l.b16 %v3167
    %v3430 = vunpack.c.h.b16 %v3167
    %v3431 = vunpack.c.l.b16 %v3168
    %v3432 = vunpack.c.h.b16 %v3168
    %v3433 = vunpack.c.l.b16 %v3169
    %v3434 = vunpack.c.h.b16 %v3169
    %v3435 = vunpack.c.l.b16 %v3170
    %v3436 = vunpack.c.h.b16 %v3170
    %v3437 = vunpack.c.l.b16 %v3171
    %v3438 = vunpack.c.h.b16 %v3171
    %v3439 = vunpack.c.l.b16 %v3172
    %v3440 = vunpack.c.h.b16 %v3172
    %v3441 = vunpack.c.l.b16 %v3173
    %v3442 = vunpack.c.h.b16 %v3173
    %v3443 = vunpack.c.l.b16 %v3174
    %v3444 = vunpack.c.h.b16 %v3174
    %v3445 = vunpack.c.l.b16 %v3175
    %v3446 = vunpack.c.h.b16 %v3175
    %v3447 = vunpack.c.l.b16 %v3176
    %v3448 = vunpack.c.h.b16 %v3176
    %v3449 = vunpack.c.l.b16 %v3177
    %v3450 = vunpack.c.h.b16 %v3177
    %v3451 = vunpack.c.l.b16 %v3178
    %v3452 = vunpack.c.h.b16 %v3178
    %v3453 = vunpack.c.l.b16 %v3179
    %v3454 = vunpack.c.h.b16 %v3179
    %v3455 = vunpack.c.l.b16 %v3180
    %v3456 = vunpack.c.h.b16 %v3180
    %v3457 = vunpack.c.l.b16 %v3181
    %v3458 = vunpack.c.h.b16 %v3181
    %v3459 = vunpack.c.l.b16 %v3182
    %v3460 = vunpack.c.h.b16 %v3182
    %v3461 = vunpack.c.l.b16 %v3183
    %v3462 = vunpack.c.h.b16 %v3183
    %v3463 = vunpack.c.l.b16 %v3184
    %v3464 = vunpack.c.h.b16 %v3184
    %v3465 = vunpack.c.l.b16 %v3185
    %v3466 = vunpack.c.h.b16 %v3185
    %v3467 = vunpack.c.l.b16 %v3186
    %v3468 = vunpack.c.h.b16 %v3186
    %v3469 = vunpack.c.l.b16 %v3187
    %v3470 = vunpack.c.h.b16 %v3187
    %v3471 = vunpack.c.l.b16 %v3188
    %v3472 = vunpack.c.h.b16 %v3188
    %v3473 = vunpack.c.l.b16 %v3189
    %v3474 = vunpack.c.h.b16 %v3189
    %v3475 = vunpack.c.l.b16 %v3190
    %v3476 = vunpack.c.h.b16 %v3190
    %v3477 = vunpack.c.l.b16 %v3191
    %v3478 = vunpack.c.h.b16 %v3191
    %v3479 = vunpack.c.l.b16 %v3192
    %v3480 = vunpack.c.h.b16 %v3192
    %v3481 = vunpack.c.l.b16 %v3193
    %v3482 = vunpack.c.h.b16 %v3193
    %v3483 = vunpack.c.l.b16 %v3194
    %v3484 = vunpack.c.h.b16 %v3194
    %v3485 = vunpack.c.l.b16 %v3195
    %v3486 = vunpack.c.h.b16 %v3195
    %v3487 = vunpack.c.l.b16 %v3196
    %v3488 = vunpack.c.h.b16 %v3196
    %v3489 = vunpack.c.l.b16 %v3197
    %v3490 = vunpack.c.h.b16 %v3197
    %v3491 = vunpack.c.l.b16 %v3198
    %v3492 = vunpack.c.h.b16 %v3198
    %v3493 = vunpack.c.l.b16 %v3199
    %v3494 = vunpack.c.h.b16 %v3199
    %v3495 = vunpack.c.l.b16 %v3200
    %v3496 = vunpack.c.h.b16 %v3200
    %v3497 = vunpack.c.l.b16 %v3201
    %v3498 = vunpack.c.h.b16 %v3201
    %v3499 = vunpack.c.l.b16 %v3202
    %v3500 = vunpack.c.h.b16 %v3202
    %v3501 = vunpack.c.l.b16 %v3203
    %v3502 = vunpack.c.h.b16 %v3203
    %v3503 = vunpack.c.l.b16 %v3204
    %v3504 = vunpack.c.h.b16 %v3204
    %v3505 = vunpack.c.l.b16 %v3205
    %v3506 = vunpack.c.h.b16 %v3205
    %v3507 = vunpack.c.l.b16 %v3206
    %v3508 = vunpack.c.h.b16 %v3206
    %v3509 = vunpack.c.l.b16 %v3207
    %v3510 = vunpack.c.h.b16 %v3207
    %v3511 = vunpack.c.l.b16 %v3208
    %v3512 = vunpack.c.h.b16 %v3208
    %v3513 = vunpack.c.l.b16 %v3209
    %v3514 = vunpack.c.h.b16 %v3209
    %v3515 = vunpack.c.l.b16 %v3210
    %v3516 = vunpack.c.h.b16 %v3210
    %v3517 = vunpack.c.l.b16 %v3211
    %v3518 = vunpack.c.h.b16 %v3211
    %v3519 = vunpack.c.l.b16 %v3212
    %v3520 = vunpack.c.h.b16 %v3212
    %v3521 = vunpack.c.l.b16 %v3213
    %v3522 = vunpack.c.h.b16 %v3213
    %v3523 = vunpack.c.l.b16 %v3214
    %v3524 = vunpack.c.h.b16 %v3214
    %v3525 = vunpack.c.l.b16 %v3215
    %v3526 = vunpack.c.h.b16 %v3215
    %v3527 = vunpack.c.l.b16 %v3216
    %v3528 = vunpack.c.h.b16 %v3216
    %v3529 = vunpack.c.l.b16 %v3217
    %v3530 = vunpack.c.h.b16 %v3217
    %v3531 = vunpack.c.l.b16 %v3218
    %v3532 = vunpack.c.h.b16 %v3218
    %v3533 = vunpack.c.l.b16 %v3219
    %v3534 = vunpack.c.h.b16 %v3219
    %v3535 = vunpack.c.l.b16 %v3220
    %v3536 = vunpack.c.h.b16 %v3220
    %v3537 = vunpack.c.l.b16 %v3221
    %v3538 = vunpack.c.h.b16 %v3221
    %v3539 = vunpack.c.l.b16 %v3222
    %v3540 = vunpack.c.h.b16 %v3222
    %v3541 = vunpack.c.l.b16 %v3223
    %v3542 = vunpack.c.h.b16 %v3223
    %v3543 = vunpack.c.l.b16 %v3224
    %v3544 = vunpack.c.h.b16 %v3224
    %v3545 = vunpack.c.l.b16 %v3225
    %v3546 = vunpack.c.h.b16 %v3225
    %v3547 = vunpack.c.l.b16 %v3226
    %v3548 = vunpack.c.h.b16 %v3226
    %v3549 = vunpack.c.l.b16 %v3227
    %v3550 = vunpack.c.h.b16 %v3227
    %v3551 = vunpack.c.l.b16 %v3228
    %v3552 = vunpack.c.h.b16 %v3228
    %v3553 = vunpack.c.l.b16 %v3229
    %v3554 = vunpack.c.h.b16 %v3229
    %v3555 = vunpack.c.l.b16 %v3230
    %v3556 = vunpack.c.h.b16 %v3230
    %v3557 = vunpack.c.l.b16 %v3231
    %v3558 = vunpack.c.h.b16 %v3231
    %v3559 = vunpack.c.l.b16 %v3232
    %v3560 = vunpack.c.h.b16 %v3232
    %v3561 = vunpack.c.l.b16 %v3233
    %v3562 = vunpack.c.h.b16 %v3233
    %v3563 = vunpack.c.l.b16 %v3234
    %v3564 = vunpack.c.h.b16 %v3234
    %v3565 = vunpack.c.l.b16 %v3235
    %v3566 = vunpack.c.h.b16 %v3235
    %v3567 = vunpack.c.l.b16 %v3236
    %v3568 = vunpack.c.h.b16 %v3236
    %v3569 = vunpack.c.l.b16 %v3237
    %v3570 = vunpack.c.h.b16 %v3237
    %v3571 = vunpack.c.l.b16 %v3238
    %v3572 = vunpack.c.h.b16 %v3238
    %v3573 = vunpack.c.l.b16 %v3239
    %v3574 = vunpack.c.h.b16 %v3239
    %v3575 = vunpack.c.l.b16 %v3240
    %v3576 = vunpack.c.h.b16 %v3240
    %v3577 = vunpack.c.l.b16 %v3241
    %v3578 = vunpack.c.h.b16 %v3241
    %v3579 = vunpack.c.l.b16 %v3242
    %v3580 = vunpack.c.h.b16 %v3242
    %v3581 = vunpack.c.l.b16 %v3243
    %v3582 = vunpack.c.h.b16 %v3243
    %v3583 = vunpack.c.l.b16 %v3244
    %v3584 = vunpack.c.h.b16 %v3244
    %v3585 = vunpack.c.l.b16 %v3245
    %v3586 = vunpack.c.h.b16 %v3245
    %v3587 = vunpack.c.l.b16 %v3246
    %v3588 = vunpack.c.h.b16 %v3246
    %v3589 = vunpack.c.l.b16 %v3247
    %v3590 = vunpack.c.h.b16 %v3247
    %v3591 = vunpack.c.l.b16 %v3248
    %v3592 = vunpack.c.h.b16 %v3248
    %v3593 = vunpack.c.l.b16 %v3249
    %v3594 = vunpack.c.h.b16 %v3249
    %v3595 = vunpack.c.l.b16 %v3250
    %v3596 = vunpack.c.h.b16 %v3250
    %v3597 = vunpack.c.l.b16 %v3251
    %v3598 = vunpack.c.h.b16 %v3251
    %v3599 = vunpack.c.l.b16 %v3252
    %v3600 = vunpack.c.h.b16 %v3252
    %v3601 = vunpack.c.l.b16 %v3253
    %v3602 = vunpack.c.h.b16 %v3253
    %v3603 = vunpack.c.l.b16 %v3254
    %v3604 = vunpack.c.h.b16 %v3254
    %v3605 = vunpack.c.l.b16 %v3255
    %v3606 = vunpack.c.h.b16 %v3255
    %v3607 = vunpack.c.l.b16 %v3256
    %v3608 = vunpack.c.h.b16 %v3256
    %v3609 = vunpack.c.l.b16 %v3257
    %v3610 = vunpack.c.h.b16 %v3257
    %v3611 = vunpack.c.l.b16 %v3258
    %v3612 = vunpack.c.h.b16 %v3258
    %v3613 = vunpack.c.l.b16 %v3259
    %v3614 = vunpack.c.h.b16 %v3259
    %v3615 = vunpack.c.l.b16 %v3260
    %v3616 = vunpack.c.h.b16 %v3260
    %v3617 = vunpack.c.l.b16 %v3261
    %v3618 = vunpack.c.h.b16 %v3261
    %v3619 = vunpack.c.l.b16 %v3262
    %v3620 = vunpack.c.h.b16 %v3262
    %v3621 = vunpack.c.l.b16 %v3263
    %v3622 = vunpack.c.h.b16 %v3263
    %v3623 = vunpack.c.l.b16 %v3264
    %v3624 = vunpack.c.h.b16 %v3264
    %v3625 = vunpack.c.l.b16 %v3265
    %v3626 = vunpack.c.h.b16 %v3265
    %v3627 = vunpack.c.l.b16 %v3266
    %v3628 = vunpack.c.h.b16 %v3266
    %v3629 = vunpack.c.l.b16 %v3267
    %v3630 = vunpack.c.h.b16 %v3267
    %v3631 = vunpack.c.l.b16 %v3268
    %v3632 = vunpack.c.h.b16 %v3268
    %v3633 = vunpack.c.l.b16 %v3269
    %v3634 = vunpack.c.h.b16 %v3269
    %v3635 = vunpack.c.l.b16 %v3270
    %v3636 = vunpack.c.h.b16 %v3270
    %v3637 = vunpack.c.l.b16 %v3271
    %v3638 = vunpack.c.h.b16 %v3271
    %v3639 = vunpack.c.l.b16 %v3272
    %v3640 = vunpack.c.h.b16 %v3272
    %v3641 = vunpack.c.l.b16 %v3273
    %v3642 = vunpack.c.h.b16 %v3273
    %v3643 = vunpack.c.l.b16 %v3274
    %v3644 = vunpack.c.h.b16 %v3274
    %v3645 = vunpack.c.l.b16 %v3275
    %v3646 = vunpack.c.h.b16 %v3275
    %v3647 = vunpack.c.l.b16 %v3276
    %v3648 = vunpack.c.h.b16 %v3276
    %v3649 = vunpack.c.l.b16 %v3277
    %v3650 = vunpack.c.h.b16 %v3277
    %v3651 = vunpack.c.l.b16 %v3278
    %v3652 = vunpack.c.h.b16 %v3278
    %v3653 = vunpack.c.l.b16 %v3279
    %v3654 = vunpack.c.h.b16 %v3279
    %v3655 = vunpack.c.l.b16 %v3280
    %v3656 = vunpack.c.h.b16 %v3280
    %v3657 = vunpack.c.l.b16 %v3281
    %v3658 = vunpack.c.h.b16 %v3281
    %v3659 = vunpack.c.l.b16 %v3282
    %v3660 = vunpack.c.h.b16 %v3282
    %v3661 = vunpack.c.l.b16 %v3283
    %v3662 = vunpack.c.h.b16 %v3283
    %v3663 = vunpack.c.l.b16 %v3284
    %v3664 = vunpack.c.h.b16 %v3284
    %v3665 = vunpack.c.l.b16 %v3285
    %v3666 = vunpack.c.h.b16 %v3285
    %v3667 = vunpack.c.l.b16 %v3286
    %v3668 = vunpack.c.h.b16 %v3286
    %v3669 = vunpack.c.l.b16 %v3287
    %v3670 = vunpack.c.h.b16 %v3287
    %v3671 = vunpack.c.l.b16 %v3288
    %v3672 = vunpack.c.h.b16 %v3288
    %v3673 = vpack.c.b16 %v3417, %v3417
    %v3674 = vpack.c.b16 %v3418, %v3418
    %v3675 = vpack.c.b16 %v3419, %v3419
    %v3676 = vpack.c.b16 %v3420, %v3420
    %v3677 = vpack.c.b16 %v3421, %v3421
    %v3678 = vpack.c.b16 %v3422, %v3422
    %v3679 = vpack.c.b16 %v3423, %v3423
    %v3680 = vpack.c.b16 %v3424, %v3424
    %v3681 = vpack.c.b16 %v3425, %v3425
    %v3682 = vpack.c.b16 %v3426, %v3426
    %v3683 = vpack.c.b16 %v3427, %v3427
    %v3684 = vpack.c.b16 %v3428, %v3428
    %v3685 = vpack.c.b16 %v3429, %v3429
    %v3686 = vpack.c.b16 %v3430, %v3430
    %v3687 = vpack.c.b16 %v3431, %v3431
    %v3688 = vpack.c.b16 %v3432, %v3432
    %v3689 = vpack.c.b16 %v3433, %v3433
    %v3690 = vpack.c.b16 %v3434, %v3434
    %v3691 = vpack.c.b16 %v3435, %v3435
    %v3692 = vpack.c.b16 %v3436, %v3436
    %v3693 = vpack.c.b16 %v3437, %v3437
    %v3694 = vpack.c.b16 %v3438, %v3438
    %v3695 = vpack.c.b16 %v3439, %v3439
    %v3696 = vpack.c.b16 %v3440, %v3440
    %v3697 = vpack.c.b16 %v3441, %v3441
    %v3698 = vpack.c.b16 %v3442, %v3442
    %v3699 = vpack.c.b16 %v3443, %v3443
    %v3700 = vpack.c.b16 %v3444, %v3444
    %v3701 = vpack.c.b16 %v3445, %v3445
    %v3702 = vpack.c.b16 %v3446, %v3446
    %v3703 = vpack.c.b16 %v3447, %v3447
    %v3704 = vpack.c.b16 %v3448, %v3448
    %v3705 = vpack.c.b16 %v3449, %v3449
    %v3706 = vpack.c.b16 %v3450, %v3450
    %v3707 = vpack.c.b16 %v3451, %v3451
    %v3708 = vpack.c.b16 %v3452, %v3452
    %v3709 = vpack.c.b16 %v3453, %v3453
    %v3710 = vpack.c.b16 %v3454, %v3454
    %v3711 = vpack.c.b16 %v3455, %v3455
    %v3712 = vpack.c.b16 %v3456, %v3456
    %v3713 = vpack.c.b16 %v3457, %v3457
    %v3714 = vpack.c.b16 %v3458, %v3458
    %v3715 = vpack.c.b16 %v3459, %v3459
    %v3716 = vpack.c.b16 %v3460, %v3460
    %v3717 = vpack.c.b16 %v3461, %v3461
    %v3718 = vpack.c.b16 %v3462, %v3462
    %v3719 = vpack.c.b16 %v3463, %v3463
    %v3720 = vpack.c.b16 %v3464, %v3464
    %v3721 = vpack.c.b16 %v3465, %v3465
    %v3722 = vpack.c.b16 %v3466, %v3466
    %v3723 = vpack.c.b16 %v3467, %v3467
    %v3724 = vpack.c.b16 %v3468, %v3468
    %v3725 = vpack.c.b16 %v3469, %v3469
    %v3726 = vpack.c.b16 %v3470, %v3470
    %v3727 = vpack.c.b16 %v3471, %v3471
    %v3728 = vpack.c.b16 %v3472, %v3472
    %v3729 = vpack.c.b16 %v3473, %v3473
    %v3730 = vpack.c.b16 %v3474, %v3474
    %v3731 = vpack.c.b16 %v3475, %v3475
    %v3732 = vpack.c.b16 %v3476, %v3476
    %v3733 = vpack.c.b16 %v3477, %v3477
    %v3734 = vpack.c.b16 %v3478, %v3478
    %v3735 = vpack.c.b16 %v3479, %v3479
    %v3736 = vpack.c.b16 %v3480, %v3480
    %v3737 = vpack.c.b16 %v3481, %v3481
    %v3738 = vpack.c.b16 %v3482, %v3482
    %v3739 = vpack.c.b16 %v3483, %v3483
    %v3740 = vpack.c.b16 %v3484, %v3484
    %v3741 = vpack.c.b16 %v3485, %v3485
    %v3742 = vpack.c.b16 %v3486, %v3486
    %v3743 = vpack.c.b16 %v3487, %v3487
    %v3744 = vpack.c.b16 %v3488, %v3488
    %v3745 = vpack.c.b16 %v3489, %v3489
    %v3746 = vpack.c.b16 %v3490, %v3490
    %v3747 = vpack.c.b16 %v3491, %v3491
    %v3748 = vpack.c.b16 %v3492, %v3492
    %v3749 = vpack.c.b16 %v3493, %v3493
    %v3750 = vpack.c.b16 %v3494, %v3494
    %v3751 = vpack.c.b16 %v3495, %v3495
    %v3752 = vpack.c.b16 %v3496, %v3496
    %v3753 = vpack.c.b16 %v3497, %v3497
    %v3754 = vpack.c.b16 %v3498, %v3498
    %v3755 = vpack.c.b16 %v3499, %v3499
    %v3756 = vpack.c.b16 %v3500, %v3500
    %v3757 = vpack.c.b16 %v3501, %v3501
    %v3758 = vpack.c.b16 %v3502, %v3502
    %v3759 = vpack.c.b16 %v3503, %v3503
    %v3760 = vpack.c.b16 %v3504, %v3504
    %v3761 = vpack.c.b16 %v3505, %v3505
    %v3762 = vpack.c.b16 %v3506, %v3506
    %v3763 = vpack.c.b16 %v3507, %v3507
    %v3764 = vpack.c.b16 %v3508, %v3508
    %v3765 = vpack.c.b16 %v3509, %v3509
    %v3766 = vpack.c.b16 %v3510, %v3510
    %v3767 = vpack.c.b16 %v3511, %v3511
    %v3768 = vpack.c.b16 %v3512, %v3512
    %v3769 = vpack.c.b16 %v3513, %v3513
    %v3770 = vpack.c.b16 %v3514, %v3514
    %v3771 = vpack.c.b16 %v3515, %v3515
    %v3772 = vpack.c.b16 %v3516, %v3516
    %v3773 = vpack.c.b16 %v3517, %v3517
    %v3774 = vpack.c.b16 %v3518, %v3518
    %v3775 = vpack.c.b16 %v3519, %v3519
    %v3776 = vpack.c.b16 %v3520, %v3520
    %v3777 = vpack.c.b16 %v3521, %v3521
    %v3778 = vpack.c.b16 %v3522, %v3522
    %v3779 = vpack.c.b16 %v3523, %v3523
    %v3780 = vpack.c.b16 %v3524, %v3524
    %v3781 = vpack.c.b16 %v3525, %v3525
    %v3782 = vpack.c.b16 %v3526, %v3526
    %v3783 = vpack.c.b16 %v3527, %v3527
    %v3784 = vpack.c.b16 %v3528, %v3528
    %v3785 = vpack.c.b16 %v3529, %v3529
    %v3786 = vpack.c.b16 %v3530, %v3530
    %v3787 = vpack.c.b16 %v3531, %v3531
    %v3788 = vpack.c.b16 %v3532, %v3532
    %v3789 = vpack.c.b16 %v3533, %v3533
    %v3790 = vpack.c.b16 %v3534, %v3534
    %v3791 = vpack.c.b16 %v3535, %v3535
    %v3792 = vpack.c.b16 %v3536, %v3536
    %v3793 = vpack.c.b16 %v3537, %v3537
    %v3794 = vpack.c.b16 %v3538, %v3538
    %v3795 = vpack.c.b16 %v3539, %v3539
    %v3796 = vpack.c.b16 %v3540, %v3540
    %v3797 = vpack.c.b16 %v3541, %v3541
    %v3798 = vpack.c.b16 %v3542, %v3542
    %v3799 = vpack.c.b16 %v3543, %v3543
    %v3800 = vpack.c.b16 %v3544, %v3544
    %v3801 = vpack.c.b16 %v3545, %v3545
    %v3802 = vpack.c.b16 %v3546, %v3546
    %v3803 = vpack.c.b16 %v3547, %v3547
    %v3804 = vpack.c.b16 %v3548, %v3548
    %v3805 = vpack.c.b16 %v3549, %v3549
    %v3806 = vpack.c.b16 %v3550, %v3550
    %v3807 = vpack.c.b16 %v3551, %v3551
    %v3808 = vpack.c.b16 %v3552, %v3552
    %v3809 = vpack.c.b16 %v3553, %v3553
    %v3810 = vpack.c.b16 %v3554, %v3554
    %v3811 = vpack.c.b16 %v3555, %v3555
    %v3812 = vpack.c.b16 %v3556, %v3556
    %v3813 = vpack.c.b16 %v3557, %v3557
    %v3814 = vpack.c.b16 %v3558, %v3558
    %v3815 = vpack.c.b16 %v3559, %v3559
    %v3816 = vpack.c.b16 %v3560, %v3560
    %v3817 = vpack.c.b16 %v3561, %v3561
    %v3818 = vpack.c.b16 %v3562, %v3562
    %v3819 = vpack.c.b16 %v3563, %v3563
    %v3820 = vpack.c.b16 %v3564, %v3564
    %v3821 = vpack.c.b16 %v3565, %v3565
    %v3822 = vpack.c.b16 %v3566, %v3566
    %v3823 = vpack.c.b16 %v3567, %v3567
    %v3824 = vpack.c.b16 %v3568, %v3568
    %v3825 = vpack.c.b16 %v3569, %v3569
    %v3826 = vpack.c.b16 %v3570, %v3570
    %v3827 = vpack.c.b16 %v3571, %v3571
    %v3828 = vpack.c.b16 %v3572, %v3572
    %v3829 = vpack.c.b16 %v3573, %v3573
    %v3830 = vpack.c.b16 %v3574, %v3574
    %v3831 = vpack.c.b16 %v3575, %v3575
    %v3832 = vpack.c.b16 %v3576, %v3576
    %v3833 = vpack.c.b16 %v3577, %v3577
    %v3834 = vpack.c.b16 %v3578, %v3578
    %v3835 = vpack.c.b16 %v3579, %v3579
    %v3836 = vpack.c.b16 %v3580, %v3580
    %v3837 = vpack.c.b16 %v3581, %v3581
    %v3838 = vpack.c.b16 %v3582, %v3582
    %v3839 = vpack.c.b16 %v3583, %v3583
    %v3840 = vpack.c.b16 %v3584, %v3584
    %v3841 = vpack.c.b16 %v3585, %v3585
    %v3842 = vpack.c.b16 %v3586, %v3586
    %v3843 = vpack.c.b16 %v3587, %v3587
    %v3844 = vpack.c.b16 %v3588, %v3588
    %v3845 = vpack.c.b16 %v3589, %v3589
    %v3846 = vpack.c.b16 %v3590, %v3590
    %v3847 = vpack.c.b16 %v3591, %v3591
    %v3848 = vpack.c.b16 %v3592, %v3592
    %v3849 = vpack.c.b16 %v3593, %v3593
    %v3850 = vpack.c.b16 %v3594, %v3594
    %v3851 = vpack.c.b16 %v3595, %v3595
    %v3852 = vpack.c.b16 %v3596, %v3596
    %v3853 = vpack.c.b16 %v3597, %v3597
    %v3854 = vpack.c.b16 %v3598, %v3598
    %v3855 = vpack.c.b16 %v3599, %v3599
    %v3856 = vpack.c.b16 %v3600, %v3600
    %v3857 = vpack.c.b16 %v3601, %v3601
    %v3858 = vpack.c.b16 %v3602, %v3602
    %v3859 = vpack.c.b16 %v3603, %v3603
    %v3860 = vpack.c.b16 %v3604, %v3604
    %v3861 = vpack.c.b16 %v3605, %v3605
    %v3862 = vpack.c.b16 %v3606, %v3606
    %v3863 = vpack.c.b16 %v3607, %v3607
    %v3864 = vpack.c.b16 %v3608, %v3608
    %v3865 = vpack.c.b16 %v3609, %v3609
    %v3866 = vpack.c.b16 %v3610, %v3610
    %v3867 = vpack.c.b16 %v3611, %v3611
    %v3868 = vpack.c.b16 %v3612, %v3612
    %v3869 = vpack.c.b16 %v3613, %v3613
    %v3870 = vpack.c.b16 %v3614, %v3614
    %v3871 = vpack.c.b16 %v3615, %v3615
    %v3872 = vpack.c.b16 %v3616, %v3616
    %v3873 = vpack.c.b16 %v3617, %v3617
    %v3874 = vpack.c.b16 %v3618, %v3618
    %v3875 = vpack.c.b16 %v3619, %v3619
    %v3876 = vpack.c.b16 %v3620, %v3620
    %v3877 = vpack.c.b16 %v3621, %v3621
    %v3878 = vpack.c.b16 %v3622, %v3622
    %v3879 = vpack.c.b16 %v3623, %v3623
    %v3880 = vpack.c.b16 %v3624, %v3624
    %v3881 = vpack.c.b16 %v3625, %v3625
    %v3882 = vpack.c.b16 %v3626, %v3626
    %v3883 = vpack.c.b16 %v3627, %v3627
    %v3884 = vpack.c.b16 %v3628, %v3628
    %v3885 = vpack.c.b16 %v3629, %v3629
    %v3886 = vpack.c.b16 %v3630, %v3630
    %v3887 = vpack.c.b16 %v3631, %v3631
    %v3888 = vpack.c.b16 %v3632, %v3632
    %v3889 = vpack.c.b16 %v3633, %v3633
    %v3890 = vpack.c.b16 %v3634, %v3634
    %v3891 = vpack.c.b16 %v3635, %v3635
    %v3892 = vpack.c.b16 %v3636, %v3636
    %v3893 = vpack.c.b16 %v3637, %v3637
    %v3894 = vpack.c.b16 %v3638, %v3638
    %v3895 = vpack.c.b16 %v3639, %v3639
    %v3896 = vpack.c.b16 %v3640, %v3640
    %v3897 = vpack.c.b16 %v3641, %v3641
    %v3898 = vpack.c.b16 %v3642, %v3642
    %v3899 = vpack.c.b16 %v3643, %v3643
    %v3900 = vpack.c.b16 %v3644, %v3644
    %v3901 = vpack.c.b16 %v3645, %v3645
    %v3902 = vpack.c.b16 %v3646, %v3646
    %v3903 = vpack.c.b16 %v3647, %v3647
    %v3904 = vpack.c.b16 %v3648, %v3648
    %v3905 = vpack.c.b16 %v3649, %v3649
    %v3906 = vpack.c.b16 %v3650, %v3650
    %v3907 = vpack.c.b16 %v3651, %v3651
    %v3908 = vpack.c.b16 %v3652, %v3652
    %v3909 = vpack.c.b16 %v3653, %v3653
    %v3910 = vpack.c.b16 %v3654, %v3654
    %v3911 = vpack.c.b16 %v3655, %v3655
    %v3912 = vpack.c.b16 %v3656, %v3656
    %v3913 = vpack.c.b16 %v3657, %v3657
    %v3914 = vpack.c.b16 %v3658, %v3658
    %v3915 = vpack.c.b16 %v3659, %v3659
    %v3916 = vpack.c.b16 %v3660, %v3660
    %v3917 = vpack.c.b16 %v3661, %v3661
    %v3918 = vpack.c.b16 %v3662, %v3662
    %v3919 = vpack.c.b16 %v3663, %v3663
    %v3920 = vpack.c.b16 %v3664, %v3664
    %v3921 = vpack.c.b16 %v3665, %v3665
    %v3922 = vpack.c.b16 %v3666, %v3666
    %v3923 = vpack.c.b16 %v3667, %v3667
    %v3924 = vpack.c.b16 %v3668, %v3668
    %v3925 = vpack.c.b16 %v3669, %v3669
    %v3926 = vpack.c.b16 %v3670, %v3670
    %v3927 = vpack.c.b16 %v3671, %v3671
    %v3928 = vpack.c.b16 %v3672, %v3672
    %vm4185 = vcmask 519168
    %4186 = vst.msk [vmem:[#allocation2] sm:$0xf] %vm4185, %v3673
    %4187 = vst.msk [vmem:[#allocation2 + $0x4] sm:$0xf] %vm4185, %v3674
    %4188 = vst.msk [vmem:[#allocation2 + $0x8] sm:$0xf] %vm4185, %v3675
    %4189 = vst.msk [vmem:[#allocation2 + $0xc] sm:$0xf] %vm4185, %v3676
    %4190 = vst.msk [vmem:[#allocation2 + $0x10] sm:$0xf] %vm4185, %v3677
    %4191 = vst.msk [vmem:[#allocation2 + $0x14] sm:$0xf] %vm4185, %v3678
    %4192 = vst.msk [vmem:[#allocation2 + $0x18] sm:$0xf] %vm4185, %v3679
    %4193 = vst.msk [vmem:[#allocation2 + $0x1c] sm:$0xf] %vm4185, %v3680
    %4194 = vst.msk [vmem:[#allocation2 + $0x20] sm:$0xf] %vm4185, %v3681
    %4195 = vst.msk [vmem:[#allocation2 + $0x24] sm:$0xf] %vm4185, %v3682
    %4196 = vst.msk [vmem:[#allocation2 + $0x28] sm:$0xf] %vm4185, %v3683
    %4197 = vst.msk [vmem:[#allocation2 + $0x2c] sm:$0xf] %vm4185, %v3684
    %4198 = vst.msk [vmem:[#allocation2 + $0x30] sm:$0xf] %vm4185, %v3685
    %4199 = vst.msk [vmem:[#allocation2 + $0x34] sm:$0xf] %vm4185, %v3686
    %4200 = vst.msk [vmem:[#allocation2 + $0x38] sm:$0xf] %vm4185, %v3687
    %4201 = vst.msk [vmem:[#allocation2 + $0x3c] sm:$0xf] %vm4185, %v3688
    %4202 = vst.msk [vmem:[#allocation2 + $0x40] sm:$0xf] %vm4185, %v3689
    %4203 = vst.msk [vmem:[#allocation2 + $0x44] sm:$0xf] %vm4185, %v3690
    %4204 = vst.msk [vmem:[#allocation2 + $0x48] sm:$0xf] %vm4185, %v3691
    %4205 = vst.msk [vmem:[#allocation2 + $0x4c] sm:$0xf] %vm4185, %v3692
    %4206 = vst.msk [vmem:[#allocation2 + $0x50] sm:$0xf] %vm4185, %v3693
    %4207 = vst.msk [vmem:[#allocation2 + $0x54] sm:$0xf] %vm4185, %v3694
    %4208 = vst.msk [vmem:[#allocation2 + $0x58] sm:$0xf] %vm4185, %v3695
    %4209 = vst.msk [vmem:[#allocation2 + $0x5c] sm:$0xf] %vm4185, %v3696
    %4210 = vst.msk [vmem:[#allocation2 + $0x60] sm:$0xf] %vm4185, %v3697
    %4211 = vst.msk [vmem:[#allocation2 + $0x64] sm:$0xf] %vm4185, %v3698
    %4212 = vst.msk [vmem:[#allocation2 + $0x68] sm:$0xf] %vm4185, %v3699
    %4213 = vst.msk [vmem:[#allocation2 + $0x6c] sm:$0xf] %vm4185, %v3700
    %4214 = vst.msk [vmem:[#allocation2 + $0x70] sm:$0xf] %vm4185, %v3701
    %4215 = vst.msk [vmem:[#allocation2 + $0x74] sm:$0xf] %vm4185, %v3702
    %4216 = vst.msk [vmem:[#allocation2 + $0x78] sm:$0xf] %vm4185, %v3703
    %4217 = vst.msk [vmem:[#allocation2 + $0x7c] sm:$0xf] %vm4185, %v3704
    %4218 = vst.msk [vmem:[#allocation2 + $0x80] sm:$0xf] %vm4185, %v3705
    %4219 = vst.msk [vmem:[#allocation2 + $0x84] sm:$0xf] %vm4185, %v3706
    %4220 = vst.msk [vmem:[#allocation2 + $0x88] sm:$0xf] %vm4185, %v3707
    %4221 = vst.msk [vmem:[#allocation2 + $0x8c] sm:$0xf] %vm4185, %v3708
    %4222 = vst.msk [vmem:[#allocation2 + $0x90] sm:$0xf] %vm4185, %v3709
    %4223 = vst.msk [vmem:[#allocation2 + $0x94] sm:$0xf] %vm4185, %v3710
    %4224 = vst.msk [vmem:[#allocation2 + $0x98] sm:$0xf] %vm4185, %v3711
    %4225 = vst.msk [vmem:[#allocation2 + $0x9c] sm:$0xf] %vm4185, %v3712
    %4226 = vst.msk [vmem:[#allocation2 + $0xa0] sm:$0xf] %vm4185, %v3713
    %4227 = vst.msk [vmem:[#allocation2 + $0xa4] sm:$0xf] %vm4185, %v3714
    %4228 = vst.msk [vmem:[#allocation2 + $0xa8] sm:$0xf] %vm4185, %v3715
    %4229 = vst.msk [vmem:[#allocation2 + $0xac] sm:$0xf] %vm4185, %v3716
    %4230 = vst.msk [vmem:[#allocation2 + $0xb0] sm:$0xf] %vm4185, %v3717
    %4231 = vst.msk [vmem:[#allocation2 + $0xb4] sm:$0xf] %vm4185, %v3718
    %4232 = vst.msk [vmem:[#allocation2 + $0xb8] sm:$0xf] %vm4185, %v3719
    %4233 = vst.msk [vmem:[#allocation2 + $0xbc] sm:$0xf] %vm4185, %v3720
    %4234 = vst.msk [vmem:[#allocation2 + $0xc0] sm:$0xf] %vm4185, %v3721
    %4235 = vst.msk [vmem:[#allocation2 + $0xc4] sm:$0xf] %vm4185, %v3722
    %4236 = vst.msk [vmem:[#allocation2 + $0xc8] sm:$0xf] %vm4185, %v3723
    %4237 = vst.msk [vmem:[#allocation2 + $0xcc] sm:$0xf] %vm4185, %v3724
    %4238 = vst.msk [vmem:[#allocation2 + $0xd0] sm:$0xf] %vm4185, %v3725
    %4239 = vst.msk [vmem:[#allocation2 + $0xd4] sm:$0xf] %vm4185, %v3726
    %4240 = vst.msk [vmem:[#allocation2 + $0xd8] sm:$0xf] %vm4185, %v3727
    %4241 = vst.msk [vmem:[#allocation2 + $0xdc] sm:$0xf] %vm4185, %v3728
    %4242 = vst.msk [vmem:[#allocation2 + $0xe0] sm:$0xf] %vm4185, %v3729
    %4243 = vst.msk [vmem:[#allocation2 + $0xe4] sm:$0xf] %vm4185, %v3730
    %4244 = vst.msk [vmem:[#allocation2 + $0xe8] sm:$0xf] %vm4185, %v3731
    %4245 = vst.msk [vmem:[#allocation2 + $0xec] sm:$0xf] %vm4185, %v3732
    %4246 = vst.msk [vmem:[#allocation2 + $0xf0] sm:$0xf] %vm4185, %v3733
    %4247 = vst.msk [vmem:[#allocation2 + $0xf4] sm:$0xf] %vm4185, %v3734
    %4248 = vst.msk [vmem:[#allocation2 + $0xf8] sm:$0xf] %vm4185, %v3735
    %4249 = vst.msk [vmem:[#allocation2 + $0xfc] sm:$0xf] %vm4185, %v3736
    %4250 = vst.msk [vmem:[#allocation2 + $0x100] sm:$0xf] %vm4185, %v3737
    %4251 = vst.msk [vmem:[#allocation2 + $0x104] sm:$0xf] %vm4185, %v3738
    %4252 = vst.msk [vmem:[#allocation2 + $0x108] sm:$0xf] %vm4185, %v3739
    %4253 = vst.msk [vmem:[#allocation2 + $0x10c] sm:$0xf] %vm4185, %v3740
    %4254 = vst.msk [vmem:[#allocation2 + $0x110] sm:$0xf] %vm4185, %v3741
    %4255 = vst.msk [vmem:[#allocation2 + $0x114] sm:$0xf] %vm4185, %v3742
    %4256 = vst.msk [vmem:[#allocation2 + $0x118] sm:$0xf] %vm4185, %v3743
    %4257 = vst.msk [vmem:[#allocation2 + $0x11c] sm:$0xf] %vm4185, %v3744
    %4258 = vst.msk [vmem:[#allocation2 + $0x120] sm:$0xf] %vm4185, %v3745
    %4259 = vst.msk [vmem:[#allocation2 + $0x124] sm:$0xf] %vm4185, %v3746
    %4260 = vst.msk [vmem:[#allocation2 + $0x128] sm:$0xf] %vm4185, %v3747
    %4261 = vst.msk [vmem:[#allocation2 + $0x12c] sm:$0xf] %vm4185, %v3748
    %4262 = vst.msk [vmem:[#allocation2 + $0x130] sm:$0xf] %vm4185, %v3749
    %4263 = vst.msk [vmem:[#allocation2 + $0x134] sm:$0xf] %vm4185, %v3750
    %4264 = vst.msk [vmem:[#allocation2 + $0x138] sm:$0xf] %vm4185, %v3751
    %4265 = vst.msk [vmem:[#allocation2 + $0x13c] sm:$0xf] %vm4185, %v3752
    %4266 = vst.msk [vmem:[#allocation2 + $0x140] sm:$0xf] %vm4185, %v3753
    %4267 = vst.msk [vmem:[#allocation2 + $0x144] sm:$0xf] %vm4185, %v3754
    %4268 = vst.msk [vmem:[#allocation2 + $0x148] sm:$0xf] %vm4185, %v3755
    %4269 = vst.msk [vmem:[#allocation2 + $0x14c] sm:$0xf] %vm4185, %v3756
    %4270 = vst.msk [vmem:[#allocation2 + $0x150] sm:$0xf] %vm4185, %v3757
    %4271 = vst.msk [vmem:[#allocation2 + $0x154] sm:$0xf] %vm4185, %v3758
    %4272 = vst.msk [vmem:[#allocation2 + $0x158] sm:$0xf] %vm4185, %v3759
    %4273 = vst.msk [vmem:[#allocation2 + $0x15c] sm:$0xf] %vm4185, %v3760
    %4274 = vst.msk [vmem:[#allocation2 + $0x160] sm:$0xf] %vm4185, %v3761
    %4275 = vst.msk [vmem:[#allocation2 + $0x164] sm:$0xf] %vm4185, %v3762
    %4276 = vst.msk [vmem:[#allocation2 + $0x168] sm:$0xf] %vm4185, %v3763
    %4277 = vst.msk [vmem:[#allocation2 + $0x16c] sm:$0xf] %vm4185, %v3764
    %4278 = vst.msk [vmem:[#allocation2 + $0x170] sm:$0xf] %vm4185, %v3765
    %4279 = vst.msk [vmem:[#allocation2 + $0x174] sm:$0xf] %vm4185, %v3766
    %4280 = vst.msk [vmem:[#allocation2 + $0x178] sm:$0xf] %vm4185, %v3767
    %4281 = vst.msk [vmem:[#allocation2 + $0x17c] sm:$0xf] %vm4185, %v3768
    %4282 = vst.msk [vmem:[#allocation2 + $0x180] sm:$0xf] %vm4185, %v3769
    %4283 = vst.msk [vmem:[#allocation2 + $0x184] sm:$0xf] %vm4185, %v3770
    %4284 = vst.msk [vmem:[#allocation2 + $0x188] sm:$0xf] %vm4185, %v3771
    %4285 = vst.msk [vmem:[#allocation2 + $0x18c] sm:$0xf] %vm4185, %v3772
    %4286 = vst.msk [vmem:[#allocation2 + $0x190] sm:$0xf] %vm4185, %v3773
    %4287 = vst.msk [vmem:[#allocation2 + $0x194] sm:$0xf] %vm4185, %v3774
    %4288 = vst.msk [vmem:[#allocation2 + $0x198] sm:$0xf] %vm4185, %v3775
    %4289 = vst.msk [vmem:[#allocation2 + $0x19c] sm:$0xf] %vm4185, %v3776
    %4290 = vst.msk [vmem:[#allocation2 + $0x1a0] sm:$0xf] %vm4185, %v3777
    %4291 = vst.msk [vmem:[#allocation2 + $0x1a4] sm:$0xf] %vm4185, %v3778
    %4292 = vst.msk [vmem:[#allocation2 + $0x1a8] sm:$0xf] %vm4185, %v3779
    %4293 = vst.msk [vmem:[#allocation2 + $0x1ac] sm:$0xf] %vm4185, %v3780
    %4294 = vst.msk [vmem:[#allocation2 + $0x1b0] sm:$0xf] %vm4185, %v3781
    %4295 = vst.msk [vmem:[#allocation2 + $0x1b4] sm:$0xf] %vm4185, %v3782
    %4296 = vst.msk [vmem:[#allocation2 + $0x1b8] sm:$0xf] %vm4185, %v3783
    %4297 = vst.msk [vmem:[#allocation2 + $0x1bc] sm:$0xf] %vm4185, %v3784
    %4298 = vst.msk [vmem:[#allocation2 + $0x1c0] sm:$0xf] %vm4185, %v3785
    %4299 = vst.msk [vmem:[#allocation2 + $0x1c4] sm:$0xf] %vm4185, %v3786
    %4300 = vst.msk [vmem:[#allocation2 + $0x1c8] sm:$0xf] %vm4185, %v3787
    %4301 = vst.msk [vmem:[#allocation2 + $0x1cc] sm:$0xf] %vm4185, %v3788
    %4302 = vst.msk [vmem:[#allocation2 + $0x1d0] sm:$0xf] %vm4185, %v3789
    %4303 = vst.msk [vmem:[#allocation2 + $0x1d4] sm:$0xf] %vm4185, %v3790
    %4304 = vst.msk [vmem:[#allocation2 + $0x1d8] sm:$0xf] %vm4185, %v3791
    %4305 = vst.msk [vmem:[#allocation2 + $0x1dc] sm:$0xf] %vm4185, %v3792
    %4306 = vst.msk [vmem:[#allocation2 + $0x1e0] sm:$0xf] %vm4185, %v3793
    %4307 = vst.msk [vmem:[#allocation2 + $0x1e4] sm:$0xf] %vm4185, %v3794
    %4308 = vst.msk [vmem:[#allocation2 + $0x1e8] sm:$0xf] %vm4185, %v3795
    %4309 = vst.msk [vmem:[#allocation2 + $0x1ec] sm:$0xf] %vm4185, %v3796
    %4310 = vst.msk [vmem:[#allocation2 + $0x1f0] sm:$0xf] %vm4185, %v3797
    %4311 = vst.msk [vmem:[#allocation2 + $0x1f4] sm:$0xf] %vm4185, %v3798
    %4312 = vst.msk [vmem:[#allocation2 + $0x1f8] sm:$0xf] %vm4185, %v3799
    %4313 = vst.msk [vmem:[#allocation2 + $0x1fc] sm:$0xf] %vm4185, %v3800
    %4314 = vst.msk [vmem:[#allocation2 + $0x200] sm:$0xf] %vm4185, %v3801
    %4315 = vst.msk [vmem:[#allocation2 + $0x204] sm:$0xf] %vm4185, %v3802
    %4316 = vst.msk [vmem:[#allocation2 + $0x208] sm:$0xf] %vm4185, %v3803
    %4317 = vst.msk [vmem:[#allocation2 + $0x20c] sm:$0xf] %vm4185, %v3804
    %4318 = vst.msk [vmem:[#allocation2 + $0x210] sm:$0xf] %vm4185, %v3805
    %4319 = vst.msk [vmem:[#allocation2 + $0x214] sm:$0xf] %vm4185, %v3806
    %4320 = vst.msk [vmem:[#allocation2 + $0x218] sm:$0xf] %vm4185, %v3807
    %4321 = vst.msk [vmem:[#allocation2 + $0x21c] sm:$0xf] %vm4185, %v3808
    %4322 = vst.msk [vmem:[#allocation2 + $0x220] sm:$0xf] %vm4185, %v3809
    %4323 = vst.msk [vmem:[#allocation2 + $0x224] sm:$0xf] %vm4185, %v3810
    %4324 = vst.msk [vmem:[#allocation2 + $0x228] sm:$0xf] %vm4185, %v3811
    %4325 = vst.msk [vmem:[#allocation2 + $0x22c] sm:$0xf] %vm4185, %v3812
    %4326 = vst.msk [vmem:[#allocation2 + $0x230] sm:$0xf] %vm4185, %v3813
    %4327 = vst.msk [vmem:[#allocation2 + $0x234] sm:$0xf] %vm4185, %v3814
    %4328 = vst.msk [vmem:[#allocation2 + $0x238] sm:$0xf] %vm4185, %v3815
    %4329 = vst.msk [vmem:[#allocation2 + $0x23c] sm:$0xf] %vm4185, %v3816
    %4330 = vst.msk [vmem:[#allocation2 + $0x240] sm:$0xf] %vm4185, %v3817
    %4331 = vst.msk [vmem:[#allocation2 + $0x244] sm:$0xf] %vm4185, %v3818
    %4332 = vst.msk [vmem:[#allocation2 + $0x248] sm:$0xf] %vm4185, %v3819
    %4333 = vst.msk [vmem:[#allocation2 + $0x24c] sm:$0xf] %vm4185, %v3820
    %4334 = vst.msk [vmem:[#allocation2 + $0x250] sm:$0xf] %vm4185, %v3821
    %4335 = vst.msk [vmem:[#allocation2 + $0x254] sm:$0xf] %vm4185, %v3822
    %4336 = vst.msk [vmem:[#allocation2 + $0x258] sm:$0xf] %vm4185, %v3823
    %4337 = vst.msk [vmem:[#allocation2 + $0x25c] sm:$0xf] %vm4185, %v3824
    %4338 = vst.msk [vmem:[#allocation2 + $0x260] sm:$0xf] %vm4185, %v3825
    %4339 = vst.msk [vmem:[#allocation2 + $0x264] sm:$0xf] %vm4185, %v3826
    %4340 = vst.msk [vmem:[#allocation2 + $0x268] sm:$0xf] %vm4185, %v3827
    %4341 = vst.msk [vmem:[#allocation2 + $0x26c] sm:$0xf] %vm4185, %v3828
    %4342 = vst.msk [vmem:[#allocation2 + $0x270] sm:$0xf] %vm4185, %v3829
    %4343 = vst.msk [vmem:[#allocation2 + $0x274] sm:$0xf] %vm4185, %v3830
    %4344 = vst.msk [vmem:[#allocation2 + $0x278] sm:$0xf] %vm4185, %v3831
    %4345 = vst.msk [vmem:[#allocation2 + $0x27c] sm:$0xf] %vm4185, %v3832
    %4346 = vst.msk [vmem:[#allocation2 + $0x280] sm:$0xf] %vm4185, %v3833
    %4347 = vst.msk [vmem:[#allocation2 + $0x284] sm:$0xf] %vm4185, %v3834
    %4348 = vst.msk [vmem:[#allocation2 + $0x288] sm:$0xf] %vm4185, %v3835
    %4349 = vst.msk [vmem:[#allocation2 + $0x28c] sm:$0xf] %vm4185, %v3836
    %4350 = vst.msk [vmem:[#allocation2 + $0x290] sm:$0xf] %vm4185, %v3837
    %4351 = vst.msk [vmem:[#allocation2 + $0x294] sm:$0xf] %vm4185, %v3838
    %4352 = vst.msk [vmem:[#allocation2 + $0x298] sm:$0xf] %vm4185, %v3839
    %4353 = vst.msk [vmem:[#allocation2 + $0x29c] sm:$0xf] %vm4185, %v3840
    %4354 = vst.msk [vmem:[#allocation2 + $0x2a0] sm:$0xf] %vm4185, %v3841
    %4355 = vst.msk [vmem:[#allocation2 + $0x2a4] sm:$0xf] %vm4185, %v3842
    %4356 = vst.msk [vmem:[#allocation2 + $0x2a8] sm:$0xf] %vm4185, %v3843
    %4357 = vst.msk [vmem:[#allocation2 + $0x2ac] sm:$0xf] %vm4185, %v3844
    %4358 = vst.msk [vmem:[#allocation2 + $0x2b0] sm:$0xf] %vm4185, %v3845
    %4359 = vst.msk [vmem:[#allocation2 + $0x2b4] sm:$0xf] %vm4185, %v3846
    %4360 = vst.msk [vmem:[#allocation2 + $0x2b8] sm:$0xf] %vm4185, %v3847
    %4361 = vst.msk [vmem:[#allocation2 + $0x2bc] sm:$0xf] %vm4185, %v3848
    %4362 = vst.msk [vmem:[#allocation2 + $0x2c0] sm:$0xf] %vm4185, %v3849
    %4363 = vst.msk [vmem:[#allocation2 + $0x2c4] sm:$0xf] %vm4185, %v3850
    %4364 = vst.msk [vmem:[#allocation2 + $0x2c8] sm:$0xf] %vm4185, %v3851
    %4365 = vst.msk [vmem:[#allocation2 + $0x2cc] sm:$0xf] %vm4185, %v3852
    %4366 = vst.msk [vmem:[#allocation2 + $0x2d0] sm:$0xf] %vm4185, %v3853
    %4367 = vst.msk [vmem:[#allocation2 + $0x2d4] sm:$0xf] %vm4185, %v3854
    %4368 = vst.msk [vmem:[#allocation2 + $0x2d8] sm:$0xf] %vm4185, %v3855
    %4369 = vst.msk [vmem:[#allocation2 + $0x2dc] sm:$0xf] %vm4185, %v3856
    %4370 = vst.msk [vmem:[#allocation2 + $0x2e0] sm:$0xf] %vm4185, %v3857
    %4371 = vst.msk [vmem:[#allocation2 + $0x2e4] sm:$0xf] %vm4185, %v3858
    %4372 = vst.msk [vmem:[#allocation2 + $0x2e8] sm:$0xf] %vm4185, %v3859
    %4373 = vst.msk [vmem:[#allocation2 + $0x2ec] sm:$0xf] %vm4185, %v3860
    %4374 = vst.msk [vmem:[#allocation2 + $0x2f0] sm:$0xf] %vm4185, %v3861
    %4375 = vst.msk [vmem:[#allocation2 + $0x2f4] sm:$0xf] %vm4185, %v3862
    %4376 = vst.msk [vmem:[#allocation2 + $0x2f8] sm:$0xf] %vm4185, %v3863
    %4377 = vst.msk [vmem:[#allocation2 + $0x2fc] sm:$0xf] %vm4185, %v3864
    %4378 = vst.msk [vmem:[#allocation2 + $0x300] sm:$0xf] %vm4185, %v3865
    %4379 = vst.msk [vmem:[#allocation2 + $0x304] sm:$0xf] %vm4185, %v3866
    %4380 = vst.msk [vmem:[#allocation2 + $0x308] sm:$0xf] %vm4185, %v3867
    %4381 = vst.msk [vmem:[#allocation2 + $0x30c] sm:$0xf] %vm4185, %v3868
    %4382 = vst.msk [vmem:[#allocation2 + $0x310] sm:$0xf] %vm4185, %v3869
    %4383 = vst.msk [vmem:[#allocation2 + $0x314] sm:$0xf] %vm4185, %v3870
    %4384 = vst.msk [vmem:[#allocation2 + $0x318] sm:$0xf] %vm4185, %v3871
    %4385 = vst.msk [vmem:[#allocation2 + $0x31c] sm:$0xf] %vm4185, %v3872
    %4386 = vst.msk [vmem:[#allocation2 + $0x320] sm:$0xf] %vm4185, %v3873
    %4387 = vst.msk [vmem:[#allocation2 + $0x324] sm:$0xf] %vm4185, %v3874
    %4388 = vst.msk [vmem:[#allocation2 + $0x328] sm:$0xf] %vm4185, %v3875
    %4389 = vst.msk [vmem:[#allocation2 + $0x32c] sm:$0xf] %vm4185, %v3876
    %4390 = vst.msk [vmem:[#allocation2 + $0x330] sm:$0xf] %vm4185, %v3877
    %4391 = vst.msk [vmem:[#allocation2 + $0x334] sm:$0xf] %vm4185, %v3878
    %4392 = vst.msk [vmem:[#allocation2 + $0x338] sm:$0xf] %vm4185, %v3879
    %4393 = vst.msk [vmem:[#allocation2 + $0x33c] sm:$0xf] %vm4185, %v3880
    %4394 = vst.msk [vmem:[#allocation2 + $0x340] sm:$0xf] %vm4185, %v3881
    %4395 = vst.msk [vmem:[#allocation2 + $0x344] sm:$0xf] %vm4185, %v3882
    %4396 = vst.msk [vmem:[#allocation2 + $0x348] sm:$0xf] %vm4185, %v3883
    %4397 = vst.msk [vmem:[#allocation2 + $0x34c] sm:$0xf] %vm4185, %v3884
    %4398 = vst.msk [vmem:[#allocation2 + $0x350] sm:$0xf] %vm4185, %v3885
    %4399 = vst.msk [vmem:[#allocation2 + $0x354] sm:$0xf] %vm4185, %v3886
    %4400 = vst.msk [vmem:[#allocation2 + $0x358] sm:$0xf] %vm4185, %v3887
    %4401 = vst.msk [vmem:[#allocation2 + $0x35c] sm:$0xf] %vm4185, %v3888
    %4402 = vst.msk [vmem:[#allocation2 + $0x360] sm:$0xf] %vm4185, %v3889
    %4403 = vst.msk [vmem:[#allocation2 + $0x364] sm:$0xf] %vm4185, %v3890
    %4404 = vst.msk [vmem:[#allocation2 + $0x368] sm:$0xf] %vm4185, %v3891
    %4405 = vst.msk [vmem:[#allocation2 + $0x36c] sm:$0xf] %vm4185, %v3892
    %4406 = vst.msk [vmem:[#allocation2 + $0x370] sm:$0xf] %vm4185, %v3893
    %4407 = vst.msk [vmem:[#allocation2 + $0x374] sm:$0xf] %vm4185, %v3894
    %4408 = vst.msk [vmem:[#allocation2 + $0x378] sm:$0xf] %vm4185, %v3895
    %4409 = vst.msk [vmem:[#allocation2 + $0x37c] sm:$0xf] %vm4185, %v3896
    %4410 = vst.msk [vmem:[#allocation2 + $0x380] sm:$0xf] %vm4185, %v3897
    %4411 = vst.msk [vmem:[#allocation2 + $0x384] sm:$0xf] %vm4185, %v3898
    %4412 = vst.msk [vmem:[#allocation2 + $0x388] sm:$0xf] %vm4185, %v3899
    %4413 = vst.msk [vmem:[#allocation2 + $0x38c] sm:$0xf] %vm4185, %v3900
    %4414 = vst.msk [vmem:[#allocation2 + $0x390] sm:$0xf] %vm4185, %v3901
    %4415 = vst.msk [vmem:[#allocation2 + $0x394] sm:$0xf] %vm4185, %v3902
    %4416 = vst.msk [vmem:[#allocation2 + $0x398] sm:$0xf] %vm4185, %v3903
    %4417 = vst.msk [vmem:[#allocation2 + $0x39c] sm:$0xf] %vm4185, %v3904
    %4418 = vst.msk [vmem:[#allocation2 + $0x3a0] sm:$0xf] %vm4185, %v3905
    %4419 = vst.msk [vmem:[#allocation2 + $0x3a4] sm:$0xf] %vm4185, %v3906
    %4420 = vst.msk [vmem:[#allocation2 + $0x3a8] sm:$0xf] %vm4185, %v3907
    %4421 = vst.msk [vmem:[#allocation2 + $0x3ac] sm:$0xf] %vm4185, %v3908
    %4422 = vst.msk [vmem:[#allocation2 + $0x3b0] sm:$0xf] %vm4185, %v3909
    %4423 = vst.msk [vmem:[#allocation2 + $0x3b4] sm:$0xf] %vm4185, %v3910
    %4424 = vst.msk [vmem:[#allocation2 + $0x3b8] sm:$0xf] %vm4185, %v3911
    %4425 = vst.msk [vmem:[#allocation2 + $0x3bc] sm:$0xf] %vm4185, %v3912
    %4426 = vst.msk [vmem:[#allocation2 + $0x3c0] sm:$0xf] %vm4185, %v3913
    %4427 = vst.msk [vmem:[#allocation2 + $0x3c4] sm:$0xf] %vm4185, %v3914
    %4428 = vst.msk [vmem:[#allocation2 + $0x3c8] sm:$0xf] %vm4185, %v3915
    %4429 = vst.msk [vmem:[#allocation2 + $0x3cc] sm:$0xf] %vm4185, %v3916
    %4430 = vst.msk [vmem:[#allocation2 + $0x3d0] sm:$0xf] %vm4185, %v3917
    %4431 = vst.msk [vmem:[#allocation2 + $0x3d4] sm:$0xf] %vm4185, %v3918
    %4432 = vst.msk [vmem:[#allocation2 + $0x3d8] sm:$0xf] %vm4185, %v3919
    %4433 = vst.msk [vmem:[#allocation2 + $0x3dc] sm:$0xf] %vm4185, %v3920
    %4434 = vst.msk [vmem:[#allocation2 + $0x3e0] sm:$0xf] %vm4185, %v3921
    %4435 = vst.msk [vmem:[#allocation2 + $0x3e4] sm:$0xf] %vm4185, %v3922
    %4436 = vst.msk [vmem:[#allocation2 + $0x3e8] sm:$0xf] %vm4185, %v3923
    %4437 = vst.msk [vmem:[#allocation2 + $0x3ec] sm:$0xf] %vm4185, %v3924
    %4438 = vst.msk [vmem:[#allocation2 + $0x3f0] sm:$0xf] %vm4185, %v3925
    %4439 = vst.msk [vmem:[#allocation2 + $0x3f4] sm:$0xf] %vm4185, %v3926
    %4440 = vst.msk [vmem:[#allocation2 + $0x3f8] sm:$0xf] %vm4185, %v3927
    %4441 = vst.msk [vmem:[#allocation2 + $0x3fc] sm:$0xf] %vm4185, %v3928
    // Predicated region
    $region18: #{tpu_custom_call.1} parent=1 // pred_check
      _
    $region19: #{tpu_custom_call.1} parent=1 // pred_check_branch
      %4443 = sbr.rel (0) target = $region21
    $region20: #{tpu_custom_call.1} parent=1 // pred_region
      %s4445 = ssub.s32 16384, 16384
      %4446 = vsyncadd [#allocation3], %s4445
      %s4447 = sshll.u32 [#allocation2], 4
      %s4448 = int_to_ptr.vmem [resolvable:$true] %s4447
      %4453 = dma.vmem_to_hbm [thread:$0]  %s4448, 16384, %s4, [#allocation3], 64, 64, 4
    $region21: #{tpu_custom_call.1} parent=1 // pred_fallthru
      _
    // Predicated region
    $region22: #{tpu_custom_call.1} parent=1 // pred_check
      _
    $region23: #{tpu_custom_call.1} parent=1 // pred_check_branch
      %4455 = sbr.rel (0) target = $region25
    $region24: #{tpu_custom_call.1} parent=1 // pred_region
      %4456 = dma.done [#allocation3], 16384
    $region25: #{tpu_custom_call.1} parent=1 // pred_fallthru
      _
    %4457 = vsyncpa [#allocation3], 1

</llo_original>
